<compile_context>
chip_gen: v7x
topology: tpu7x:2x2x1
jax: 0.10.0
libtpu: 0.0.40
codegen_flags: <defaults>
</compile_context>

<pallas_src>
import functools

import jax
import jax.numpy as jnp
from jax.experimental import pallas as pl
from jax.experimental.pallas import tpu as pltpu


# ----------------------------------------------------------------------------
# Fused Pallas kernel: generator (3 convs) + residual add for one image.
# ----------------------------------------------------------------------------
def _vagan_fused_kernel(x_ref, w1_ref, b1_ref, w2_ref, b2_ref, w3_ref, b3_ref,
                        out_ref, pad_x, pad_h, *, H, W, C, HID):
    """x_ref:  (1, H, W, C)        NHWC input block
       w1_ref: (9*C,   HID)        conv1 weights, im2col-packed (tap-major)
       w2_ref: (9*HID, HID)        conv2 weights
       w3_ref: (9*HID, C)          conv3 weights
       b*_ref: (1, Cout)           biases
       out_ref:(1, H, W, C)        x + tanh(conv3(relu(conv2(relu(conv1(x))))))
       pad_x:  VMEM (H+2, W+2, C)   zero-padded input scratch
       pad_h:  VMEM (H+2, W+2, HID) zero-padded hidden-activation scratch
    """

    def im2col(pad_ref, cin):
        # Build the (H*W, 9*cin) patch matrix once, then do a single big-K
        # matmul (instead of 9 separate K=cin matmuls).
        cols = []
        for dy in range(3):
            for dx in range(3):
                cols.append(
                    pad_ref[dy:dy + H, dx:dx + W, :].reshape(H * W, cin))
        return jnp.concatenate(cols, axis=-1)

    # In-kernel zero padding: borders zeroed once, interiors overwritten.
    pad_x[...] = jnp.zeros_like(pad_x)
    pad_h[...] = jnp.zeros_like(pad_h)
    pad_x[1:H + 1, 1:W + 1, :] = x_ref[0]

    # conv1: C -> HID, relu
    h = jnp.dot(im2col(pad_x, C), w1_ref[...],
                preferred_element_type=jnp.float32) + b1_ref[...]
    h = jnp.maximum(h, 0.0)
    pad_h[1:H + 1, 1:W + 1, :] = h.reshape(H, W, HID)

    # conv2: HID -> HID, relu   (border of pad_h is still zero)
    h = jnp.dot(im2col(pad_h, HID), w2_ref[...],
                preferred_element_type=jnp.float32) + b2_ref[...]
    h = jnp.maximum(h, 0.0)
    pad_h[1:H + 1, 1:W + 1, :] = h.reshape(H, W, HID)

    # conv3: HID -> C, tanh, fused VAGAN residual add
    maps = jnp.tanh(jnp.dot(im2col(pad_h, HID), w3_ref[...],
                            preferred_element_type=jnp.float32) + b3_ref[...])
    out_ref[...] = (x_ref[...] + maps.reshape(1, H, W, C)).astype(out_ref.dtype)


# ----------------------------------------------------------------------------
# Wrapper: weight packing, pallas_call setup, NCHW <-> NHWC plumbing.
# ----------------------------------------------------------------------------
def vagan_generator_residual(x_nhwc, params):
    """x_nhwc: (N, H, W, C) -> (N, H, W, C) fake images."""
    N, H, W, C = x_nhwc.shape
    HID = params["w1"].shape[-1]

    # Pack (3,3,Cin,Cout) conv weights as (9*Cin, Cout) im2col matrices
    # (row order (dy, dx, cin) matches the kernel's concatenation order).
    w1 = params["w1"].reshape(9 * C, HID)
    w2 = params["w2"].reshape(9 * HID, HID)
    w3 = params["w3"].reshape(9 * HID, C)
    b1 = params["b1"].reshape(1, HID)
    b2 = params["b2"].reshape(1, HID)
    b3 = params["b3"].reshape(1, C)

    kernel = functools.partial(_vagan_fused_kernel, H=H, W=W, C=C, HID=HID)
    return pl.pallas_call(
        kernel,
        out_shape=jax.ShapeDtypeStruct((N, H, W, C), jnp.float32),
        grid_spec=pltpu.PrefetchScalarGridSpec(
            num_scalar_prefetch=0,
            grid=(N,),                                   # parallel over batch
            in_specs=[
                pl.BlockSpec((1, H, W, C), lambda n: (n, 0, 0, 0)),
                pl.BlockSpec((9 * C, HID), lambda n: (0, 0)),
                pl.BlockSpec((1, HID), lambda n: (0, 0)),
                pl.BlockSpec((9 * HID, HID), lambda n: (0, 0)),
                pl.BlockSpec((1, HID), lambda n: (0, 0)),
                pl.BlockSpec((9 * HID, C), lambda n: (0, 0)),
                pl.BlockSpec((1, C), lambda n: (0, 0)),
            ],
            out_specs=pl.BlockSpec((1, H, W, C), lambda n: (n, 0, 0, 0)),
            scratch_shapes=[
                pltpu.VMEM((H + 2, W + 2, C), jnp.float32),
                pltpu.VMEM((H + 2, W + 2, HID), jnp.float32),
            ],
        ),
        compiler_params=pltpu.CompilerParams(
            dimension_semantics=("parallel",)),
    )(x_nhwc, w1, b1, w2, b2, w3, b3)


@jax.jit
def vagan_forward(x_nchw, params):
    """VAGAN.forward: fake_images = x + Generator(x).  Input/output NCHW."""
    x = jnp.transpose(x_nchw, (0, 2, 3, 1))          # NCHW -> NHWC
    out = vagan_generator_residual(x, params)
    return jnp.transpose(out, (0, 3, 1, 2))          # NHWC -> NCHW


# ----------------------------------------------------------------------------
# Params + pure-JAX reference (for a correctness sanity check).
# ----------------------------------------------------------------------------
def init_generator_params(key, in_channels, hidden=32):
    """Deterministic He-style init for the 3-layer generator."""
    k1, k2, k3 = jax.random.split(key, 3)

    def conv_init(k, cin, cout):
        fan_in = 3 * 3 * cin
        w = jax.random.normal(k, (3, 3, cin, cout), jnp.float32)
        w = w * jnp.sqrt(2.0 / fan_in)
        b = jnp.zeros((cout,), jnp.float32)
        return w, b

    w1, b1 = conv_init(k1, in_channels, hidden)
    w2, b2 = conv_init(k2, hidden, hidden)
    w3, b3 = conv_init(k3, hidden, in_channels)
    return {"w1": w1, "b1": b1, "w2": w2, "b2": b2, "w3": w3, "b3": b3}


def _vagan_reference(x_nhwc, params):
    dn = jax.lax.conv_dimension_numbers(
        x_nhwc.shape, params["w1"].shape, ("NHWC", "HWIO", "NHWC"))

    def conv(h, w, b):
        y = jax.lax.conv_general_dilated(
            h, w, window_strides=(1, 1), padding="SAME",
            dimension_numbers=dn, precision=jax.lax.Precision.HIGHEST)
        return y + b

    h = jax.nn.relu(conv(x_nhwc, params["w1"], params["b1"]))
    h = jax.nn.relu(conv(h, params["w2"], params["b2"]))
    maps = jnp.tanh(conv(h, params["w3"], params["b3"]))
    return x_nhwc + maps


if __name__ == "__main__":
    key = jax.random.PRNGKey(0)
    k_x, k_p = jax.random.split(key)

    # input_shape = (N, C, H, W); input_shape[1] = channels
    N, C, H, W = 2, 4, 16, 16
    x = jax.random.normal(k_x, (N, C, H, W), jnp.float32)
    params = init_generator_params(k_p, in_channels=C, hidden=32)

    out = vagan_forward(x, params)
    jax.block_until_ready(out)
    assert out.shape == (N, C, H, W)

    # Sanity check against a pure-JAX reference of the same generator.
    ref = jnp.transpose(
        _vagan_reference(jnp.transpose(x, (0, 2, 3, 1)), params), (0, 3, 1, 2))
    assert jnp.allclose(out, ref, atol=2e-3, rtol=2e-3), "mismatch vs reference"

    print("KERNEL_OK")
</pallas_src>

<mosaic_0001>
module attributes {stable_mosaic.version = 11 : i64} {
  func.func @_vagan_fused_kernel(%arg0: i32, %arg1: memref<1x16x16x4xf32, #tpu.memory_space<vmem>>, %arg2: memref<36x32xf32, #tpu.memory_space<vmem>>, %arg3: memref<1x32xf32, #tpu.memory_space<vmem>>, %arg4: memref<288x32xf32, #tpu.memory_space<vmem>>, %arg5: memref<1x32xf32, #tpu.memory_space<vmem>>, %arg6: memref<288x4xf32, #tpu.memory_space<vmem>>, %arg7: memref<1x4xf32, #tpu.memory_space<vmem>>, %arg8: memref<1x16x16x4xf32, #tpu.memory_space<vmem>>, %arg9: memref<18x18x4xf32, #tpu.memory_space<vmem>>, %arg10: memref<18x18x32xf32, #tpu.memory_space<vmem>>) attributes {dimension_semantics = [#tpu.dimension_semantics<parallel>], iteration_bounds = array<i64: 2>, scalar_prefetch = 0 : i64, scratch_operands = 2 : i64, tpu.core_type = #tpu.core_type<tc>, window_params = [{transform_indices = @transform_0, window_bounds = array<i64: 1, 16, 16, 4>}, {pipeline_mode = #tpu.pipeline_mode<synchronous>, transform_indices = @transform_1, window_bounds = array<i64: 36, 32>}, {pipeline_mode = #tpu.pipeline_mode<synchronous>, transform_indices = @transform_2, window_bounds = array<i64: 1, 32>}, {pipeline_mode = #tpu.pipeline_mode<synchronous>, transform_indices = @transform_3, window_bounds = array<i64: 288, 32>}, {pipeline_mode = #tpu.pipeline_mode<synchronous>, transform_indices = @transform_4, window_bounds = array<i64: 1, 32>}, {pipeline_mode = #tpu.pipeline_mode<synchronous>, transform_indices = @transform_5, window_bounds = array<i64: 288, 4>}, {pipeline_mode = #tpu.pipeline_mode<synchronous>, transform_indices = @transform_6, window_bounds = array<i64: 1, 4>}, {transform_indices = @transform_7, window_bounds = array<i64: 1, 16, 16, 4>}]} {
    %cst = arith.constant 0.000000e+00 : f32
    %0 = vector.broadcast %cst : f32 to vector<18x18x4xf32>
    %c0 = arith.constant 0 : index
    %c0_0 = arith.constant 0 : index
    %c0_1 = arith.constant 0 : index
    %1 = vector.load %arg9[%c0, %c0_0, %c0_1] : memref<18x18x4xf32, #tpu.memory_space<vmem>>, vector<18x18x4xf32>
    tpu.vector_store %arg9[%c0, %c0_0, %c0_1], %0 {strides = array<i32>} : memref<18x18x4xf32, #tpu.memory_space<vmem>>, vector<18x18x4xf32>,
    %cst_2 = arith.constant 0.000000e+00 : f32
    %2 = vector.broadcast %cst_2 : f32 to vector<18x18x32xf32>
    %c0_3 = arith.constant 0 : index
    %c0_4 = arith.constant 0 : index
    %c0_5 = arith.constant 0 : index
    %3 = vector.load %arg10[%c0_3, %c0_4, %c0_5] : memref<18x18x32xf32, #tpu.memory_space<vmem>>, vector<18x18x32xf32>
    tpu.vector_store %arg10[%c0_3, %c0_4, %c0_5], %2 {strides = array<i32>} : memref<18x18x32xf32, #tpu.memory_space<vmem>>, vector<18x18x32xf32>,
    %c0_6 = arith.constant 0 : index
    %c0_7 = arith.constant 0 : index
    %c0_8 = arith.constant 0 : index
    %c0_9 = arith.constant 0 : index
    %4 = vector.load %arg1[%c0_6, %c0_7, %c0_8, %c0_9] : memref<1x16x16x4xf32, #tpu.memory_space<vmem>>, vector<1x16x16x4xf32>
    %5 = vector.shape_cast %4 : vector<1x16x16x4xf32> to vector<16x16x4xf32>
    %c1 = arith.constant 1 : index
    %c1_10 = arith.constant 1 : index
    %c0_11 = arith.constant 0 : index
    %6 = vector.load %arg9[%c1, %c1_10, %c0_11] : memref<18x18x4xf32, #tpu.memory_space<vmem>>, vector<16x16x4xf32>
    tpu.vector_store %arg9[%c1, %c1_10, %c0_11], %5 {strides = array<i32>} : memref<18x18x4xf32, #tpu.memory_space<vmem>>, vector<16x16x4xf32>,
    %c0_12 = arith.constant 0 : index
    %c0_13 = arith.constant 0 : index
    %c0_14 = arith.constant 0 : index
    %7 = vector.load %arg9[%c0_12, %c0_13, %c0_14] : memref<18x18x4xf32, #tpu.memory_space<vmem>>, vector<16x16x4xf32>
    %8 = vector.shape_cast %7 : vector<16x16x4xf32> to vector<256x4xf32>
    %c0_15 = arith.constant 0 : index
    %c1_16 = arith.constant 1 : index
    %c0_17 = arith.constant 0 : index
    %9 = vector.load %arg9[%c0_15, %c1_16, %c0_17] : memref<18x18x4xf32, #tpu.memory_space<vmem>>, vector<16x16x4xf32>
    %10 = vector.shape_cast %9 : vector<16x16x4xf32> to vector<256x4xf32>
    %c0_18 = arith.constant 0 : index
    %c2 = arith.constant 2 : index
    %c0_19 = arith.constant 0 : index
    %11 = vector.load %arg9[%c0_18, %c2, %c0_19] : memref<18x18x4xf32, #tpu.memory_space<vmem>>, vector<16x16x4xf32>
    %12 = vector.shape_cast %11 : vector<16x16x4xf32> to vector<256x4xf32>
    %c1_20 = arith.constant 1 : index
    %c0_21 = arith.constant 0 : index
    %c0_22 = arith.constant 0 : index
    %13 = vector.load %arg9[%c1_20, %c0_21, %c0_22] : memref<18x18x4xf32, #tpu.memory_space<vmem>>, vector<16x16x4xf32>
    %14 = vector.shape_cast %13 : vector<16x16x4xf32> to vector<256x4xf32>
    %c1_23 = arith.constant 1 : index
    %c1_24 = arith.constant 1 : index
    %c0_25 = arith.constant 0 : index
    %15 = vector.load %arg9[%c1_23, %c1_24, %c0_25] : memref<18x18x4xf32, #tpu.memory_space<vmem>>, vector<16x16x4xf32>
    %16 = vector.shape_cast %15 : vector<16x16x4xf32> to vector<256x4xf32>
    %c1_26 = arith.constant 1 : index
    %c2_27 = arith.constant 2 : index
    %c0_28 = arith.constant 0 : index
    %17 = vector.load %arg9[%c1_26, %c2_27, %c0_28] : memref<18x18x4xf32, #tpu.memory_space<vmem>>, vector<16x16x4xf32>
    %18 = vector.shape_cast %17 : vector<16x16x4xf32> to vector<256x4xf32>
    %c2_29 = arith.constant 2 : index
    %c0_30 = arith.constant 0 : index
    %c0_31 = arith.constant 0 : index
    %19 = vector.load %arg9[%c2_29, %c0_30, %c0_31] : memref<18x18x4xf32, #tpu.memory_space<vmem>>, vector<16x16x4xf32>
    %20 = vector.shape_cast %19 : vector<16x16x4xf32> to vector<256x4xf32>
    %c2_32 = arith.constant 2 : index
    %c1_33 = arith.constant 1 : index
    %c0_34 = arith.constant 0 : index
    %21 = vector.load %arg9[%c2_32, %c1_33, %c0_34] : memref<18x18x4xf32, #tpu.memory_space<vmem>>, vector<16x16x4xf32>
    %22 = vector.shape_cast %21 : vector<16x16x4xf32> to vector<256x4xf32>
    %c2_35 = arith.constant 2 : index
    %c2_36 = arith.constant 2 : index
    %c0_37 = arith.constant 0 : index
    %23 = vector.load %arg9[%c2_35, %c2_36, %c0_37] : memref<18x18x4xf32, #tpu.memory_space<vmem>>, vector<16x16x4xf32>
    %24 = vector.shape_cast %23 : vector<16x16x4xf32> to vector<256x4xf32>
    %25 = tpu.concatenate %8, %10, %12, %14, %16, %18, %20, %22, %24 in 1 : vector<256x4xf32>, vector<256x4xf32>, vector<256x4xf32>, vector<256x4xf32>, vector<256x4xf32>, vector<256x4xf32>, vector<256x4xf32>, vector<256x4xf32>, vector<256x4xf32> -> vector<256x36xf32>
    %c0_38 = arith.constant 0 : index
    %c0_39 = arith.constant 0 : index
    %26 = vector.load %arg2[%c0_38, %c0_39] : memref<36x32xf32, #tpu.memory_space<vmem>>, vector<36x32xf32>
    %cst_40 = arith.constant dense<0.000000e+00> : vector<256x32xf32>
    %27 = tpu.matmul %25, %26, %cst_40 {dimension_numbers = #tpu.dot_dimension_numbers<[1], [0], [0], [1], [0, 0, 1, 1], [], []>} : vector<256x36xf32>, vector<36x32xf32>, vector<256x32xf32> -> vector<256x32xf32>
    %c0_41 = arith.constant 0 : index
    %c0_42 = arith.constant 0 : index
    %28 = vector.load %arg3[%c0_41, %c0_42] : memref<1x32xf32, #tpu.memory_space<vmem>>, vector<1x32xf32>
    %29 = vector.broadcast %28 : vector<1x32xf32> to vector<256x32xf32>
    %30 = arith.addf %27, %29 : vector<256x32xf32>
    %cst_43 = arith.constant 0.000000e+00 : f32
    %31 = vector.broadcast %cst_43 : f32 to vector<256x32xf32>
    %32 = arith.maximumf %30, %31 : vector<256x32xf32>
    %33 = vector.shape_cast %32 : vector<256x32xf32> to vector<16x16x32xf32>
    %c1_44 = arith.constant 1 : index
    %c1_45 = arith.constant 1 : index
    %c0_46 = arith.constant 0 : index
    %34 = vector.load %arg10[%c1_44, %c1_45, %c0_46] : memref<18x18x32xf32, #tpu.memory_space<vmem>>, vector<16x16x32xf32>
    tpu.vector_store %arg10[%c1_44, %c1_45, %c0_46], %33 {strides = array<i32>} : memref<18x18x32xf32, #tpu.memory_space<vmem>>, vector<16x16x32xf32>,
    %c0_47 = arith.constant 0 : index
    %c0_48 = arith.constant 0 : index
    %c0_49 = arith.constant 0 : index
    %35 = vector.load %arg10[%c0_47, %c0_48, %c0_49] : memref<18x18x32xf32, #tpu.memory_space<vmem>>, vector<16x16x32xf32>
    %36 = vector.shape_cast %35 : vector<16x16x32xf32> to vector<256x32xf32>
    %c0_50 = arith.constant 0 : index
    %c1_51 = arith.constant 1 : index
    %c0_52 = arith.constant 0 : index
    %37 = vector.load %arg10[%c0_50, %c1_51, %c0_52] : memref<18x18x32xf32, #tpu.memory_space<vmem>>, vector<16x16x32xf32>
    %38 = vector.shape_cast %37 : vector<16x16x32xf32> to vector<256x32xf32>
    %c0_53 = arith.constant 0 : index
    %c2_54 = arith.constant 2 : index
    %c0_55 = arith.constant 0 : index
    %39 = vector.load %arg10[%c0_53, %c2_54, %c0_55] : memref<18x18x32xf32, #tpu.memory_space<vmem>>, vector<16x16x32xf32>
    %40 = vector.shape_cast %39 : vector<16x16x32xf32> to vector<256x32xf32>
    %c1_56 = arith.constant 1 : index
    %c0_57 = arith.constant 0 : index
    %c0_58 = arith.constant 0 : index
    %41 = vector.load %arg10[%c1_56, %c0_57, %c0_58] : memref<18x18x32xf32, #tpu.memory_space<vmem>>, vector<16x16x32xf32>
    %42 = vector.shape_cast %41 : vector<16x16x32xf32> to vector<256x32xf32>
    %c1_59 = arith.constant 1 : index
    %c1_60 = arith.constant 1 : index
    %c0_61 = arith.constant 0 : index
    %43 = vector.load %arg10[%c1_59, %c1_60, %c0_61] : memref<18x18x32xf32, #tpu.memory_space<vmem>>, vector<16x16x32xf32>
    %44 = vector.shape_cast %43 : vector<16x16x32xf32> to vector<256x32xf32>
    %c1_62 = arith.constant 1 : index
    %c2_63 = arith.constant 2 : index
    %c0_64 = arith.constant 0 : index
    %45 = vector.load %arg10[%c1_62, %c2_63, %c0_64] : memref<18x18x32xf32, #tpu.memory_space<vmem>>, vector<16x16x32xf32>
    %46 = vector.shape_cast %45 : vector<16x16x32xf32> to vector<256x32xf32>
    %c2_65 = arith.constant 2 : index
    %c0_66 = arith.constant 0 : index
    %c0_67 = arith.constant 0 : index
    %47 = vector.load %arg10[%c2_65, %c0_66, %c0_67] : memref<18x18x32xf32, #tpu.memory_space<vmem>>, vector<16x16x32xf32>
    %48 = vector.shape_cast %47 : vector<16x16x32xf32> to vector<256x32xf32>
    %c2_68 = arith.constant 2 : index
    %c1_69 = arith.constant 1 : index
    %c0_70 = arith.constant 0 : index
    %49 = vector.load %arg10[%c2_68, %c1_69, %c0_70] : memref<18x18x32xf32, #tpu.memory_space<vmem>>, vector<16x16x32xf32>
    %50 = vector.shape_cast %49 : vector<16x16x32xf32> to vector<256x32xf32>
    %c2_71 = arith.constant 2 : index
    %c2_72 = arith.constant 2 : index
    %c0_73 = arith.constant 0 : index
    %51 = vector.load %arg10[%c2_71, %c2_72, %c0_73] : memref<18x18x32xf32, #tpu.memory_space<vmem>>, vector<16x16x32xf32>
    %52 = vector.shape_cast %51 : vector<16x16x32xf32> to vector<256x32xf32>
    %53 = tpu.concatenate %36, %38, %40, %42, %44, %46, %48, %50, %52 in 1 : vector<256x32xf32>, vector<256x32xf32>, vector<256x32xf32>, vector<256x32xf32>, vector<256x32xf32>, vector<256x32xf32>, vector<256x32xf32>, vector<256x32xf32>, vector<256x32xf32> -> vector<256x288xf32>
    %c0_74 = arith.constant 0 : index
    %c0_75 = arith.constant 0 : index
    %54 = vector.load %arg4[%c0_74, %c0_75] : memref<288x32xf32, #tpu.memory_space<vmem>>, vector<288x32xf32>
    %cst_76 = arith.constant dense<0.000000e+00> : vector<256x32xf32>
    %55 = tpu.matmul %53, %54, %cst_76 {dimension_numbers = #tpu.dot_dimension_numbers<[1], [0], [0], [1], [0, 0, 1, 1], [], []>} : vector<256x288xf32>, vector<288x32xf32>, vector<256x32xf32> -> vector<256x32xf32>
    %c0_77 = arith.constant 0 : index
    %c0_78 = arith.constant 0 : index
    %56 = vector.load %arg5[%c0_77, %c0_78] : memref<1x32xf32, #tpu.memory_space<vmem>>, vector<1x32xf32>
    %57 = vector.broadcast %56 : vector<1x32xf32> to vector<256x32xf32>
    %58 = arith.addf %55, %57 : vector<256x32xf32>
    %cst_79 = arith.constant 0.000000e+00 : f32
    %59 = vector.broadcast %cst_79 : f32 to vector<256x32xf32>
    %60 = arith.maximumf %58, %59 : vector<256x32xf32>
    %61 = vector.shape_cast %60 : vector<256x32xf32> to vector<16x16x32xf32>
    %c1_80 = arith.constant 1 : index
    %c1_81 = arith.constant 1 : index
    %c0_82 = arith.constant 0 : index
    %62 = vector.load %arg10[%c1_80, %c1_81, %c0_82] : memref<18x18x32xf32, #tpu.memory_space<vmem>>, vector<16x16x32xf32>
    tpu.vector_store %arg10[%c1_80, %c1_81, %c0_82], %61 {strides = array<i32>} : memref<18x18x32xf32, #tpu.memory_space<vmem>>, vector<16x16x32xf32>,
    %c0_83 = arith.constant 0 : index
    %c0_84 = arith.constant 0 : index
    %c0_85 = arith.constant 0 : index
    %63 = vector.load %arg10[%c0_83, %c0_84, %c0_85] : memref<18x18x32xf32, #tpu.memory_space<vmem>>, vector<16x16x32xf32>
    %64 = vector.shape_cast %63 : vector<16x16x32xf32> to vector<256x32xf32>
    %c0_86 = arith.constant 0 : index
    %c1_87 = arith.constant 1 : index
    %c0_88 = arith.constant 0 : index
    %65 = vector.load %arg10[%c0_86, %c1_87, %c0_88] : memref<18x18x32xf32, #tpu.memory_space<vmem>>, vector<16x16x32xf32>
    %66 = vector.shape_cast %65 : vector<16x16x32xf32> to vector<256x32xf32>
    %c0_89 = arith.constant 0 : index
    %c2_90 = arith.constant 2 : index
    %c0_91 = arith.constant 0 : index
    %67 = vector.load %arg10[%c0_89, %c2_90, %c0_91] : memref<18x18x32xf32, #tpu.memory_space<vmem>>, vector<16x16x32xf32>
    %68 = vector.shape_cast %67 : vector<16x16x32xf32> to vector<256x32xf32>
    %c1_92 = arith.constant 1 : index
    %c0_93 = arith.constant 0 : index
    %c0_94 = arith.constant 0 : index
    %69 = vector.load %arg10[%c1_92, %c0_93, %c0_94] : memref<18x18x32xf32, #tpu.memory_space<vmem>>, vector<16x16x32xf32>
    %70 = vector.shape_cast %69 : vector<16x16x32xf32> to vector<256x32xf32>
    %c1_95 = arith.constant 1 : index
    %c1_96 = arith.constant 1 : index
    %c0_97 = arith.constant 0 : index
    %71 = vector.load %arg10[%c1_95, %c1_96, %c0_97] : memref<18x18x32xf32, #tpu.memory_space<vmem>>, vector<16x16x32xf32>
    %72 = vector.shape_cast %71 : vector<16x16x32xf32> to vector<256x32xf32>
    %c1_98 = arith.constant 1 : index
    %c2_99 = arith.constant 2 : index
    %c0_100 = arith.constant 0 : index
    %73 = vector.load %arg10[%c1_98, %c2_99, %c0_100] : memref<18x18x32xf32, #tpu.memory_space<vmem>>, vector<16x16x32xf32>
    %74 = vector.shape_cast %73 : vector<16x16x32xf32> to vector<256x32xf32>
    %c2_101 = arith.constant 2 : index
    %c0_102 = arith.constant 0 : index
    %c0_103 = arith.constant 0 : index
    %75 = vector.load %arg10[%c2_101, %c0_102, %c0_103] : memref<18x18x32xf32, #tpu.memory_space<vmem>>, vector<16x16x32xf32>
    %76 = vector.shape_cast %75 : vector<16x16x32xf32> to vector<256x32xf32>
    %c2_104 = arith.constant 2 : index
    %c1_105 = arith.constant 1 : index
    %c0_106 = arith.constant 0 : index
    %77 = vector.load %arg10[%c2_104, %c1_105, %c0_106] : memref<18x18x32xf32, #tpu.memory_space<vmem>>, vector<16x16x32xf32>
    %78 = vector.shape_cast %77 : vector<16x16x32xf32> to vector<256x32xf32>
    %c2_107 = arith.constant 2 : index
    %c2_108 = arith.constant 2 : index
    %c0_109 = arith.constant 0 : index
    %79 = vector.load %arg10[%c2_107, %c2_108, %c0_109] : memref<18x18x32xf32, #tpu.memory_space<vmem>>, vector<16x16x32xf32>
    %80 = vector.shape_cast %79 : vector<16x16x32xf32> to vector<256x32xf32>
    %81 = tpu.concatenate %64, %66, %68, %70, %72, %74, %76, %78, %80 in 1 : vector<256x32xf32>, vector<256x32xf32>, vector<256x32xf32>, vector<256x32xf32>, vector<256x32xf32>, vector<256x32xf32>, vector<256x32xf32>, vector<256x32xf32>, vector<256x32xf32> -> vector<256x288xf32>
    %c0_110 = arith.constant 0 : index
    %c0_111 = arith.constant 0 : index
    %82 = vector.load %arg6[%c0_110, %c0_111] : memref<288x4xf32, #tpu.memory_space<vmem>>, vector<288x4xf32>
    %cst_112 = arith.constant dense<0.000000e+00> : vector<256x4xf32>
    %83 = tpu.matmul %81, %82, %cst_112 {dimension_numbers = #tpu.dot_dimension_numbers<[1], [0], [0], [1], [0, 0, 1, 1], [], []>} : vector<256x288xf32>, vector<288x4xf32>, vector<256x4xf32> -> vector<256x4xf32>
    %c0_113 = arith.constant 0 : index
    %c0_114 = arith.constant 0 : index
    %84 = vector.load %arg7[%c0_113, %c0_114] : memref<1x4xf32, #tpu.memory_space<vmem>>, vector<1x4xf32>
    %85 = vector.broadcast %84 : vector<1x4xf32> to vector<256x4xf32>
    %86 = arith.addf %83, %85 : vector<256x4xf32>
    %87 = math.tanh %86 : vector<256x4xf32>
    %c0_115 = arith.constant 0 : index
    %c0_116 = arith.constant 0 : index
    %c0_117 = arith.constant 0 : index
    %c0_118 = arith.constant 0 : index
    %88 = vector.load %arg1[%c0_115, %c0_116, %c0_117, %c0_118] : memref<1x16x16x4xf32, #tpu.memory_space<vmem>>, vector<1x16x16x4xf32>
    %89 = vector.shape_cast %87 : vector<256x4xf32> to vector<1x16x16x4xf32>
    %90 = arith.addf %88, %89 : vector<1x16x16x4xf32>
    %c0_119 = arith.constant 0 : index
    %c0_120 = arith.constant 0 : index
    %c0_121 = arith.constant 0 : index
    %c0_122 = arith.constant 0 : index
    %91 = vector.load %arg8[%c0_119, %c0_120, %c0_121, %c0_122] : memref<1x16x16x4xf32, #tpu.memory_space<vmem>>, vector<1x16x16x4xf32>
    tpu.vector_store %arg8[%c0_119, %c0_120, %c0_121, %c0_122], %90 {strides = array<i32>} : memref<1x16x16x4xf32, #tpu.memory_space<vmem>>, vector<1x16x16x4xf32>,
    return
  }
  func.func @transform_0(%arg0: i32) -> (i32, i32, i32, i32) {
    %c0_i32 = arith.constant 0 : i32
    %c0_i32_0 = arith.constant 0 : i32
    %c0_i32_1 = arith.constant 0 : i32
    %c0_i32_2 = arith.constant 0 : i32
    return %arg0, %c0_i32, %c0_i32_0, %c0_i32_1 : i32, i32, i32, i32
  }
  func.func @transform_1(%arg0: i32) -> (i32, i32) {
    %c0_i32 = arith.constant 0 : i32
    %c0_i32_0 = arith.constant 0 : i32
    %c0_i32_1 = arith.constant 0 : i32
    return %c0_i32, %c0_i32_0 : i32, i32
  }
  func.func @transform_2(%arg0: i32) -> (i32, i32) {
    %c0_i32 = arith.constant 0 : i32
    %c0_i32_0 = arith.constant 0 : i32
    %c0_i32_1 = arith.constant 0 : i32
    return %c0_i32, %c0_i32_0 : i32, i32
  }
  func.func @transform_3(%arg0: i32) -> (i32, i32) {
    %c0_i32 = arith.constant 0 : i32
    %c0_i32_0 = arith.constant 0 : i32
    %c0_i32_1 = arith.constant 0 : i32
    return %c0_i32, %c0_i32_0 : i32, i32
  }
  func.func @transform_4(%arg0: i32) -> (i32, i32) {
    %c0_i32 = arith.constant 0 : i32
    %c0_i32_0 = arith.constant 0 : i32
    %c0_i32_1 = arith.constant 0 : i32
    return %c0_i32, %c0_i32_0 : i32, i32
  }
  func.func @transform_5(%arg0: i32) -> (i32, i32) {
    %c0_i32 = arith.constant 0 : i32
    %c0_i32_0 = arith.constant 0 : i32
    %c0_i32_1 = arith.constant 0 : i32
    return %c0_i32, %c0_i32_0 : i32, i32
  }
  func.func @transform_6(%arg0: i32) -> (i32, i32) {
    %c0_i32 = arith.constant 0 : i32
    %c0_i32_0 = arith.constant 0 : i32
    %c0_i32_1 = arith.constant 0 : i32
    return %c0_i32, %c0_i32_0 : i32, i32
  }
  func.func @transform_7(%arg0: i32) -> (i32, i32, i32, i32) {
    %c0_i32 = arith.constant 0 : i32
    %c0_i32_0 = arith.constant 0 : i32
    %c0_i32_1 = arith.constant 0 : i32
    %c0_i32_2 = arith.constant 0 : i32
    return %arg0, %c0_i32, %c0_i32_0, %c0_i32_1 : i32, i32, i32, i32
  }
}

</mosaic_0001>

<llo_original>
// kernel: vagan_forward.1
$region0: #{vagan_forward.1}
  #allocation0 [shape = 'u32[]', space=smem, size = 0x4, offset = 0x4, fixed_abs, tag = 'smem constant byte address 0x4 - core index']
  #allocation1 [shape = 'u32[144,128]{1,0:T(1,128)}', space=vmem, size = 0x12000, scoped, tag = 'internal scratch']
  #allocation2 [shape = 'f32[18,18,4]{2,1,0:T(8,128)}', space=vmem, size = 0x36000, scoped, tag = 'scratch operand']
  #allocation3 [shape = 'f32[18,18,32]{2,1,0:T(8,128)}', space=vmem, size = 0x36000, scoped, tag = 'scratch operand']
  %s0 = inlined_call_operand.vmem [shape: f32[2,16,16,4], index: 0, kind: input, shape index: {}]
  %s1 = inlined_call_operand.vmem [shape: f32[36,32], index: 1, kind: input, shape index: {}]
  %s2 = inlined_call_operand.vmem [shape: f32[1,32], index: 2, kind: input, shape index: {}]
  %s3 = inlined_call_operand.vmem [shape: f32[288,32], index: 3, kind: input, shape index: {}]
  %s4 = inlined_call_operand.vmem [shape: f32[1,32], index: 4, kind: input, shape index: {}]
  %s5 = inlined_call_operand.vmem [shape: f32[288,4], index: 5, kind: input, shape index: {}]
  %s6 = inlined_call_operand.vmem [shape: f32[1,4], index: 6, kind: input, shape index: {}]
  %s7 = inlined_call_operand.vmem [shape: f32[2,16,16,4], index: 7, kind: output, shape index: {}]
  %s8 = sld [smem:[#allocation0]]
  $region61: #{vagan_forward.1} parent=0
    _
  %s10 = ssub.s32 1, %s8
  %s11 = scalar_select 0, %s10, %s8
  loop: start=0, step=1, limit=4
  $region2: #{vagan_forward.1} parent=0 // loop_pre_header
    _
  $region3: #{vagan_forward.1} parent=0 // loop_header
    %s13 = sphi 0, %s17
    %p14 = scmp.ge.s32.totalorder %s13, 4
    %s23 = sphi 0, %s25
    %s26 = sphi 0, %s23
    %s27 = sphi 0, %s26
    %s43 = sphi 0, %s27
    %s47 = sphi 0, %s47
    %s49 = sphi 0, %s47
    %s50 = sphi 0, %s49
    %s64 = sphi 0, %s50
    %s68 = sphi 0, %s68
    %s70 = sphi 0, %s68
    %s71 = sphi 0, %s70
    %s85 = sphi 0, %s71
    %s89 = sphi 0, %s89
    %s91 = sphi 0, %s89
    %s92 = sphi 0, %s91
    %s106 = sphi 0, %s92
    %s110 = sphi 0, %s110
    %s112 = sphi 0, %s110
    %s113 = sphi 0, %s112
    %s127 = sphi 0, %s113
    %s131 = sphi 0, %s131
    %s133 = sphi 0, %s131
    %s134 = sphi 0, %s133
    %s148 = sphi 0, %s134
    %s152 = sphi 0, %s152
    %s154 = sphi 0, %s152
    %s155 = sphi 0, %s154
    %s169 = sphi 0, %s155
    %s175 = sphi 0, %s177
    %s178 = sphi 0, %s175
    %s179 = sphi 0, %s178
    %s195 = sphi 0, %s179
  $region4: #{vagan_forward.1} parent=0 // loop_header_branch
    %16 = sbr.rel (%p14) target = $region8
  $region5: #{vagan_forward.1} parent=0 // loop_body
    %s18 = ssub.s32 %s13, 1
    %s19 = ssub.s32 %s13, 2
    %s20 = sadd.s32 %s13, 1
    %s21 = ssub.s32 %s13, %s20
    %p22 = scmp.eq.s32.totalorder %s21, 0
    %s24 = sadd.s32 %s23, 1
    %s25 = scalar_select %p22, %s23, %s24
    %p28 = pneg %p22
    %p29 = scmp.eq.s32.totalorder %s13, 1
    %p30 = por %p28, %p29
    %p31 = scmp.ne.s32.totalorder %s23, %s26
    %p32 = scmp.eq.s32.totalorder %s13, 0
    %p33 = por %p31, %p32
    %p34 = scmp.ne.s32.totalorder %s23, %s26
    %p35 = scmp.eq.s32.totalorder %s18, 1
    %p36 = por %p34, %p35
    %p37 = scmp.ne.s32.totalorder %s26, %s27
    %p38 = scmp.eq.s32.totalorder %s18, 0
    %p39 = por %p37, %p38
    %p40 = scmp.ne.s32.totalorder %s26, %s27
    %p41 = scmp.eq.s32.totalorder %s19, 1
    %p42 = por %p40, %p41
    %p44 = scmp.ne.s32.totalorder %s27, %s43
    %p45 = scmp.eq.s32.totalorder %s19, 0
    %p46 = por %p44, %p45
    %s48 = sadd.s32 %s47, 1
    %p51 = scmp.eq.s32.totalorder %s13, 1
    %p52 = scmp.ne.s32.totalorder %s47, %s49
    %p53 = scmp.eq.s32.totalorder %s13, 0
    %p54 = por %p52, %p53
    %p55 = scmp.ne.s32.totalorder %s47, %s49
    %p56 = scmp.eq.s32.totalorder %s18, 1
    %p57 = por %p55, %p56
    %p58 = scmp.ne.s32.totalorder %s49, %s50
    %p59 = scmp.eq.s32.totalorder %s18, 0
    %p60 = por %p58, %p59
    %p61 = scmp.ne.s32.totalorder %s49, %s50
    %p62 = scmp.eq.s32.totalorder %s19, 1
    %p63 = por %p61, %p62
    %p65 = scmp.ne.s32.totalorder %s50, %s64
    %p66 = scmp.eq.s32.totalorder %s19, 0
    %p67 = por %p65, %p66
    %s69 = sadd.s32 %s68, 1
    %p72 = scmp.eq.s32.totalorder %s13, 1
    %p73 = scmp.ne.s32.totalorder %s68, %s70
    %p74 = scmp.eq.s32.totalorder %s13, 0
    %p75 = por %p73, %p74
    %p76 = scmp.ne.s32.totalorder %s68, %s70
    %p77 = scmp.eq.s32.totalorder %s18, 1
    %p78 = por %p76, %p77
    %p79 = scmp.ne.s32.totalorder %s70, %s71
    %p80 = scmp.eq.s32.totalorder %s18, 0
    %p81 = por %p79, %p80
    %p82 = scmp.ne.s32.totalorder %s70, %s71
    %p83 = scmp.eq.s32.totalorder %s19, 1
    %p84 = por %p82, %p83
    %p86 = scmp.ne.s32.totalorder %s71, %s85
    %p87 = scmp.eq.s32.totalorder %s19, 0
    %p88 = por %p86, %p87
    %s90 = sadd.s32 %s89, 1
    %p93 = scmp.eq.s32.totalorder %s13, 1
    %p94 = scmp.ne.s32.totalorder %s89, %s91
    %p95 = scmp.eq.s32.totalorder %s13, 0
    %p96 = por %p94, %p95
    %p97 = scmp.ne.s32.totalorder %s89, %s91
    %p98 = scmp.eq.s32.totalorder %s18, 1
    %p99 = por %p97, %p98
    %p100 = scmp.ne.s32.totalorder %s91, %s92
    %p101 = scmp.eq.s32.totalorder %s18, 0
    %p102 = por %p100, %p101
    %p103 = scmp.ne.s32.totalorder %s91, %s92
    %p104 = scmp.eq.s32.totalorder %s19, 1
    %p105 = por %p103, %p104
    %p107 = scmp.ne.s32.totalorder %s92, %s106
    %p108 = scmp.eq.s32.totalorder %s19, 0
    %p109 = por %p107, %p108
    %s111 = sadd.s32 %s110, 1
    %p114 = scmp.eq.s32.totalorder %s13, 1
    %p115 = scmp.ne.s32.totalorder %s110, %s112
    %p116 = scmp.eq.s32.totalorder %s13, 0
    %p117 = por %p115, %p116
    %p118 = scmp.ne.s32.totalorder %s110, %s112
    %p119 = scmp.eq.s32.totalorder %s18, 1
    %p120 = por %p118, %p119
    %p121 = scmp.ne.s32.totalorder %s112, %s113
    %p122 = scmp.eq.s32.totalorder %s18, 0
    %p123 = por %p121, %p122
    %p124 = scmp.ne.s32.totalorder %s112, %s113
    %p125 = scmp.eq.s32.totalorder %s19, 1
    %p126 = por %p124, %p125
    %p128 = scmp.ne.s32.totalorder %s113, %s127
    %p129 = scmp.eq.s32.totalorder %s19, 0
    %p130 = por %p128, %p129
    %s132 = sadd.s32 %s131, 1
    %p135 = scmp.eq.s32.totalorder %s13, 1
    %p136 = scmp.ne.s32.totalorder %s131, %s133
    %p137 = scmp.eq.s32.totalorder %s13, 0
    %p138 = por %p136, %p137
    %p139 = scmp.ne.s32.totalorder %s131, %s133
    %p140 = scmp.eq.s32.totalorder %s18, 1
    %p141 = por %p139, %p140
    %p142 = scmp.ne.s32.totalorder %s133, %s134
    %p143 = scmp.eq.s32.totalorder %s18, 0
    %p144 = por %p142, %p143
    %p145 = scmp.ne.s32.totalorder %s133, %s134
    %p146 = scmp.eq.s32.totalorder %s19, 1
    %p147 = por %p145, %p146
    %p149 = scmp.ne.s32.totalorder %s134, %s148
    %p150 = scmp.eq.s32.totalorder %s19, 0
    %p151 = por %p149, %p150
    %s153 = sadd.s32 %s152, 1
    %p156 = scmp.eq.s32.totalorder %s13, 1
    %p157 = scmp.ne.s32.totalorder %s152, %s154
    %p158 = scmp.eq.s32.totalorder %s13, 0
    %p159 = por %p157, %p158
    %p160 = scmp.ne.s32.totalorder %s152, %s154
    %p161 = scmp.eq.s32.totalorder %s18, 1
    %p162 = por %p160, %p161
    %p163 = scmp.ne.s32.totalorder %s154, %s155
    %p164 = scmp.eq.s32.totalorder %s18, 0
    %p165 = por %p163, %p164
    %p166 = scmp.ne.s32.totalorder %s154, %s155
    %p167 = scmp.eq.s32.totalorder %s19, 1
    %p168 = por %p166, %p167
    %p170 = scmp.ne.s32.totalorder %s155, %s169
    %p171 = scmp.eq.s32.totalorder %s19, 0
    %p172 = por %p170, %p171
    %s173 = ssub.s32 %s13, %s20
    %p174 = scmp.eq.s32.totalorder %s173, 0
    %s176 = sadd.s32 %s175, 1
    %s177 = scalar_select %p174, %s175, %s176
    %p180 = pneg %p174
    %p181 = scmp.eq.s32.totalorder %s13, 1
    %p182 = por %p180, %p181
    %p183 = scmp.ne.s32.totalorder %s175, %s178
    %p184 = scmp.eq.s32.totalorder %s13, 0
    %p185 = por %p183, %p184
    %p186 = scmp.ne.s32.totalorder %s175, %s178
    %p187 = scmp.eq.s32.totalorder %s18, 1
    %p188 = por %p186, %p187
    %p189 = scmp.ne.s32.totalorder %s178, %s179
    %p190 = scmp.eq.s32.totalorder %s18, 0
    %p191 = por %p189, %p190
    %p192 = scmp.ne.s32.totalorder %s178, %s179
    %p193 = scmp.eq.s32.totalorder %s19, 1
    %p194 = por %p192, %p193
    %p196 = scmp.ne.s32.totalorder %s179, %s195
    %p197 = scmp.eq.s32.totalorder %s19, 0
    %p198 = por %p196, %p197
    %p199 = scmp.le.s32.totalorder 1, %s13
    %p200 = scmp.lt.s32.totalorder %s13, 3
    %p201 = pnand %p199, %p200
    %p202 = pneg %p201
    // Predicated region
    $region9: #{vagan_forward.1} parent=5 // pred_check
      _
    $region10: #{vagan_forward.1} parent=5 // pred_check_branch
      %204 = sbr.rel (%p201) target = $region12
    $region11: #{vagan_forward.1} parent=5 // pred_region
      %s205 = ssub.s32 %s13, 1
      // Predicated region
      $region13: #{vagan_forward.1} parent=11 // pred_check
        %p206 = pneg %p60
      $region14: #{vagan_forward.1} parent=11 // pred_check_branch
        %208 = sbr.rel (%p206) target = $region16
      $region15: #{vagan_forward.1} parent=11 // pred_region
        _
      $region16: #{vagan_forward.1} parent=11 // pred_fallthru
        _
      // Predicated region
      $region17: #{vagan_forward.1} parent=11 // pred_check
        %p209 = pneg %p81
      $region18: #{vagan_forward.1} parent=11 // pred_check_branch
        %211 = sbr.rel (%p209) target = $region20
      $region19: #{vagan_forward.1} parent=11 // pred_region
        _
      $region20: #{vagan_forward.1} parent=11 // pred_fallthru
        _
      // Predicated region
      $region21: #{vagan_forward.1} parent=11 // pred_check
        %p212 = pneg %p102
      $region22: #{vagan_forward.1} parent=11 // pred_check_branch
        %214 = sbr.rel (%p212) target = $region24
      $region23: #{vagan_forward.1} parent=11 // pred_region
        _
      $region24: #{vagan_forward.1} parent=11 // pred_fallthru
        _
      // Predicated region
      $region25: #{vagan_forward.1} parent=11 // pred_check
        %p215 = pneg %p123
      $region26: #{vagan_forward.1} parent=11 // pred_check_branch
        %217 = sbr.rel (%p215) target = $region28
      $region27: #{vagan_forward.1} parent=11 // pred_region
        _
      $region28: #{vagan_forward.1} parent=11 // pred_fallthru
        _
      // Predicated region
      $region29: #{vagan_forward.1} parent=11 // pred_check
        %p218 = pneg %p144
      $region30: #{vagan_forward.1} parent=11 // pred_check_branch
        %220 = sbr.rel (%p218) target = $region32
      $region31: #{vagan_forward.1} parent=11 // pred_region
        _
      $region32: #{vagan_forward.1} parent=11 // pred_fallthru
        _
      // Predicated region
      $region33: #{vagan_forward.1} parent=11 // pred_check
        %p221 = pneg %p165
      $region34: #{vagan_forward.1} parent=11 // pred_check_branch
        %223 = sbr.rel (%p221) target = $region36
      $region35: #{vagan_forward.1} parent=11 // pred_region
        _
      $region36: #{vagan_forward.1} parent=11 // pred_fallthru
        _
    $region12: #{vagan_forward.1} parent=5 // pred_fallthru
      _
    %p224 = scmp.lt.s32.totalorder %s13, 2
    // Predicated region
    $region37: #{vagan_forward.1} parent=5 // pred_check
      %p225 = pneg %p224
    $region38: #{vagan_forward.1} parent=5 // pred_check_branch
      %227 = sbr.rel (%p225) target = $region40
    $region39: #{vagan_forward.1} parent=5 // pred_region
      // Predicated region
      $region41: #{vagan_forward.1} parent=39 // pred_check
        %p228 = pneg %p33
      $region42: #{vagan_forward.1} parent=39 // pred_check_branch
        %230 = sbr.rel (%p228) target = $region44
      $region43: #{vagan_forward.1} parent=39 // pred_region
        %p231 = scmp.lt.s32.totalorder %s13, 1
        %s232 = scalar_select %p231, %s13, 1
        %s233 = smul.addr %s232, 32
        %s234 = smul.addr %s233, 8
        %s235 = scalar_lea.vmem %s0, %s234
      $region44: #{vagan_forward.1} parent=39 // pred_fallthru
        _
    $region40: #{vagan_forward.1} parent=5 // pred_fallthru
      _
    %p236 = scmp.le.s32.totalorder 1, %s13
    %p237 = scmp.lt.s32.totalorder %s13, 3
    %p238 = pnand %p236, %p237
    %p239 = pneg %p238
    // Predicated region
    $region45: #{vagan_forward.1} parent=5 // pred_check
      _
    $region46: #{vagan_forward.1} parent=5 // pred_check_branch
      %241 = sbr.rel (%p238) target = $region48
    $region47: #{vagan_forward.1} parent=5 // pred_region
      %s242 = ssub.s32 %s13, 1
      %p243 = scmp.lt.s32.totalorder %s18, 1
      %s244 = scalar_select %p243, %s18, 1
      %s245 = smul.addr %s244, 32
      %s246 = smul.addr %s245, 8
      %s247 = scalar_lea.vmem %s0, %s246
      %p248 = pneg %p39
      %p249 = pneg %p36
      %p250 = pneg %p60
      %p251 = pneg %p57
      %p252 = pneg %p81
      %p253 = pneg %p78
      %p254 = pneg %p102
      %p255 = pneg %p99
      %p256 = pneg %p123
      %p257 = pneg %p120
      %p258 = pneg %p144
      %p259 = pneg %p141
      %p260 = pneg %p165
      %p261 = pneg %p162
      %p262 = pneg %p191
      %p263 = pneg %p188
      %p264 = scmp.lt.s32.totalorder %s18, 1
      %s265 = scalar_select %p264, %s18, 1
      %s266 = smul.addr %s265, 32
      %s267 = smul.addr %s266, 8
      %s268 = scalar_lea.vmem %s7, %s267
      %p269 = scmp.lt.s32.totalorder %s18, 1
      %s270 = scalar_select %p269, %s18, 1
      %s271 = smul.addr %s270, 32
      %s272 = smul.addr %s271, 8
      %s273 = scalar_lea.vmem %s0, %s272
      %p274 = scmp.lt.s32.totalorder %s18, 1
      %s275 = scalar_select %p274, %s18, 1
      %s276 = smul.addr %s275, 32
      %s277 = smul.addr %s276, 8
      %s278 = scalar_lea.vmem %s7, %s277
      %vm279 = vcmask 31744
      %280 = vst.msk [vmem:[#allocation2] sm:$0xff] %vm279, 0.0
      %281 = vst.msk [vmem:[#allocation2 + $0x8] sm:$0xff] %vm279, 0.0
      %vm282 = vcmask 25600
      %283 = vst.msk [vmem:[#allocation2 + $0x10] sm:$0x3] %vm282, 0.0
      %284 = vst.msk [vmem:[#allocation2 + $0x18] sm:$0xff] %vm279, 0.0
      %285 = vst.msk [vmem:[#allocation2 + $0x20] sm:$0xff] %vm279, 0.0
      %286 = vst.msk [vmem:[#allocation2 + $0x28] sm:$0x3] %vm282, 0.0
      %287 = vst.msk [vmem:[#allocation2 + $0x30] sm:$0xff] %vm279, 0.0
      %288 = vst.msk [vmem:[#allocation2 + $0x38] sm:$0xff] %vm279, 0.0
      %289 = vst.msk [vmem:[#allocation2 + $0x40] sm:$0x3] %vm282, 0.0
      %290 = vst.msk [vmem:[#allocation2 + $0x48] sm:$0xff] %vm279, 0.0
      %291 = vst.msk [vmem:[#allocation2 + $0x50] sm:$0xff] %vm279, 0.0
      %292 = vst.msk [vmem:[#allocation2 + $0x58] sm:$0x3] %vm282, 0.0
      %293 = vst.msk [vmem:[#allocation2 + $0x60] sm:$0xff] %vm279, 0.0
      %294 = vst.msk [vmem:[#allocation2 + $0x68] sm:$0xff] %vm279, 0.0
      %295 = vst.msk [vmem:[#allocation2 + $0x70] sm:$0x3] %vm282, 0.0
      %296 = vst.msk [vmem:[#allocation2 + $0x78] sm:$0xff] %vm279, 0.0
      %297 = vst.msk [vmem:[#allocation2 + $0x80] sm:$0xff] %vm279, 0.0
      %298 = vst.msk [vmem:[#allocation2 + $0x88] sm:$0x3] %vm282, 0.0
      %299 = vst.msk [vmem:[#allocation2 + $0x90] sm:$0xff] %vm279, 0.0
      %300 = vst.msk [vmem:[#allocation2 + $0x98] sm:$0xff] %vm279, 0.0
      %301 = vst.msk [vmem:[#allocation2 + $0xa0] sm:$0x3] %vm282, 0.0
      %302 = vst.msk [vmem:[#allocation2 + $0xa8] sm:$0xff] %vm279, 0.0
      %303 = vst.msk [vmem:[#allocation2 + $0xb0] sm:$0xff] %vm279, 0.0
      %304 = vst.msk [vmem:[#allocation2 + $0xb8] sm:$0x3] %vm282, 0.0
      %305 = vst.msk [vmem:[#allocation2 + $0xc0] sm:$0xff] %vm279, 0.0
      %306 = vst.msk [vmem:[#allocation2 + $0xc8] sm:$0xff] %vm279, 0.0
      %307 = vst.msk [vmem:[#allocation2 + $0xd0] sm:$0x3] %vm282, 0.0
      %308 = vst.msk [vmem:[#allocation2 + $0xd8] sm:$0xff] %vm279, 0.0
      %309 = vst.msk [vmem:[#allocation2 + $0xe0] sm:$0xff] %vm279, 0.0
      %310 = vst.msk [vmem:[#allocation2 + $0xe8] sm:$0x3] %vm282, 0.0
      %311 = vst.msk [vmem:[#allocation2 + $0xf0] sm:$0xff] %vm279, 0.0
      %312 = vst.msk [vmem:[#allocation2 + $0xf8] sm:$0xff] %vm279, 0.0
      %313 = vst.msk [vmem:[#allocation2 + $0x100] sm:$0x3] %vm282, 0.0
      %314 = vst.msk [vmem:[#allocation2 + $0x108] sm:$0xff] %vm279, 0.0
      %315 = vst.msk [vmem:[#allocation2 + $0x110] sm:$0xff] %vm279, 0.0
      %316 = vst.msk [vmem:[#allocation2 + $0x118] sm:$0x3] %vm282, 0.0
      %317 = vst.msk [vmem:[#allocation2 + $0x120] sm:$0xff] %vm279, 0.0
      %318 = vst.msk [vmem:[#allocation2 + $0x128] sm:$0xff] %vm279, 0.0
      %319 = vst.msk [vmem:[#allocation2 + $0x130] sm:$0x3] %vm282, 0.0
      %320 = vst.msk [vmem:[#allocation2 + $0x138] sm:$0xff] %vm279, 0.0
      %321 = vst.msk [vmem:[#allocation2 + $0x140] sm:$0xff] %vm279, 0.0
      %322 = vst.msk [vmem:[#allocation2 + $0x148] sm:$0x3] %vm282, 0.0
      %323 = vst.msk [vmem:[#allocation2 + $0x150] sm:$0xff] %vm279, 0.0
      %324 = vst.msk [vmem:[#allocation2 + $0x158] sm:$0xff] %vm279, 0.0
      %325 = vst.msk [vmem:[#allocation2 + $0x160] sm:$0x3] %vm282, 0.0
      %326 = vst.msk [vmem:[#allocation2 + $0x168] sm:$0xff] %vm279, 0.0
      %327 = vst.msk [vmem:[#allocation2 + $0x170] sm:$0xff] %vm279, 0.0
      %328 = vst.msk [vmem:[#allocation2 + $0x178] sm:$0x3] %vm282, 0.0
      %329 = vst.msk [vmem:[#allocation2 + $0x180] sm:$0xff] %vm279, 0.0
      %330 = vst.msk [vmem:[#allocation2 + $0x188] sm:$0xff] %vm279, 0.0
      %331 = vst.msk [vmem:[#allocation2 + $0x190] sm:$0x3] %vm282, 0.0
      %332 = vst.msk [vmem:[#allocation2 + $0x198] sm:$0xff] %vm279, 0.0
      %333 = vst.msk [vmem:[#allocation2 + $0x1a0] sm:$0xff] %vm279, 0.0
      %334 = vst.msk [vmem:[#allocation2 + $0x1a8] sm:$0x3] %vm282, 0.0
      %vm335 = vcmask 261120
      %336 = vst.msk [vmem:[#allocation3] sm:$0xff] %vm335, 0.0
      %337 = vst.msk [vmem:[#allocation3 + $0x8] sm:$0xff] %vm335, 0.0
      %vm338 = vcmask 254976
      %339 = vst.msk [vmem:[#allocation3 + $0x10] sm:$0x3] %vm338, 0.0
      %340 = vst.msk [vmem:[#allocation3 + $0x18] sm:$0xff] %vm335, 0.0
      %341 = vst.msk [vmem:[#allocation3 + $0x20] sm:$0xff] %vm335, 0.0
      %342 = vst.msk [vmem:[#allocation3 + $0x28] sm:$0x3] %vm338, 0.0
      %343 = vst.msk [vmem:[#allocation3 + $0x30] sm:$0xff] %vm335, 0.0
      %344 = vst.msk [vmem:[#allocation3 + $0x38] sm:$0xff] %vm335, 0.0
      %345 = vst.msk [vmem:[#allocation3 + $0x40] sm:$0x3] %vm338, 0.0
      %346 = vst.msk [vmem:[#allocation3 + $0x48] sm:$0xff] %vm335, 0.0
      %347 = vst.msk [vmem:[#allocation3 + $0x50] sm:$0xff] %vm335, 0.0
      %348 = vst.msk [vmem:[#allocation3 + $0x58] sm:$0x3] %vm338, 0.0
      %349 = vst.msk [vmem:[#allocation3 + $0x60] sm:$0xff] %vm335, 0.0
      %350 = vst.msk [vmem:[#allocation3 + $0x68] sm:$0xff] %vm335, 0.0
      %351 = vst.msk [vmem:[#allocation3 + $0x70] sm:$0x3] %vm338, 0.0
      %352 = vst.msk [vmem:[#allocation3 + $0x78] sm:$0xff] %vm335, 0.0
      %353 = vst.msk [vmem:[#allocation3 + $0x80] sm:$0xff] %vm335, 0.0
      %354 = vst.msk [vmem:[#allocation3 + $0x88] sm:$0x3] %vm338, 0.0
      %355 = vst.msk [vmem:[#allocation3 + $0x90] sm:$0xff] %vm335, 0.0
      %356 = vst.msk [vmem:[#allocation3 + $0x98] sm:$0xff] %vm335, 0.0
      %357 = vst.msk [vmem:[#allocation3 + $0xa0] sm:$0x3] %vm338, 0.0
      %358 = vst.msk [vmem:[#allocation3 + $0xa8] sm:$0xff] %vm335, 0.0
      %359 = vst.msk [vmem:[#allocation3 + $0xb0] sm:$0xff] %vm335, 0.0
      %360 = vst.msk [vmem:[#allocation3 + $0xb8] sm:$0x3] %vm338, 0.0
      %361 = vst.msk [vmem:[#allocation3 + $0xc0] sm:$0xff] %vm335, 0.0
      %362 = vst.msk [vmem:[#allocation3 + $0xc8] sm:$0xff] %vm335, 0.0
      %363 = vst.msk [vmem:[#allocation3 + $0xd0] sm:$0x3] %vm338, 0.0
      %364 = vst.msk [vmem:[#allocation3 + $0xd8] sm:$0xff] %vm335, 0.0
      %365 = vst.msk [vmem:[#allocation3 + $0xe0] sm:$0xff] %vm335, 0.0
      %366 = vst.msk [vmem:[#allocation3 + $0xe8] sm:$0x3] %vm338, 0.0
      %367 = vst.msk [vmem:[#allocation3 + $0xf0] sm:$0xff] %vm335, 0.0
      %368 = vst.msk [vmem:[#allocation3 + $0xf8] sm:$0xff] %vm335, 0.0
      %369 = vst.msk [vmem:[#allocation3 + $0x100] sm:$0x3] %vm338, 0.0
      %370 = vst.msk [vmem:[#allocation3 + $0x108] sm:$0xff] %vm335, 0.0
      %371 = vst.msk [vmem:[#allocation3 + $0x110] sm:$0xff] %vm335, 0.0
      %372 = vst.msk [vmem:[#allocation3 + $0x118] sm:$0x3] %vm338, 0.0
      %373 = vst.msk [vmem:[#allocation3 + $0x120] sm:$0xff] %vm335, 0.0
      %374 = vst.msk [vmem:[#allocation3 + $0x128] sm:$0xff] %vm335, 0.0
      %375 = vst.msk [vmem:[#allocation3 + $0x130] sm:$0x3] %vm338, 0.0
      %376 = vst.msk [vmem:[#allocation3 + $0x138] sm:$0xff] %vm335, 0.0
      %377 = vst.msk [vmem:[#allocation3 + $0x140] sm:$0xff] %vm335, 0.0
      %378 = vst.msk [vmem:[#allocation3 + $0x148] sm:$0x3] %vm338, 0.0
      %379 = vst.msk [vmem:[#allocation3 + $0x150] sm:$0xff] %vm335, 0.0
      %380 = vst.msk [vmem:[#allocation3 + $0x158] sm:$0xff] %vm335, 0.0
      %381 = vst.msk [vmem:[#allocation3 + $0x160] sm:$0x3] %vm338, 0.0
      %382 = vst.msk [vmem:[#allocation3 + $0x168] sm:$0xff] %vm335, 0.0
      %383 = vst.msk [vmem:[#allocation3 + $0x170] sm:$0xff] %vm335, 0.0
      %384 = vst.msk [vmem:[#allocation3 + $0x178] sm:$0x3] %vm338, 0.0
      %385 = vst.msk [vmem:[#allocation3 + $0x180] sm:$0xff] %vm335, 0.0
      %386 = vst.msk [vmem:[#allocation3 + $0x188] sm:$0xff] %vm335, 0.0
      %387 = vst.msk [vmem:[#allocation3 + $0x190] sm:$0x3] %vm338, 0.0
      %388 = vst.msk [vmem:[#allocation3 + $0x198] sm:$0xff] %vm335, 0.0
      %389 = vst.msk [vmem:[#allocation3 + $0x1a0] sm:$0xff] %vm335, 0.0
      %390 = vst.msk [vmem:[#allocation3 + $0x1a8] sm:$0x3] %vm338, 0.0
      %v391 = vld [vmem:[%s273] sm:$0xff]
      %v392 = vld [vmem:[%s273 + $0x8] sm:$0xff]
      %v393 = vld [vmem:[%s273 + $0x10] sm:$0xff]
      %v394 = vld [vmem:[%s273 + $0x18] sm:$0xff]
      %v395 = vld [vmem:[%s273 + $0x20] sm:$0xff]
      %v396 = vld [vmem:[%s273 + $0x28] sm:$0xff]
      %v397 = vld [vmem:[%s273 + $0x30] sm:$0xff]
      %v398 = vld [vmem:[%s273 + $0x38] sm:$0xff]
      %v399 = vld [vmem:[%s273 + $0x40] sm:$0xff]
      %v400 = vld [vmem:[%s273 + $0x48] sm:$0xff]
      %v401 = vld [vmem:[%s273 + $0x50] sm:$0xff]
      %v402 = vld [vmem:[%s273 + $0x58] sm:$0xff]
      %v403 = vld [vmem:[%s273 + $0x60] sm:$0xff]
      %v404 = vld [vmem:[%s273 + $0x68] sm:$0xff]
      %v405 = vld [vmem:[%s273 + $0x70] sm:$0xff]
      %v406 = vld [vmem:[%s273 + $0x78] sm:$0xff]
      %v407 = vld [vmem:[%s273 + $0x80] sm:$0xff]
      %v408 = vld [vmem:[%s273 + $0x88] sm:$0xff]
      %v409 = vld [vmem:[%s273 + $0x90] sm:$0xff]
      %v410 = vld [vmem:[%s273 + $0x98] sm:$0xff]
      %v411 = vld [vmem:[%s273 + $0xa0] sm:$0xff]
      %v412 = vld [vmem:[%s273 + $0xa8] sm:$0xff]
      %v413 = vld [vmem:[%s273 + $0xb0] sm:$0xff]
      %v414 = vld [vmem:[%s273 + $0xb8] sm:$0xff]
      %v415 = vld [vmem:[%s273 + $0xc0] sm:$0xff]
      %v416 = vld [vmem:[%s273 + $0xc8] sm:$0xff]
      %v417 = vld [vmem:[%s273 + $0xd0] sm:$0xff]
      %v418 = vld [vmem:[%s273 + $0xd8] sm:$0xff]
      %v419 = vld [vmem:[%s273 + $0xe0] sm:$0xff]
      %v420 = vld [vmem:[%s273 + $0xe8] sm:$0xff]
      %v421 = vld [vmem:[%s273 + $0xf0] sm:$0xff]
      %v422 = vld [vmem:[%s273 + $0xf8] sm:$0xff]
      %s423 = scalar_lea.vmem [#allocation2], 24
      %424 = vst.msk [vmem:[%s423 + $0x1] sm:$0xff] %vm279, %v391
      %425 = vst.msk [vmem:[%s423 + $0x9] sm:$0xff] %vm279, %v392
      %426 = vst.msk [vmem:[%s423 + $0x19] sm:$0xff] %vm279, %v393
      %427 = vst.msk [vmem:[%s423 + $0x21] sm:$0xff] %vm279, %v394
      %428 = vst.msk [vmem:[%s423 + $0x31] sm:$0xff] %vm279, %v395
      %429 = vst.msk [vmem:[%s423 + $0x39] sm:$0xff] %vm279, %v396
      %430 = vst.msk [vmem:[%s423 + $0x49] sm:$0xff] %vm279, %v397
      %431 = vst.msk [vmem:[%s423 + $0x51] sm:$0xff] %vm279, %v398
      %432 = vst.msk [vmem:[%s423 + $0x61] sm:$0xff] %vm279, %v399
      %433 = vst.msk [vmem:[%s423 + $0x69] sm:$0xff] %vm279, %v400
      %434 = vst.msk [vmem:[%s423 + $0x79] sm:$0xff] %vm279, %v401
      %435 = vst.msk [vmem:[%s423 + $0x81] sm:$0xff] %vm279, %v402
      %436 = vst.msk [vmem:[%s423 + $0x91] sm:$0xff] %vm279, %v403
      %437 = vst.msk [vmem:[%s423 + $0x99] sm:$0xff] %vm279, %v404
      %438 = vst.msk [vmem:[%s423 + $0xa9] sm:$0xff] %vm279, %v405
      %439 = vst.msk [vmem:[%s423 + $0xb1] sm:$0xff] %vm279, %v406
      %440 = vst.msk [vmem:[%s423 + $0xc1] sm:$0xff] %vm279, %v407
      %441 = vst.msk [vmem:[%s423 + $0xc9] sm:$0xff] %vm279, %v408
      %442 = vst.msk [vmem:[%s423 + $0xd9] sm:$0xff] %vm279, %v409
      %443 = vst.msk [vmem:[%s423 + $0xe1] sm:$0xff] %vm279, %v410
      %444 = vst.msk [vmem:[%s423 + $0xf1] sm:$0xff] %vm279, %v411
      %445 = vst.msk [vmem:[%s423 + $0xf9] sm:$0xff] %vm279, %v412
      %446 = vst.msk [vmem:[%s423 + $0x109] sm:$0xff] %vm279, %v413
      %447 = vst.msk [vmem:[%s423 + $0x111] sm:$0xff] %vm279, %v414
      %448 = vst.msk [vmem:[%s423 + $0x121] sm:$0xff] %vm279, %v415
      %449 = vst.msk [vmem:[%s423 + $0x129] sm:$0xff] %vm279, %v416
      %450 = vst.msk [vmem:[%s423 + $0x139] sm:$0xff] %vm279, %v417
      %451 = vst.msk [vmem:[%s423 + $0x141] sm:$0xff] %vm279, %v418
      %452 = vst.msk [vmem:[%s423 + $0x151] sm:$0xff] %vm279, %v419
      %453 = vst.msk [vmem:[%s423 + $0x159] sm:$0xff] %vm279, %v420
      %454 = vst.msk [vmem:[%s423 + $0x169] sm:$0xff] %vm279, %v421
      %455 = vst.msk [vmem:[%s423 + $0x171] sm:$0xff] %vm279, %v422
      %v456 = vld [vmem:[#allocation2] sm:$0xff]
      %v457 = vld [vmem:[#allocation2 + $0x8] sm:$0xff]
      %v458 = vld [vmem:[#allocation2 + $0x18] sm:$0xff]
      %v459 = vld [vmem:[#allocation2 + $0x20] sm:$0xff]
      %v460 = vld [vmem:[#allocation2 + $0x30] sm:$0xff]
      %v461 = vld [vmem:[#allocation2 + $0x38] sm:$0xff]
      %v462 = vld [vmem:[#allocation2 + $0x48] sm:$0xff]
      %v463 = vld [vmem:[#allocation2 + $0x50] sm:$0xff]
      %v464 = vld [vmem:[#allocation2 + $0x60] sm:$0xff]
      %v465 = vld [vmem:[#allocation2 + $0x68] sm:$0xff]
      %v466 = vld [vmem:[#allocation2 + $0x78] sm:$0xff]
      %v467 = vld [vmem:[#allocation2 + $0x80] sm:$0xff]
      %v468 = vld [vmem:[#allocation2 + $0x90] sm:$0xff]
      %v469 = vld [vmem:[#allocation2 + $0x98] sm:$0xff]
      %v470 = vld [vmem:[#allocation2 + $0xa8] sm:$0xff]
      %v471 = vld [vmem:[#allocation2 + $0xb0] sm:$0xff]
      %v472 = vld [vmem:[#allocation2 + $0xc0] sm:$0xff]
      %v473 = vld [vmem:[#allocation2 + $0xc8] sm:$0xff]
      %v474 = vld [vmem:[#allocation2 + $0xd8] sm:$0xff]
      %v475 = vld [vmem:[#allocation2 + $0xe0] sm:$0xff]
      %v476 = vld [vmem:[#allocation2 + $0xf0] sm:$0xff]
      %v477 = vld [vmem:[#allocation2 + $0xf8] sm:$0xff]
      %v478 = vld [vmem:[#allocation2 + $0x108] sm:$0xff]
      %v479 = vld [vmem:[#allocation2 + $0x110] sm:$0xff]
      %v480 = vld [vmem:[#allocation2 + $0x120] sm:$0xff]
      %v481 = vld [vmem:[#allocation2 + $0x128] sm:$0xff]
      %v482 = vld [vmem:[#allocation2 + $0x138] sm:$0xff]
      %v483 = vld [vmem:[#allocation2 + $0x140] sm:$0xff]
      %v484 = vld [vmem:[#allocation2 + $0x150] sm:$0xff]
      %v485 = vld [vmem:[#allocation2 + $0x158] sm:$0xff]
      %v486 = vld [vmem:[#allocation2 + $0x168] sm:$0xff]
      %v487 = vld [vmem:[#allocation2 + $0x170] sm:$0xff]
      %v488 = vld [vmem:[#allocation2 + $0x1] sm:$0xff]
      %v489 = vld [vmem:[#allocation2 + $0x9] sm:$0xff]
      %v490 = vld [vmem:[#allocation2 + $0x19] sm:$0xff]
      %v491 = vld [vmem:[#allocation2 + $0x21] sm:$0xff]
      %v492 = vld [vmem:[#allocation2 + $0x31] sm:$0xff]
      %v493 = vld [vmem:[#allocation2 + $0x39] sm:$0xff]
      %v494 = vld [vmem:[#allocation2 + $0x49] sm:$0xff]
      %v495 = vld [vmem:[#allocation2 + $0x51] sm:$0xff]
      %v496 = vld [vmem:[#allocation2 + $0x61] sm:$0xff]
      %v497 = vld [vmem:[#allocation2 + $0x69] sm:$0xff]
      %v498 = vld [vmem:[#allocation2 + $0x79] sm:$0xff]
      %v499 = vld [vmem:[#allocation2 + $0x81] sm:$0xff]
      %v500 = vld [vmem:[#allocation2 + $0x91] sm:$0xff]
      %v501 = vld [vmem:[#allocation2 + $0x99] sm:$0xff]
      %v502 = vld [vmem:[#allocation2 + $0xa9] sm:$0xff]
      %v503 = vld [vmem:[#allocation2 + $0xb1] sm:$0xff]
      %v504 = vld [vmem:[#allocation2 + $0xc1] sm:$0xff]
      %v505 = vld [vmem:[#allocation2 + $0xc9] sm:$0xff]
      %v506 = vld [vmem:[#allocation2 + $0xd9] sm:$0xff]
      %v507 = vld [vmem:[#allocation2 + $0xe1] sm:$0xff]
      %v508 = vld [vmem:[#allocation2 + $0xf1] sm:$0xff]
      %v509 = vld [vmem:[#allocation2 + $0xf9] sm:$0xff]
      %v510 = vld [vmem:[#allocation2 + $0x109] sm:$0xff]
      %v511 = vld [vmem:[#allocation2 + $0x111] sm:$0xff]
      %v512 = vld [vmem:[#allocation2 + $0x121] sm:$0xff]
      %v513 = vld [vmem:[#allocation2 + $0x129] sm:$0xff]
      %v514 = vld [vmem:[#allocation2 + $0x139] sm:$0xff]
      %v515 = vld [vmem:[#allocation2 + $0x141] sm:$0xff]
      %v516 = vld [vmem:[#allocation2 + $0x151] sm:$0xff]
      %v517 = vld [vmem:[#allocation2 + $0x159] sm:$0xff]
      %v518 = vld [vmem:[#allocation2 + $0x169] sm:$0xff]
      %v519 = vld [vmem:[#allocation2 + $0x171] sm:$0xff]
      %v520 = vld [vmem:[#allocation2 + $0x2] sm:$0xff]
      %v521 = vld [vmem:[#allocation2 + $0xa] sm:$0xff]
      %v522 = vld [vmem:[#allocation2 + $0x1a] sm:$0xff]
      %v523 = vld [vmem:[#allocation2 + $0x22] sm:$0xff]
      %v524 = vld [vmem:[#allocation2 + $0x32] sm:$0xff]
      %v525 = vld [vmem:[#allocation2 + $0x3a] sm:$0xff]
      %v526 = vld [vmem:[#allocation2 + $0x4a] sm:$0xff]
      %v527 = vld [vmem:[#allocation2 + $0x52] sm:$0xff]
      %v528 = vld [vmem:[#allocation2 + $0x62] sm:$0xff]
      %v529 = vld [vmem:[#allocation2 + $0x6a] sm:$0xff]
      %v530 = vld [vmem:[#allocation2 + $0x7a] sm:$0xff]
      %v531 = vld [vmem:[#allocation2 + $0x82] sm:$0xff]
      %v532 = vld [vmem:[#allocation2 + $0x92] sm:$0xff]
      %v533 = vld [vmem:[#allocation2 + $0x9a] sm:$0xff]
      %v534 = vld [vmem:[#allocation2 + $0xaa] sm:$0xff]
      %v535 = vld [vmem:[#allocation2 + $0xb2] sm:$0xff]
      %v536 = vld [vmem:[#allocation2 + $0xc2] sm:$0xff]
      %v537 = vld [vmem:[#allocation2 + $0xca] sm:$0xff]
      %v538 = vld [vmem:[#allocation2 + $0xda] sm:$0xff]
      %v539 = vld [vmem:[#allocation2 + $0xe2] sm:$0xff]
      %v540 = vld [vmem:[#allocation2 + $0xf2] sm:$0xff]
      %v541 = vld [vmem:[#allocation2 + $0xfa] sm:$0xff]
      %v542 = vld [vmem:[#allocation2 + $0x10a] sm:$0xff]
      %v543 = vld [vmem:[#allocation2 + $0x112] sm:$0xff]
      %v544 = vld [vmem:[#allocation2 + $0x122] sm:$0xff]
      %v545 = vld [vmem:[#allocation2 + $0x12a] sm:$0xff]
      %v546 = vld [vmem:[#allocation2 + $0x13a] sm:$0xff]
      %v547 = vld [vmem:[#allocation2 + $0x142] sm:$0xff]
      %v548 = vld [vmem:[#allocation2 + $0x152] sm:$0xff]
      %v549 = vld [vmem:[#allocation2 + $0x15a] sm:$0xff]
      %v550 = vld [vmem:[#allocation2 + $0x16a] sm:$0xff]
      %v551 = vld [vmem:[#allocation2 + $0x172] sm:$0xff]
      %v552 = vld [vmem:[%s423] sm:$0xff]
      %v553 = vld [vmem:[%s423 + $0x8] sm:$0xff]
      %v554 = vld [vmem:[%s423 + $0x18] sm:$0xff]
      %v555 = vld [vmem:[%s423 + $0x20] sm:$0xff]
      %v556 = vld [vmem:[%s423 + $0x30] sm:$0xff]
      %v557 = vld [vmem:[%s423 + $0x38] sm:$0xff]
      %v558 = vld [vmem:[%s423 + $0x48] sm:$0xff]
      %v559 = vld [vmem:[%s423 + $0x50] sm:$0xff]
      %v560 = vld [vmem:[%s423 + $0x60] sm:$0xff]
      %v561 = vld [vmem:[%s423 + $0x68] sm:$0xff]
      %v562 = vld [vmem:[%s423 + $0x78] sm:$0xff]
      %v563 = vld [vmem:[%s423 + $0x80] sm:$0xff]
      %v564 = vld [vmem:[%s423 + $0x90] sm:$0xff]
      %v565 = vld [vmem:[%s423 + $0x98] sm:$0xff]
      %v566 = vld [vmem:[%s423 + $0xa8] sm:$0xff]
      %v567 = vld [vmem:[%s423 + $0xb0] sm:$0xff]
      %v568 = vld [vmem:[%s423 + $0xc0] sm:$0xff]
      %v569 = vld [vmem:[%s423 + $0xc8] sm:$0xff]
      %v570 = vld [vmem:[%s423 + $0xd8] sm:$0xff]
      %v571 = vld [vmem:[%s423 + $0xe0] sm:$0xff]
      %v572 = vld [vmem:[%s423 + $0xf0] sm:$0xff]
      %v573 = vld [vmem:[%s423 + $0xf8] sm:$0xff]
      %v574 = vld [vmem:[%s423 + $0x108] sm:$0xff]
      %v575 = vld [vmem:[%s423 + $0x110] sm:$0xff]
      %v576 = vld [vmem:[%s423 + $0x120] sm:$0xff]
      %v577 = vld [vmem:[%s423 + $0x128] sm:$0xff]
      %v578 = vld [vmem:[%s423 + $0x138] sm:$0xff]
      %v579 = vld [vmem:[%s423 + $0x140] sm:$0xff]
      %v580 = vld [vmem:[%s423 + $0x150] sm:$0xff]
      %v581 = vld [vmem:[%s423 + $0x158] sm:$0xff]
      %v582 = vld [vmem:[%s423 + $0x168] sm:$0xff]
      %v583 = vld [vmem:[%s423 + $0x170] sm:$0xff]
      %v584 = vld [vmem:[%s423 + $0x1] sm:$0xff]
      %v585 = vld [vmem:[%s423 + $0x9] sm:$0xff]
      %v586 = vld [vmem:[%s423 + $0x19] sm:$0xff]
      %v587 = vld [vmem:[%s423 + $0x21] sm:$0xff]
      %v588 = vld [vmem:[%s423 + $0x31] sm:$0xff]
      %v589 = vld [vmem:[%s423 + $0x39] sm:$0xff]
      %v590 = vld [vmem:[%s423 + $0x49] sm:$0xff]
      %v591 = vld [vmem:[%s423 + $0x51] sm:$0xff]
      %v592 = vld [vmem:[%s423 + $0x61] sm:$0xff]
      %v593 = vld [vmem:[%s423 + $0x69] sm:$0xff]
      %v594 = vld [vmem:[%s423 + $0x79] sm:$0xff]
      %v595 = vld [vmem:[%s423 + $0x81] sm:$0xff]
      %v596 = vld [vmem:[%s423 + $0x91] sm:$0xff]
      %v597 = vld [vmem:[%s423 + $0x99] sm:$0xff]
      %v598 = vld [vmem:[%s423 + $0xa9] sm:$0xff]
      %v599 = vld [vmem:[%s423 + $0xb1] sm:$0xff]
      %v600 = vld [vmem:[%s423 + $0xc1] sm:$0xff]
      %v601 = vld [vmem:[%s423 + $0xc9] sm:$0xff]
      %v602 = vld [vmem:[%s423 + $0xd9] sm:$0xff]
      %v603 = vld [vmem:[%s423 + $0xe1] sm:$0xff]
      %v604 = vld [vmem:[%s423 + $0xf1] sm:$0xff]
      %v605 = vld [vmem:[%s423 + $0xf9] sm:$0xff]
      %v606 = vld [vmem:[%s423 + $0x109] sm:$0xff]
      %v607 = vld [vmem:[%s423 + $0x111] sm:$0xff]
      %v608 = vld [vmem:[%s423 + $0x121] sm:$0xff]
      %v609 = vld [vmem:[%s423 + $0x129] sm:$0xff]
      %v610 = vld [vmem:[%s423 + $0x139] sm:$0xff]
      %v611 = vld [vmem:[%s423 + $0x141] sm:$0xff]
      %v612 = vld [vmem:[%s423 + $0x151] sm:$0xff]
      %v613 = vld [vmem:[%s423 + $0x159] sm:$0xff]
      %v614 = vld [vmem:[%s423 + $0x169] sm:$0xff]
      %v615 = vld [vmem:[%s423 + $0x171] sm:$0xff]
      %v616 = vld [vmem:[%s423 + $0x2] sm:$0xff]
      %v617 = vld [vmem:[%s423 + $0xa] sm:$0xff]
      %v618 = vld [vmem:[%s423 + $0x1a] sm:$0xff]
      %v619 = vld [vmem:[%s423 + $0x22] sm:$0xff]
      %v620 = vld [vmem:[%s423 + $0x32] sm:$0xff]
      %v621 = vld [vmem:[%s423 + $0x3a] sm:$0xff]
      %v622 = vld [vmem:[%s423 + $0x4a] sm:$0xff]
      %v623 = vld [vmem:[%s423 + $0x52] sm:$0xff]
      %v624 = vld [vmem:[%s423 + $0x62] sm:$0xff]
      %v625 = vld [vmem:[%s423 + $0x6a] sm:$0xff]
      %v626 = vld [vmem:[%s423 + $0x7a] sm:$0xff]
      %v627 = vld [vmem:[%s423 + $0x82] sm:$0xff]
      %v628 = vld [vmem:[%s423 + $0x92] sm:$0xff]
      %v629 = vld [vmem:[%s423 + $0x9a] sm:$0xff]
      %v630 = vld [vmem:[%s423 + $0xaa] sm:$0xff]
      %v631 = vld [vmem:[%s423 + $0xb2] sm:$0xff]
      %v632 = vld [vmem:[%s423 + $0xc2] sm:$0xff]
      %v633 = vld [vmem:[%s423 + $0xca] sm:$0xff]
      %v634 = vld [vmem:[%s423 + $0xda] sm:$0xff]
      %v635 = vld [vmem:[%s423 + $0xe2] sm:$0xff]
      %v636 = vld [vmem:[%s423 + $0xf2] sm:$0xff]
      %v637 = vld [vmem:[%s423 + $0xfa] sm:$0xff]
      %v638 = vld [vmem:[%s423 + $0x10a] sm:$0xff]
      %v639 = vld [vmem:[%s423 + $0x112] sm:$0xff]
      %v640 = vld [vmem:[%s423 + $0x122] sm:$0xff]
      %v641 = vld [vmem:[%s423 + $0x12a] sm:$0xff]
      %v642 = vld [vmem:[%s423 + $0x13a] sm:$0xff]
      %v643 = vld [vmem:[%s423 + $0x142] sm:$0xff]
      %v644 = vld [vmem:[%s423 + $0x152] sm:$0xff]
      %v645 = vld [vmem:[%s423 + $0x15a] sm:$0xff]
      %v646 = vld [vmem:[%s423 + $0x16a] sm:$0xff]
      %v647 = vld [vmem:[%s423 + $0x172] sm:$0xff]
      %s648 = scalar_lea.vmem [#allocation2], 48
      %v649 = vld [vmem:[%s648] sm:$0xff]
      %v650 = vld [vmem:[%s648 + $0x8] sm:$0xff]
      %v651 = vld [vmem:[%s648 + $0x18] sm:$0xff]
      %v652 = vld [vmem:[%s648 + $0x20] sm:$0xff]
      %v653 = vld [vmem:[%s648 + $0x30] sm:$0xff]
      %v654 = vld [vmem:[%s648 + $0x38] sm:$0xff]
      %v655 = vld [vmem:[%s648 + $0x48] sm:$0xff]
      %v656 = vld [vmem:[%s648 + $0x50] sm:$0xff]
      %v657 = vld [vmem:[%s648 + $0x60] sm:$0xff]
      %v658 = vld [vmem:[%s648 + $0x68] sm:$0xff]
      %v659 = vld [vmem:[%s648 + $0x78] sm:$0xff]
      %v660 = vld [vmem:[%s648 + $0x80] sm:$0xff]
      %v661 = vld [vmem:[%s648 + $0x90] sm:$0xff]
      %v662 = vld [vmem:[%s648 + $0x98] sm:$0xff]
      %v663 = vld [vmem:[%s648 + $0xa8] sm:$0xff]
      %v664 = vld [vmem:[%s648 + $0xb0] sm:$0xff]
      %v665 = vld [vmem:[%s648 + $0xc0] sm:$0xff]
      %v666 = vld [vmem:[%s648 + $0xc8] sm:$0xff]
      %v667 = vld [vmem:[%s648 + $0xd8] sm:$0xff]
      %v668 = vld [vmem:[%s648 + $0xe0] sm:$0xff]
      %v669 = vld [vmem:[%s648 + $0xf0] sm:$0xff]
      %v670 = vld [vmem:[%s648 + $0xf8] sm:$0xff]
      %v671 = vld [vmem:[%s648 + $0x108] sm:$0xff]
      %v672 = vld [vmem:[%s648 + $0x110] sm:$0xff]
      %v673 = vld [vmem:[%s648 + $0x120] sm:$0xff]
      %v674 = vld [vmem:[%s648 + $0x128] sm:$0xff]
      %v675 = vld [vmem:[%s648 + $0x138] sm:$0xff]
      %v676 = vld [vmem:[%s648 + $0x140] sm:$0xff]
      %v677 = vld [vmem:[%s648 + $0x150] sm:$0xff]
      %v678 = vld [vmem:[%s648 + $0x158] sm:$0xff]
      %v679 = vld [vmem:[%s648 + $0x168] sm:$0xff]
      %v680 = vld [vmem:[%s648 + $0x170] sm:$0xff]
      %v681 = vld [vmem:[%s648 + $0x1] sm:$0xff]
      %v682 = vld [vmem:[%s648 + $0x9] sm:$0xff]
      %v683 = vld [vmem:[%s648 + $0x19] sm:$0xff]
      %v684 = vld [vmem:[%s648 + $0x21] sm:$0xff]
      %v685 = vld [vmem:[%s648 + $0x31] sm:$0xff]
      %v686 = vld [vmem:[%s648 + $0x39] sm:$0xff]
      %v687 = vld [vmem:[%s648 + $0x49] sm:$0xff]
      %v688 = vld [vmem:[%s648 + $0x51] sm:$0xff]
      %v689 = vld [vmem:[%s648 + $0x61] sm:$0xff]
      %v690 = vld [vmem:[%s648 + $0x69] sm:$0xff]
      %v691 = vld [vmem:[%s648 + $0x79] sm:$0xff]
      %v692 = vld [vmem:[%s648 + $0x81] sm:$0xff]
      %v693 = vld [vmem:[%s648 + $0x91] sm:$0xff]
      %v694 = vld [vmem:[%s648 + $0x99] sm:$0xff]
      %v695 = vld [vmem:[%s648 + $0xa9] sm:$0xff]
      %v696 = vld [vmem:[%s648 + $0xb1] sm:$0xff]
      %v697 = vld [vmem:[%s648 + $0xc1] sm:$0xff]
      %v698 = vld [vmem:[%s648 + $0xc9] sm:$0xff]
      %v699 = vld [vmem:[%s648 + $0xd9] sm:$0xff]
      %v700 = vld [vmem:[%s648 + $0xe1] sm:$0xff]
      %v701 = vld [vmem:[%s648 + $0xf1] sm:$0xff]
      %v702 = vld [vmem:[%s648 + $0xf9] sm:$0xff]
      %v703 = vld [vmem:[%s648 + $0x109] sm:$0xff]
      %v704 = vld [vmem:[%s648 + $0x111] sm:$0xff]
      %v705 = vld [vmem:[%s648 + $0x121] sm:$0xff]
      %v706 = vld [vmem:[%s648 + $0x129] sm:$0xff]
      %v707 = vld [vmem:[%s648 + $0x139] sm:$0xff]
      %v708 = vld [vmem:[%s648 + $0x141] sm:$0xff]
      %v709 = vld [vmem:[%s648 + $0x151] sm:$0xff]
      %v710 = vld [vmem:[%s648 + $0x159] sm:$0xff]
      %v711 = vld [vmem:[%s648 + $0x169] sm:$0xff]
      %v712 = vld [vmem:[%s648 + $0x171] sm:$0xff]
      %v713 = vld [vmem:[%s648 + $0x2] sm:$0xff]
      %v714 = vld [vmem:[%s648 + $0xa] sm:$0xff]
      %v715 = vld [vmem:[%s648 + $0x1a] sm:$0xff]
      %v716 = vld [vmem:[%s648 + $0x22] sm:$0xff]
      %v717 = vld [vmem:[%s648 + $0x32] sm:$0xff]
      %v718 = vld [vmem:[%s648 + $0x3a] sm:$0xff]
      %v719 = vld [vmem:[%s648 + $0x4a] sm:$0xff]
      %v720 = vld [vmem:[%s648 + $0x52] sm:$0xff]
      %v721 = vld [vmem:[%s648 + $0x62] sm:$0xff]
      %v722 = vld [vmem:[%s648 + $0x6a] sm:$0xff]
      %v723 = vld [vmem:[%s648 + $0x7a] sm:$0xff]
      %v724 = vld [vmem:[%s648 + $0x82] sm:$0xff]
      %v725 = vld [vmem:[%s648 + $0x92] sm:$0xff]
      %v726 = vld [vmem:[%s648 + $0x9a] sm:$0xff]
      %v727 = vld [vmem:[%s648 + $0xaa] sm:$0xff]
      %v728 = vld [vmem:[%s648 + $0xb2] sm:$0xff]
      %v729 = vld [vmem:[%s648 + $0xc2] sm:$0xff]
      %v730 = vld [vmem:[%s648 + $0xca] sm:$0xff]
      %v731 = vld [vmem:[%s648 + $0xda] sm:$0xff]
      %v732 = vld [vmem:[%s648 + $0xe2] sm:$0xff]
      %v733 = vld [vmem:[%s648 + $0xf2] sm:$0xff]
      %v734 = vld [vmem:[%s648 + $0xfa] sm:$0xff]
      %v735 = vld [vmem:[%s648 + $0x10a] sm:$0xff]
      %v736 = vld [vmem:[%s648 + $0x112] sm:$0xff]
      %v737 = vld [vmem:[%s648 + $0x122] sm:$0xff]
      %v738 = vld [vmem:[%s648 + $0x12a] sm:$0xff]
      %v739 = vld [vmem:[%s648 + $0x13a] sm:$0xff]
      %v740 = vld [vmem:[%s648 + $0x142] sm:$0xff]
      %v741 = vld [vmem:[%s648 + $0x152] sm:$0xff]
      %v742 = vld [vmem:[%s648 + $0x15a] sm:$0xff]
      %v743 = vld [vmem:[%s648 + $0x16a] sm:$0xff]
      %v744 = vld [vmem:[%s648 + $0x172] sm:$0xff]
      %777 = vrot.lane.b32.xlu0 %v488, 4
      %v778 = vpop.permute.xlu0 %777
      %779 = vrot.lane.b32.xlu0 %v489, 4
      %v780 = vpop.permute.xlu0 %779
      %781 = vrot.lane.b32.xlu0 %v490, 4
      %v782 = vpop.permute.xlu0 %781
      %783 = vrot.lane.b32.xlu0 %v491, 4
      %v784 = vpop.permute.xlu0 %783
      %785 = vrot.lane.b32.xlu0 %v492, 4
      %v786 = vpop.permute.xlu0 %785
      %787 = vrot.lane.b32.xlu0 %v493, 4
      %v788 = vpop.permute.xlu0 %787
      %789 = vrot.lane.b32.xlu0 %v494, 4
      %v790 = vpop.permute.xlu0 %789
      %791 = vrot.lane.b32.xlu0 %v495, 4
      %v792 = vpop.permute.xlu0 %791
      %793 = vrot.lane.b32.xlu0 %v496, 4
      %v794 = vpop.permute.xlu0 %793
      %795 = vrot.lane.b32.xlu0 %v497, 4
      %v796 = vpop.permute.xlu0 %795
      %797 = vrot.lane.b32.xlu0 %v498, 4
      %v798 = vpop.permute.xlu0 %797
      %799 = vrot.lane.b32.xlu0 %v499, 4
      %v800 = vpop.permute.xlu0 %799
      %801 = vrot.lane.b32.xlu0 %v500, 4
      %v802 = vpop.permute.xlu0 %801
      %803 = vrot.lane.b32.xlu0 %v501, 4
      %v804 = vpop.permute.xlu0 %803
      %805 = vrot.lane.b32.xlu0 %v502, 4
      %v806 = vpop.permute.xlu0 %805
      %807 = vrot.lane.b32.xlu0 %v503, 4
      %v808 = vpop.permute.xlu0 %807
      %809 = vrot.lane.b32.xlu0 %v504, 4
      %v810 = vpop.permute.xlu0 %809
      %811 = vrot.lane.b32.xlu0 %v505, 4
      %v812 = vpop.permute.xlu0 %811
      %813 = vrot.lane.b32.xlu0 %v506, 4
      %v814 = vpop.permute.xlu0 %813
      %815 = vrot.lane.b32.xlu0 %v507, 4
      %v816 = vpop.permute.xlu0 %815
      %817 = vrot.lane.b32.xlu0 %v508, 4
      %v818 = vpop.permute.xlu0 %817
      %819 = vrot.lane.b32.xlu0 %v509, 4
      %v820 = vpop.permute.xlu0 %819
      %821 = vrot.lane.b32.xlu0 %v510, 4
      %v822 = vpop.permute.xlu0 %821
      %823 = vrot.lane.b32.xlu0 %v511, 4
      %v824 = vpop.permute.xlu0 %823
      %825 = vrot.lane.b32.xlu0 %v512, 4
      %v826 = vpop.permute.xlu0 %825
      %827 = vrot.lane.b32.xlu0 %v513, 4
      %v828 = vpop.permute.xlu0 %827
      %829 = vrot.lane.b32.xlu0 %v514, 4
      %v830 = vpop.permute.xlu0 %829
      %831 = vrot.lane.b32.xlu0 %v515, 4
      %v832 = vpop.permute.xlu0 %831
      %833 = vrot.lane.b32.xlu0 %v516, 4
      %v834 = vpop.permute.xlu0 %833
      %835 = vrot.lane.b32.xlu0 %v517, 4
      %v836 = vpop.permute.xlu0 %835
      %837 = vrot.lane.b32.xlu0 %v518, 4
      %v838 = vpop.permute.xlu0 %837
      %839 = vrot.lane.b32.xlu0 %v519, 4
      %v840 = vpop.permute.xlu0 %839
      %905 = vrot.lane.b32.xlu0 %v520, 8
      %v906 = vpop.permute.xlu0 %905
      %907 = vrot.lane.b32.xlu0 %v521, 8
      %v908 = vpop.permute.xlu0 %907
      %909 = vrot.lane.b32.xlu0 %v522, 8
      %v910 = vpop.permute.xlu0 %909
      %911 = vrot.lane.b32.xlu0 %v523, 8
      %v912 = vpop.permute.xlu0 %911
      %913 = vrot.lane.b32.xlu0 %v524, 8
      %v914 = vpop.permute.xlu0 %913
      %915 = vrot.lane.b32.xlu0 %v525, 8
      %v916 = vpop.permute.xlu0 %915
      %917 = vrot.lane.b32.xlu0 %v526, 8
      %v918 = vpop.permute.xlu0 %917
      %919 = vrot.lane.b32.xlu0 %v527, 8
      %v920 = vpop.permute.xlu0 %919
      %921 = vrot.lane.b32.xlu0 %v528, 8
      %v922 = vpop.permute.xlu0 %921
      %923 = vrot.lane.b32.xlu0 %v529, 8
      %v924 = vpop.permute.xlu0 %923
      %925 = vrot.lane.b32.xlu0 %v530, 8
      %v926 = vpop.permute.xlu0 %925
      %927 = vrot.lane.b32.xlu0 %v531, 8
      %v928 = vpop.permute.xlu0 %927
      %929 = vrot.lane.b32.xlu0 %v532, 8
      %v930 = vpop.permute.xlu0 %929
      %931 = vrot.lane.b32.xlu0 %v533, 8
      %v932 = vpop.permute.xlu0 %931
      %933 = vrot.lane.b32.xlu0 %v534, 8
      %v934 = vpop.permute.xlu0 %933
      %935 = vrot.lane.b32.xlu0 %v535, 8
      %v936 = vpop.permute.xlu0 %935
      %937 = vrot.lane.b32.xlu0 %v536, 8
      %v938 = vpop.permute.xlu0 %937
      %939 = vrot.lane.b32.xlu0 %v537, 8
      %v940 = vpop.permute.xlu0 %939
      %941 = vrot.lane.b32.xlu0 %v538, 8
      %v942 = vpop.permute.xlu0 %941
      %943 = vrot.lane.b32.xlu0 %v539, 8
      %v944 = vpop.permute.xlu0 %943
      %945 = vrot.lane.b32.xlu0 %v540, 8
      %v946 = vpop.permute.xlu0 %945
      %947 = vrot.lane.b32.xlu0 %v541, 8
      %v948 = vpop.permute.xlu0 %947
      %949 = vrot.lane.b32.xlu0 %v542, 8
      %v950 = vpop.permute.xlu0 %949
      %951 = vrot.lane.b32.xlu0 %v543, 8
      %v952 = vpop.permute.xlu0 %951
      %953 = vrot.lane.b32.xlu0 %v544, 8
      %v954 = vpop.permute.xlu0 %953
      %955 = vrot.lane.b32.xlu0 %v545, 8
      %v956 = vpop.permute.xlu0 %955
      %957 = vrot.lane.b32.xlu0 %v546, 8
      %v958 = vpop.permute.xlu0 %957
      %959 = vrot.lane.b32.xlu0 %v547, 8
      %v960 = vpop.permute.xlu0 %959
      %961 = vrot.lane.b32.xlu0 %v548, 8
      %v962 = vpop.permute.xlu0 %961
      %963 = vrot.lane.b32.xlu0 %v549, 8
      %v964 = vpop.permute.xlu0 %963
      %965 = vrot.lane.b32.xlu0 %v550, 8
      %v966 = vpop.permute.xlu0 %965
      %967 = vrot.lane.b32.xlu0 %v551, 8
      %v968 = vpop.permute.xlu0 %967
      %1033 = vrot.lane.b32.xlu0 %v552, 12
      %v1034 = vpop.permute.xlu0 %1033
      %1035 = vrot.lane.b32.xlu0 %v553, 12
      %v1036 = vpop.permute.xlu0 %1035
      %1037 = vrot.lane.b32.xlu0 %v554, 12
      %v1038 = vpop.permute.xlu0 %1037
      %1039 = vrot.lane.b32.xlu0 %v555, 12
      %v1040 = vpop.permute.xlu0 %1039
      %1041 = vrot.lane.b32.xlu0 %v556, 12
      %v1042 = vpop.permute.xlu0 %1041
      %1043 = vrot.lane.b32.xlu0 %v557, 12
      %v1044 = vpop.permute.xlu0 %1043
      %1045 = vrot.lane.b32.xlu0 %v558, 12
      %v1046 = vpop.permute.xlu0 %1045
      %1047 = vrot.lane.b32.xlu0 %v559, 12
      %v1048 = vpop.permute.xlu0 %1047
      %1049 = vrot.lane.b32.xlu0 %v560, 12
      %v1050 = vpop.permute.xlu0 %1049
      %1051 = vrot.lane.b32.xlu0 %v561, 12
      %v1052 = vpop.permute.xlu0 %1051
      %1053 = vrot.lane.b32.xlu0 %v562, 12
      %v1054 = vpop.permute.xlu0 %1053
      %1055 = vrot.lane.b32.xlu0 %v563, 12
      %v1056 = vpop.permute.xlu0 %1055
      %1057 = vrot.lane.b32.xlu0 %v564, 12
      %v1058 = vpop.permute.xlu0 %1057
      %1059 = vrot.lane.b32.xlu0 %v565, 12
      %v1060 = vpop.permute.xlu0 %1059
      %1061 = vrot.lane.b32.xlu0 %v566, 12
      %v1062 = vpop.permute.xlu0 %1061
      %1063 = vrot.lane.b32.xlu0 %v567, 12
      %v1064 = vpop.permute.xlu0 %1063
      %1065 = vrot.lane.b32.xlu0 %v568, 12
      %v1066 = vpop.permute.xlu0 %1065
      %1067 = vrot.lane.b32.xlu0 %v569, 12
      %v1068 = vpop.permute.xlu0 %1067
      %1069 = vrot.lane.b32.xlu0 %v570, 12
      %v1070 = vpop.permute.xlu0 %1069
      %1071 = vrot.lane.b32.xlu0 %v571, 12
      %v1072 = vpop.permute.xlu0 %1071
      %1073 = vrot.lane.b32.xlu0 %v572, 12
      %v1074 = vpop.permute.xlu0 %1073
      %1075 = vrot.lane.b32.xlu0 %v573, 12
      %v1076 = vpop.permute.xlu0 %1075
      %1077 = vrot.lane.b32.xlu0 %v574, 12
      %v1078 = vpop.permute.xlu0 %1077
      %1079 = vrot.lane.b32.xlu0 %v575, 12
      %v1080 = vpop.permute.xlu0 %1079
      %1081 = vrot.lane.b32.xlu0 %v576, 12
      %v1082 = vpop.permute.xlu0 %1081
      %1083 = vrot.lane.b32.xlu0 %v577, 12
      %v1084 = vpop.permute.xlu0 %1083
      %1085 = vrot.lane.b32.xlu0 %v578, 12
      %v1086 = vpop.permute.xlu0 %1085
      %1087 = vrot.lane.b32.xlu0 %v579, 12
      %v1088 = vpop.permute.xlu0 %1087
      %1089 = vrot.lane.b32.xlu0 %v580, 12
      %v1090 = vpop.permute.xlu0 %1089
      %1091 = vrot.lane.b32.xlu0 %v581, 12
      %v1092 = vpop.permute.xlu0 %1091
      %1093 = vrot.lane.b32.xlu0 %v582, 12
      %v1094 = vpop.permute.xlu0 %1093
      %1095 = vrot.lane.b32.xlu0 %v583, 12
      %v1096 = vpop.permute.xlu0 %1095
      %1161 = vrot.lane.b32.xlu0 %v584, 16
      %v1162 = vpop.permute.xlu0 %1161
      %1163 = vrot.lane.b32.xlu0 %v585, 16
      %v1164 = vpop.permute.xlu0 %1163
      %1165 = vrot.lane.b32.xlu0 %v586, 16
      %v1166 = vpop.permute.xlu0 %1165
      %1167 = vrot.lane.b32.xlu0 %v587, 16
      %v1168 = vpop.permute.xlu0 %1167
      %1169 = vrot.lane.b32.xlu0 %v588, 16
      %v1170 = vpop.permute.xlu0 %1169
      %1171 = vrot.lane.b32.xlu0 %v589, 16
      %v1172 = vpop.permute.xlu0 %1171
      %1173 = vrot.lane.b32.xlu0 %v590, 16
      %v1174 = vpop.permute.xlu0 %1173
      %1175 = vrot.lane.b32.xlu0 %v591, 16
      %v1176 = vpop.permute.xlu0 %1175
      %1177 = vrot.lane.b32.xlu0 %v592, 16
      %v1178 = vpop.permute.xlu0 %1177
      %1179 = vrot.lane.b32.xlu0 %v593, 16
      %v1180 = vpop.permute.xlu0 %1179
      %1181 = vrot.lane.b32.xlu0 %v594, 16
      %v1182 = vpop.permute.xlu0 %1181
      %1183 = vrot.lane.b32.xlu0 %v595, 16
      %v1184 = vpop.permute.xlu0 %1183
      %1185 = vrot.lane.b32.xlu0 %v596, 16
      %v1186 = vpop.permute.xlu0 %1185
      %1187 = vrot.lane.b32.xlu0 %v597, 16
      %v1188 = vpop.permute.xlu0 %1187
      %1189 = vrot.lane.b32.xlu0 %v598, 16
      %v1190 = vpop.permute.xlu0 %1189
      %1191 = vrot.lane.b32.xlu0 %v599, 16
      %v1192 = vpop.permute.xlu0 %1191
      %1193 = vrot.lane.b32.xlu0 %v600, 16
      %v1194 = vpop.permute.xlu0 %1193
      %1195 = vrot.lane.b32.xlu0 %v601, 16
      %v1196 = vpop.permute.xlu0 %1195
      %1197 = vrot.lane.b32.xlu0 %v602, 16
      %v1198 = vpop.permute.xlu0 %1197
      %1199 = vrot.lane.b32.xlu0 %v603, 16
      %v1200 = vpop.permute.xlu0 %1199
      %1201 = vrot.lane.b32.xlu0 %v604, 16
      %v1202 = vpop.permute.xlu0 %1201
      %1203 = vrot.lane.b32.xlu0 %v605, 16
      %v1204 = vpop.permute.xlu0 %1203
      %1205 = vrot.lane.b32.xlu0 %v606, 16
      %v1206 = vpop.permute.xlu0 %1205
      %1207 = vrot.lane.b32.xlu0 %v607, 16
      %v1208 = vpop.permute.xlu0 %1207
      %1209 = vrot.lane.b32.xlu0 %v608, 16
      %v1210 = vpop.permute.xlu0 %1209
      %1211 = vrot.lane.b32.xlu0 %v609, 16
      %v1212 = vpop.permute.xlu0 %1211
      %1213 = vrot.lane.b32.xlu0 %v610, 16
      %v1214 = vpop.permute.xlu0 %1213
      %1215 = vrot.lane.b32.xlu0 %v611, 16
      %v1216 = vpop.permute.xlu0 %1215
      %1217 = vrot.lane.b32.xlu0 %v612, 16
      %v1218 = vpop.permute.xlu0 %1217
      %1219 = vrot.lane.b32.xlu0 %v613, 16
      %v1220 = vpop.permute.xlu0 %1219
      %1221 = vrot.lane.b32.xlu0 %v614, 16
      %v1222 = vpop.permute.xlu0 %1221
      %1223 = vrot.lane.b32.xlu0 %v615, 16
      %v1224 = vpop.permute.xlu0 %1223
      %1289 = vrot.lane.b32.xlu0 %v616, 20
      %v1290 = vpop.permute.xlu0 %1289
      %1291 = vrot.lane.b32.xlu0 %v617, 20
      %v1292 = vpop.permute.xlu0 %1291
      %1293 = vrot.lane.b32.xlu0 %v618, 20
      %v1294 = vpop.permute.xlu0 %1293
      %1295 = vrot.lane.b32.xlu0 %v619, 20
      %v1296 = vpop.permute.xlu0 %1295
      %1297 = vrot.lane.b32.xlu0 %v620, 20
      %v1298 = vpop.permute.xlu0 %1297
      %1299 = vrot.lane.b32.xlu0 %v621, 20
      %v1300 = vpop.permute.xlu0 %1299
      %1301 = vrot.lane.b32.xlu0 %v622, 20
      %v1302 = vpop.permute.xlu0 %1301
      %1303 = vrot.lane.b32.xlu0 %v623, 20
      %v1304 = vpop.permute.xlu0 %1303
      %1305 = vrot.lane.b32.xlu0 %v624, 20
      %v1306 = vpop.permute.xlu0 %1305
      %1307 = vrot.lane.b32.xlu0 %v625, 20
      %v1308 = vpop.permute.xlu0 %1307
      %1309 = vrot.lane.b32.xlu0 %v626, 20
      %v1310 = vpop.permute.xlu0 %1309
      %1311 = vrot.lane.b32.xlu0 %v627, 20
      %v1312 = vpop.permute.xlu0 %1311
      %1313 = vrot.lane.b32.xlu0 %v628, 20
      %v1314 = vpop.permute.xlu0 %1313
      %1315 = vrot.lane.b32.xlu0 %v629, 20
      %v1316 = vpop.permute.xlu0 %1315
      %1317 = vrot.lane.b32.xlu0 %v630, 20
      %v1318 = vpop.permute.xlu0 %1317
      %1319 = vrot.lane.b32.xlu0 %v631, 20
      %v1320 = vpop.permute.xlu0 %1319
      %1321 = vrot.lane.b32.xlu0 %v632, 20
      %v1322 = vpop.permute.xlu0 %1321
      %1323 = vrot.lane.b32.xlu0 %v633, 20
      %v1324 = vpop.permute.xlu0 %1323
      %1325 = vrot.lane.b32.xlu0 %v634, 20
      %v1326 = vpop.permute.xlu0 %1325
      %1327 = vrot.lane.b32.xlu0 %v635, 20
      %v1328 = vpop.permute.xlu0 %1327
      %1329 = vrot.lane.b32.xlu0 %v636, 20
      %v1330 = vpop.permute.xlu0 %1329
      %1331 = vrot.lane.b32.xlu0 %v637, 20
      %v1332 = vpop.permute.xlu0 %1331
      %1333 = vrot.lane.b32.xlu0 %v638, 20
      %v1334 = vpop.permute.xlu0 %1333
      %1335 = vrot.lane.b32.xlu0 %v639, 20
      %v1336 = vpop.permute.xlu0 %1335
      %1337 = vrot.lane.b32.xlu0 %v640, 20
      %v1338 = vpop.permute.xlu0 %1337
      %1339 = vrot.lane.b32.xlu0 %v641, 20
      %v1340 = vpop.permute.xlu0 %1339
      %1341 = vrot.lane.b32.xlu0 %v642, 20
      %v1342 = vpop.permute.xlu0 %1341
      %1343 = vrot.lane.b32.xlu0 %v643, 20
      %v1344 = vpop.permute.xlu0 %1343
      %1345 = vrot.lane.b32.xlu0 %v644, 20
      %v1346 = vpop.permute.xlu0 %1345
      %1347 = vrot.lane.b32.xlu0 %v645, 20
      %v1348 = vpop.permute.xlu0 %1347
      %1349 = vrot.lane.b32.xlu0 %v646, 20
      %v1350 = vpop.permute.xlu0 %1349
      %1351 = vrot.lane.b32.xlu0 %v647, 20
      %v1352 = vpop.permute.xlu0 %1351
      %1417 = vrot.lane.b32.xlu0 %v649, 24
      %v1418 = vpop.permute.xlu0 %1417
      %1419 = vrot.lane.b32.xlu0 %v650, 24
      %v1420 = vpop.permute.xlu0 %1419
      %1421 = vrot.lane.b32.xlu0 %v651, 24
      %v1422 = vpop.permute.xlu0 %1421
      %1423 = vrot.lane.b32.xlu0 %v652, 24
      %v1424 = vpop.permute.xlu0 %1423
      %1425 = vrot.lane.b32.xlu0 %v653, 24
      %v1426 = vpop.permute.xlu0 %1425
      %1427 = vrot.lane.b32.xlu0 %v654, 24
      %v1428 = vpop.permute.xlu0 %1427
      %1429 = vrot.lane.b32.xlu0 %v655, 24
      %v1430 = vpop.permute.xlu0 %1429
      %1431 = vrot.lane.b32.xlu0 %v656, 24
      %v1432 = vpop.permute.xlu0 %1431
      %1433 = vrot.lane.b32.xlu0 %v657, 24
      %v1434 = vpop.permute.xlu0 %1433
      %1435 = vrot.lane.b32.xlu0 %v658, 24
      %v1436 = vpop.permute.xlu0 %1435
      %1437 = vrot.lane.b32.xlu0 %v659, 24
      %v1438 = vpop.permute.xlu0 %1437
      %1439 = vrot.lane.b32.xlu0 %v660, 24
      %v1440 = vpop.permute.xlu0 %1439
      %1441 = vrot.lane.b32.xlu0 %v661, 24
      %v1442 = vpop.permute.xlu0 %1441
      %1443 = vrot.lane.b32.xlu0 %v662, 24
      %v1444 = vpop.permute.xlu0 %1443
      %1445 = vrot.lane.b32.xlu0 %v663, 24
      %v1446 = vpop.permute.xlu0 %1445
      %1447 = vrot.lane.b32.xlu0 %v664, 24
      %v1448 = vpop.permute.xlu0 %1447
      %1449 = vrot.lane.b32.xlu0 %v665, 24
      %v1450 = vpop.permute.xlu0 %1449
      %1451 = vrot.lane.b32.xlu0 %v666, 24
      %v1452 = vpop.permute.xlu0 %1451
      %1453 = vrot.lane.b32.xlu0 %v667, 24
      %v1454 = vpop.permute.xlu0 %1453
      %1455 = vrot.lane.b32.xlu0 %v668, 24
      %v1456 = vpop.permute.xlu0 %1455
      %1457 = vrot.lane.b32.xlu0 %v669, 24
      %v1458 = vpop.permute.xlu0 %1457
      %1459 = vrot.lane.b32.xlu0 %v670, 24
      %v1460 = vpop.permute.xlu0 %1459
      %1461 = vrot.lane.b32.xlu0 %v671, 24
      %v1462 = vpop.permute.xlu0 %1461
      %1463 = vrot.lane.b32.xlu0 %v672, 24
      %v1464 = vpop.permute.xlu0 %1463
      %1465 = vrot.lane.b32.xlu0 %v673, 24
      %v1466 = vpop.permute.xlu0 %1465
      %1467 = vrot.lane.b32.xlu0 %v674, 24
      %v1468 = vpop.permute.xlu0 %1467
      %1469 = vrot.lane.b32.xlu0 %v675, 24
      %v1470 = vpop.permute.xlu0 %1469
      %1471 = vrot.lane.b32.xlu0 %v676, 24
      %v1472 = vpop.permute.xlu0 %1471
      %1473 = vrot.lane.b32.xlu0 %v677, 24
      %v1474 = vpop.permute.xlu0 %1473
      %1475 = vrot.lane.b32.xlu0 %v678, 24
      %v1476 = vpop.permute.xlu0 %1475
      %1477 = vrot.lane.b32.xlu0 %v679, 24
      %v1478 = vpop.permute.xlu0 %1477
      %1479 = vrot.lane.b32.xlu0 %v680, 24
      %v1480 = vpop.permute.xlu0 %1479
      %1545 = vrot.lane.b32.xlu0 %v681, 28
      %v1546 = vpop.permute.xlu0 %1545
      %1547 = vrot.lane.b32.xlu0 %v682, 28
      %v1548 = vpop.permute.xlu0 %1547
      %1549 = vrot.lane.b32.xlu0 %v683, 28
      %v1550 = vpop.permute.xlu0 %1549
      %1551 = vrot.lane.b32.xlu0 %v684, 28
      %v1552 = vpop.permute.xlu0 %1551
      %1553 = vrot.lane.b32.xlu0 %v685, 28
      %v1554 = vpop.permute.xlu0 %1553
      %1555 = vrot.lane.b32.xlu0 %v686, 28
      %v1556 = vpop.permute.xlu0 %1555
      %1557 = vrot.lane.b32.xlu0 %v687, 28
      %v1558 = vpop.permute.xlu0 %1557
      %1559 = vrot.lane.b32.xlu0 %v688, 28
      %v1560 = vpop.permute.xlu0 %1559
      %1561 = vrot.lane.b32.xlu0 %v689, 28
      %v1562 = vpop.permute.xlu0 %1561
      %1563 = vrot.lane.b32.xlu0 %v690, 28
      %v1564 = vpop.permute.xlu0 %1563
      %1565 = vrot.lane.b32.xlu0 %v691, 28
      %v1566 = vpop.permute.xlu0 %1565
      %1567 = vrot.lane.b32.xlu0 %v692, 28
      %v1568 = vpop.permute.xlu0 %1567
      %1569 = vrot.lane.b32.xlu0 %v693, 28
      %v1570 = vpop.permute.xlu0 %1569
      %1571 = vrot.lane.b32.xlu0 %v694, 28
      %v1572 = vpop.permute.xlu0 %1571
      %1573 = vrot.lane.b32.xlu0 %v695, 28
      %v1574 = vpop.permute.xlu0 %1573
      %1575 = vrot.lane.b32.xlu0 %v696, 28
      %v1576 = vpop.permute.xlu0 %1575
      %1577 = vrot.lane.b32.xlu0 %v697, 28
      %v1578 = vpop.permute.xlu0 %1577
      %1579 = vrot.lane.b32.xlu0 %v698, 28
      %v1580 = vpop.permute.xlu0 %1579
      %1581 = vrot.lane.b32.xlu0 %v699, 28
      %v1582 = vpop.permute.xlu0 %1581
      %1583 = vrot.lane.b32.xlu0 %v700, 28
      %v1584 = vpop.permute.xlu0 %1583
      %1585 = vrot.lane.b32.xlu0 %v701, 28
      %v1586 = vpop.permute.xlu0 %1585
      %1587 = vrot.lane.b32.xlu0 %v702, 28
      %v1588 = vpop.permute.xlu0 %1587
      %1589 = vrot.lane.b32.xlu0 %v703, 28
      %v1590 = vpop.permute.xlu0 %1589
      %1591 = vrot.lane.b32.xlu0 %v704, 28
      %v1592 = vpop.permute.xlu0 %1591
      %1593 = vrot.lane.b32.xlu0 %v705, 28
      %v1594 = vpop.permute.xlu0 %1593
      %1595 = vrot.lane.b32.xlu0 %v706, 28
      %v1596 = vpop.permute.xlu0 %1595
      %1597 = vrot.lane.b32.xlu0 %v707, 28
      %v1598 = vpop.permute.xlu0 %1597
      %1599 = vrot.lane.b32.xlu0 %v708, 28
      %v1600 = vpop.permute.xlu0 %1599
      %1601 = vrot.lane.b32.xlu0 %v709, 28
      %v1602 = vpop.permute.xlu0 %1601
      %1603 = vrot.lane.b32.xlu0 %v710, 28
      %v1604 = vpop.permute.xlu0 %1603
      %1605 = vrot.lane.b32.xlu0 %v711, 28
      %v1606 = vpop.permute.xlu0 %1605
      %1607 = vrot.lane.b32.xlu0 %v712, 28
      %v1608 = vpop.permute.xlu0 %1607
      %1673 = vrot.lane.b32.xlu0 %v713, 32
      %v1674 = vpop.permute.xlu0 %1673
      %1675 = vrot.lane.b32.xlu0 %v714, 32
      %v1676 = vpop.permute.xlu0 %1675
      %1677 = vrot.lane.b32.xlu0 %v715, 32
      %v1678 = vpop.permute.xlu0 %1677
      %1679 = vrot.lane.b32.xlu0 %v716, 32
      %v1680 = vpop.permute.xlu0 %1679
      %1681 = vrot.lane.b32.xlu0 %v717, 32
      %v1682 = vpop.permute.xlu0 %1681
      %1683 = vrot.lane.b32.xlu0 %v718, 32
      %v1684 = vpop.permute.xlu0 %1683
      %1685 = vrot.lane.b32.xlu0 %v719, 32
      %v1686 = vpop.permute.xlu0 %1685
      %1687 = vrot.lane.b32.xlu0 %v720, 32
      %v1688 = vpop.permute.xlu0 %1687
      %1689 = vrot.lane.b32.xlu0 %v721, 32
      %v1690 = vpop.permute.xlu0 %1689
      %1691 = vrot.lane.b32.xlu0 %v722, 32
      %v1692 = vpop.permute.xlu0 %1691
      %1693 = vrot.lane.b32.xlu0 %v723, 32
      %v1694 = vpop.permute.xlu0 %1693
      %1695 = vrot.lane.b32.xlu0 %v724, 32
      %v1696 = vpop.permute.xlu0 %1695
      %1697 = vrot.lane.b32.xlu0 %v725, 32
      %v1698 = vpop.permute.xlu0 %1697
      %1699 = vrot.lane.b32.xlu0 %v726, 32
      %v1700 = vpop.permute.xlu0 %1699
      %1701 = vrot.lane.b32.xlu0 %v727, 32
      %v1702 = vpop.permute.xlu0 %1701
      %1703 = vrot.lane.b32.xlu0 %v728, 32
      %v1704 = vpop.permute.xlu0 %1703
      %1705 = vrot.lane.b32.xlu0 %v729, 32
      %v1706 = vpop.permute.xlu0 %1705
      %1707 = vrot.lane.b32.xlu0 %v730, 32
      %v1708 = vpop.permute.xlu0 %1707
      %1709 = vrot.lane.b32.xlu0 %v731, 32
      %v1710 = vpop.permute.xlu0 %1709
      %1711 = vrot.lane.b32.xlu0 %v732, 32
      %v1712 = vpop.permute.xlu0 %1711
      %1713 = vrot.lane.b32.xlu0 %v733, 32
      %v1714 = vpop.permute.xlu0 %1713
      %1715 = vrot.lane.b32.xlu0 %v734, 32
      %v1716 = vpop.permute.xlu0 %1715
      %1717 = vrot.lane.b32.xlu0 %v735, 32
      %v1718 = vpop.permute.xlu0 %1717
      %1719 = vrot.lane.b32.xlu0 %v736, 32
      %v1720 = vpop.permute.xlu0 %1719
      %1721 = vrot.lane.b32.xlu0 %v737, 32
      %v1722 = vpop.permute.xlu0 %1721
      %1723 = vrot.lane.b32.xlu0 %v738, 32
      %v1724 = vpop.permute.xlu0 %1723
      %1725 = vrot.lane.b32.xlu0 %v739, 32
      %v1726 = vpop.permute.xlu0 %1725
      %1727 = vrot.lane.b32.xlu0 %v740, 32
      %v1728 = vpop.permute.xlu0 %1727
      %1729 = vrot.lane.b32.xlu0 %v741, 32
      %v1730 = vpop.permute.xlu0 %1729
      %1731 = vrot.lane.b32.xlu0 %v742, 32
      %v1732 = vpop.permute.xlu0 %1731
      %1733 = vrot.lane.b32.xlu0 %v743, 32
      %v1734 = vpop.permute.xlu0 %1733
      %1735 = vrot.lane.b32.xlu0 %v744, 32
      %v1736 = vpop.permute.xlu0 %1735
      %v1769 = vsel %vm279, %v456, %v778
      %v1770 = vsel %vm279, %v457, %v780
      %v1771 = vsel %vm279, %v458, %v782
      %v1772 = vsel %vm279, %v459, %v784
      %v1773 = vsel %vm279, %v460, %v786
      %v1774 = vsel %vm279, %v461, %v788
      %v1775 = vsel %vm279, %v462, %v790
      %v1776 = vsel %vm279, %v463, %v792
      %v1777 = vsel %vm279, %v464, %v794
      %v1778 = vsel %vm279, %v465, %v796
      %v1779 = vsel %vm279, %v466, %v798
      %v1780 = vsel %vm279, %v467, %v800
      %v1781 = vsel %vm279, %v468, %v802
      %v1782 = vsel %vm279, %v469, %v804
      %v1783 = vsel %vm279, %v470, %v806
      %v1784 = vsel %vm279, %v471, %v808
      %v1785 = vsel %vm279, %v472, %v810
      %v1786 = vsel %vm279, %v473, %v812
      %v1787 = vsel %vm279, %v474, %v814
      %v1788 = vsel %vm279, %v475, %v816
      %v1789 = vsel %vm279, %v476, %v818
      %v1790 = vsel %vm279, %v477, %v820
      %v1791 = vsel %vm279, %v478, %v822
      %v1792 = vsel %vm279, %v479, %v824
      %v1793 = vsel %vm279, %v480, %v826
      %v1794 = vsel %vm279, %v481, %v828
      %v1795 = vsel %vm279, %v482, %v830
      %v1796 = vsel %vm279, %v483, %v832
      %v1797 = vsel %vm279, %v484, %v834
      %v1798 = vsel %vm279, %v485, %v836
      %v1799 = vsel %vm279, %v486, %v838
      %v1800 = vsel %vm279, %v487, %v840
      %vm1801 = vcmask 64512
      %v1802 = vsel %vm1801, %v1769, %v906
      %v1803 = vsel %vm1801, %v1770, %v908
      %v1804 = vsel %vm1801, %v1771, %v910
      %v1805 = vsel %vm1801, %v1772, %v912
      %v1806 = vsel %vm1801, %v1773, %v914
      %v1807 = vsel %vm1801, %v1774, %v916
      %v1808 = vsel %vm1801, %v1775, %v918
      %v1809 = vsel %vm1801, %v1776, %v920
      %v1810 = vsel %vm1801, %v1777, %v922
      %v1811 = vsel %vm1801, %v1778, %v924
      %v1812 = vsel %vm1801, %v1779, %v926
      %v1813 = vsel %vm1801, %v1780, %v928
      %v1814 = vsel %vm1801, %v1781, %v930
      %v1815 = vsel %vm1801, %v1782, %v932
      %v1816 = vsel %vm1801, %v1783, %v934
      %v1817 = vsel %vm1801, %v1784, %v936
      %v1818 = vsel %vm1801, %v1785, %v938
      %v1819 = vsel %vm1801, %v1786, %v940
      %v1820 = vsel %vm1801, %v1787, %v942
      %v1821 = vsel %vm1801, %v1788, %v944
      %v1822 = vsel %vm1801, %v1789, %v946
      %v1823 = vsel %vm1801, %v1790, %v948
      %v1824 = vsel %vm1801, %v1791, %v950
      %v1825 = vsel %vm1801, %v1792, %v952
      %v1826 = vsel %vm1801, %v1793, %v954
      %v1827 = vsel %vm1801, %v1794, %v956
      %v1828 = vsel %vm1801, %v1795, %v958
      %v1829 = vsel %vm1801, %v1796, %v960
      %v1830 = vsel %vm1801, %v1797, %v962
      %v1831 = vsel %vm1801, %v1798, %v964
      %v1832 = vsel %vm1801, %v1799, %v966
      %v1833 = vsel %vm1801, %v1800, %v968
      %vm1834 = vcmask 97280
      %v1835 = vsel %vm1834, %v1802, %v1034
      %v1836 = vsel %vm1834, %v1803, %v1036
      %v1837 = vsel %vm1834, %v1804, %v1038
      %v1838 = vsel %vm1834, %v1805, %v1040
      %v1839 = vsel %vm1834, %v1806, %v1042
      %v1840 = vsel %vm1834, %v1807, %v1044
      %v1841 = vsel %vm1834, %v1808, %v1046
      %v1842 = vsel %vm1834, %v1809, %v1048
      %v1843 = vsel %vm1834, %v1810, %v1050
      %v1844 = vsel %vm1834, %v1811, %v1052
      %v1845 = vsel %vm1834, %v1812, %v1054
      %v1846 = vsel %vm1834, %v1813, %v1056
      %v1847 = vsel %vm1834, %v1814, %v1058
      %v1848 = vsel %vm1834, %v1815, %v1060
      %v1849 = vsel %vm1834, %v1816, %v1062
      %v1850 = vsel %vm1834, %v1817, %v1064
      %v1851 = vsel %vm1834, %v1818, %v1066
      %v1852 = vsel %vm1834, %v1819, %v1068
      %v1853 = vsel %vm1834, %v1820, %v1070
      %v1854 = vsel %vm1834, %v1821, %v1072
      %v1855 = vsel %vm1834, %v1822, %v1074
      %v1856 = vsel %vm1834, %v1823, %v1076
      %v1857 = vsel %vm1834, %v1824, %v1078
      %v1858 = vsel %vm1834, %v1825, %v1080
      %v1859 = vsel %vm1834, %v1826, %v1082
      %v1860 = vsel %vm1834, %v1827, %v1084
      %v1861 = vsel %vm1834, %v1828, %v1086
      %v1862 = vsel %vm1834, %v1829, %v1088
      %v1863 = vsel %vm1834, %v1830, %v1090
      %v1864 = vsel %vm1834, %v1831, %v1092
      %v1865 = vsel %vm1834, %v1832, %v1094
      %v1866 = vsel %vm1834, %v1833, %v1096
      %vm1867 = vcmask 130048
      %v1868 = vsel %vm1867, %v1835, %v1162
      %v1869 = vsel %vm1867, %v1836, %v1164
      %v1870 = vsel %vm1867, %v1837, %v1166
      %v1871 = vsel %vm1867, %v1838, %v1168
      %v1872 = vsel %vm1867, %v1839, %v1170
      %v1873 = vsel %vm1867, %v1840, %v1172
      %v1874 = vsel %vm1867, %v1841, %v1174
      %v1875 = vsel %vm1867, %v1842, %v1176
      %v1876 = vsel %vm1867, %v1843, %v1178
      %v1877 = vsel %vm1867, %v1844, %v1180
      %v1878 = vsel %vm1867, %v1845, %v1182
      %v1879 = vsel %vm1867, %v1846, %v1184
      %v1880 = vsel %vm1867, %v1847, %v1186
      %v1881 = vsel %vm1867, %v1848, %v1188
      %v1882 = vsel %vm1867, %v1849, %v1190
      %v1883 = vsel %vm1867, %v1850, %v1192
      %v1884 = vsel %vm1867, %v1851, %v1194
      %v1885 = vsel %vm1867, %v1852, %v1196
      %v1886 = vsel %vm1867, %v1853, %v1198
      %v1887 = vsel %vm1867, %v1854, %v1200
      %v1888 = vsel %vm1867, %v1855, %v1202
      %v1889 = vsel %vm1867, %v1856, %v1204
      %v1890 = vsel %vm1867, %v1857, %v1206
      %v1891 = vsel %vm1867, %v1858, %v1208
      %v1892 = vsel %vm1867, %v1859, %v1210
      %v1893 = vsel %vm1867, %v1860, %v1212
      %v1894 = vsel %vm1867, %v1861, %v1214
      %v1895 = vsel %vm1867, %v1862, %v1216
      %v1896 = vsel %vm1867, %v1863, %v1218
      %v1897 = vsel %vm1867, %v1864, %v1220
      %v1898 = vsel %vm1867, %v1865, %v1222
      %v1899 = vsel %vm1867, %v1866, %v1224
      %vm1900 = vcmask 162816
      %v1901 = vsel %vm1900, %v1868, %v1290
      %v1902 = vsel %vm1900, %v1869, %v1292
      %v1903 = vsel %vm1900, %v1870, %v1294
      %v1904 = vsel %vm1900, %v1871, %v1296
      %v1905 = vsel %vm1900, %v1872, %v1298
      %v1906 = vsel %vm1900, %v1873, %v1300
      %v1907 = vsel %vm1900, %v1874, %v1302
      %v1908 = vsel %vm1900, %v1875, %v1304
      %v1909 = vsel %vm1900, %v1876, %v1306
      %v1910 = vsel %vm1900, %v1877, %v1308
      %v1911 = vsel %vm1900, %v1878, %v1310
      %v1912 = vsel %vm1900, %v1879, %v1312
      %v1913 = vsel %vm1900, %v1880, %v1314
      %v1914 = vsel %vm1900, %v1881, %v1316
      %v1915 = vsel %vm1900, %v1882, %v1318
      %v1916 = vsel %vm1900, %v1883, %v1320
      %v1917 = vsel %vm1900, %v1884, %v1322
      %v1918 = vsel %vm1900, %v1885, %v1324
      %v1919 = vsel %vm1900, %v1886, %v1326
      %v1920 = vsel %vm1900, %v1887, %v1328
      %v1921 = vsel %vm1900, %v1888, %v1330
      %v1922 = vsel %vm1900, %v1889, %v1332
      %v1923 = vsel %vm1900, %v1890, %v1334
      %v1924 = vsel %vm1900, %v1891, %v1336
      %v1925 = vsel %vm1900, %v1892, %v1338
      %v1926 = vsel %vm1900, %v1893, %v1340
      %v1927 = vsel %vm1900, %v1894, %v1342
      %v1928 = vsel %vm1900, %v1895, %v1344
      %v1929 = vsel %vm1900, %v1896, %v1346
      %v1930 = vsel %vm1900, %v1897, %v1348
      %v1931 = vsel %vm1900, %v1898, %v1350
      %v1932 = vsel %vm1900, %v1899, %v1352
      %vm1933 = vcmask 195584
      %v1934 = vsel %vm1933, %v1901, %v1418
      %v1935 = vsel %vm1933, %v1902, %v1420
      %v1936 = vsel %vm1933, %v1903, %v1422
      %v1937 = vsel %vm1933, %v1904, %v1424
      %v1938 = vsel %vm1933, %v1905, %v1426
      %v1939 = vsel %vm1933, %v1906, %v1428
      %v1940 = vsel %vm1933, %v1907, %v1430
      %v1941 = vsel %vm1933, %v1908, %v1432
      %v1942 = vsel %vm1933, %v1909, %v1434
      %v1943 = vsel %vm1933, %v1910, %v1436
      %v1944 = vsel %vm1933, %v1911, %v1438
      %v1945 = vsel %vm1933, %v1912, %v1440
      %v1946 = vsel %vm1933, %v1913, %v1442
      %v1947 = vsel %vm1933, %v1914, %v1444
      %v1948 = vsel %vm1933, %v1915, %v1446
      %v1949 = vsel %vm1933, %v1916, %v1448
      %v1950 = vsel %vm1933, %v1917, %v1450
      %v1951 = vsel %vm1933, %v1918, %v1452
      %v1952 = vsel %vm1933, %v1919, %v1454
      %v1953 = vsel %vm1933, %v1920, %v1456
      %v1954 = vsel %vm1933, %v1921, %v1458
      %v1955 = vsel %vm1933, %v1922, %v1460
      %v1956 = vsel %vm1933, %v1923, %v1462
      %v1957 = vsel %vm1933, %v1924, %v1464
      %v1958 = vsel %vm1933, %v1925, %v1466
      %v1959 = vsel %vm1933, %v1926, %v1468
      %v1960 = vsel %vm1933, %v1927, %v1470
      %v1961 = vsel %vm1933, %v1928, %v1472
      %v1962 = vsel %vm1933, %v1929, %v1474
      %v1963 = vsel %vm1933, %v1930, %v1476
      %v1964 = vsel %vm1933, %v1931, %v1478
      %v1965 = vsel %vm1933, %v1932, %v1480
      %vm1966 = vcmask 228352
      %v1967 = vsel %vm1966, %v1934, %v1546
      %v1968 = vsel %vm1966, %v1935, %v1548
      %v1969 = vsel %vm1966, %v1936, %v1550
      %v1970 = vsel %vm1966, %v1937, %v1552
      %v1971 = vsel %vm1966, %v1938, %v1554
      %v1972 = vsel %vm1966, %v1939, %v1556
      %v1973 = vsel %vm1966, %v1940, %v1558
      %v1974 = vsel %vm1966, %v1941, %v1560
      %v1975 = vsel %vm1966, %v1942, %v1562
      %v1976 = vsel %vm1966, %v1943, %v1564
      %v1977 = vsel %vm1966, %v1944, %v1566
      %v1978 = vsel %vm1966, %v1945, %v1568
      %v1979 = vsel %vm1966, %v1946, %v1570
      %v1980 = vsel %vm1966, %v1947, %v1572
      %v1981 = vsel %vm1966, %v1948, %v1574
      %v1982 = vsel %vm1966, %v1949, %v1576
      %v1983 = vsel %vm1966, %v1950, %v1578
      %v1984 = vsel %vm1966, %v1951, %v1580
      %v1985 = vsel %vm1966, %v1952, %v1582
      %v1986 = vsel %vm1966, %v1953, %v1584
      %v1987 = vsel %vm1966, %v1954, %v1586
      %v1988 = vsel %vm1966, %v1955, %v1588
      %v1989 = vsel %vm1966, %v1956, %v1590
      %v1990 = vsel %vm1966, %v1957, %v1592
      %v1991 = vsel %vm1966, %v1958, %v1594
      %v1992 = vsel %vm1966, %v1959, %v1596
      %v1993 = vsel %vm1966, %v1960, %v1598
      %v1994 = vsel %vm1966, %v1961, %v1600
      %v1995 = vsel %vm1966, %v1962, %v1602
      %v1996 = vsel %vm1966, %v1963, %v1604
      %v1997 = vsel %vm1966, %v1964, %v1606
      %v1998 = vsel %vm1966, %v1965, %v1608
      %v1999 = vsel %vm335, %v1967, %v1674
      %v2000 = vsel %vm335, %v1968, %v1676
      %v2001 = vsel %vm335, %v1969, %v1678
      %v2002 = vsel %vm335, %v1970, %v1680
      %v2003 = vsel %vm335, %v1971, %v1682
      %v2004 = vsel %vm335, %v1972, %v1684
      %v2005 = vsel %vm335, %v1973, %v1686
      %v2006 = vsel %vm335, %v1974, %v1688
      %v2007 = vsel %vm335, %v1975, %v1690
      %v2008 = vsel %vm335, %v1976, %v1692
      %v2009 = vsel %vm335, %v1977, %v1694
      %v2010 = vsel %vm335, %v1978, %v1696
      %v2011 = vsel %vm335, %v1979, %v1698
      %v2012 = vsel %vm335, %v1980, %v1700
      %v2013 = vsel %vm335, %v1981, %v1702
      %v2014 = vsel %vm335, %v1982, %v1704
      %v2015 = vsel %vm335, %v1983, %v1706
      %v2016 = vsel %vm335, %v1984, %v1708
      %v2017 = vsel %vm335, %v1985, %v1710
      %v2018 = vsel %vm335, %v1986, %v1712
      %v2019 = vsel %vm335, %v1987, %v1714
      %v2020 = vsel %vm335, %v1988, %v1716
      %v2021 = vsel %vm335, %v1989, %v1718
      %v2022 = vsel %vm335, %v1990, %v1720
      %v2023 = vsel %vm335, %v1991, %v1722
      %v2024 = vsel %vm335, %v1992, %v1724
      %v2025 = vsel %vm335, %v1993, %v1726
      %v2026 = vsel %vm335, %v1994, %v1728
      %v2027 = vsel %vm335, %v1995, %v1730
      %v2028 = vsel %vm335, %v1996, %v1732
      %v2029 = vsel %vm335, %v1997, %v1734
      %v2030 = vsel %vm335, %v1998, %v1736
      %v2031 = vld [vmem:[%s1] sm:$0xff]
      %v2032 = vld [vmem:[%s1 + $0x8] sm:$0xff]
      %v2033 = vld [vmem:[%s1 + $0x10] sm:$0xff]
      %v2034 = vld [vmem:[%s1 + $0x18] sm:$0xff]
      %v2035 = vld [vmem:[%s1 + $0x20] sm:$0xf]
      %v2036 = vld [vmem:[%s2] sm:$0x1]
      %v2038 = vlaneseq
      %v2039 = vshrl.u32 %v2038, 7
      %v2040 = vsub.s32 0, %v2039
      %v2041 = vrot.slane %v2036, %v2040
      %vm2043 = vcmask 293888
      %v2045 = vsel %vm2043, %v1999, 0
      %v2048 = vsel %vm2043, %v2000, 0
      %v2051 = vsel %vm2043, %v2001, 0
      %v2054 = vsel %vm2043, %v2002, 0
      %v2057 = vsel %vm2043, %v2003, 0
      %v2060 = vsel %vm2043, %v2004, 0
      %v2063 = vsel %vm2043, %v2005, 0
      %v2066 = vsel %vm2043, %v2006, 0
      %v2069 = vsel %vm2043, %v2007, 0
      %v2072 = vsel %vm2043, %v2008, 0
      %v2075 = vsel %vm2043, %v2009, 0
      %v2078 = vsel %vm2043, %v2010, 0
      %v2081 = vsel %vm2043, %v2011, 0
      %v2084 = vsel %vm2043, %v2012, 0
      %v2087 = vsel %vm2043, %v2013, 0
      %v2090 = vsel %vm2043, %v2014, 0
      %v2093 = vsel %vm2043, %v2015, 0
      %v2096 = vsel %vm2043, %v2016, 0
      %v2099 = vsel %vm2043, %v2017, 0
      %v2102 = vsel %vm2043, %v2018, 0
      %v2105 = vsel %vm2043, %v2019, 0
      %v2108 = vsel %vm2043, %v2020, 0
      %v2111 = vsel %vm2043, %v2021, 0
      %v2114 = vsel %vm2043, %v2022, 0
      %v2117 = vsel %vm2043, %v2023, 0
      %v2120 = vsel %vm2043, %v2024, 0
      %v2123 = vsel %vm2043, %v2025, 0
      %v2126 = vsel %vm2043, %v2026, 0
      %v2129 = vsel %vm2043, %v2027, 0
      %v2132 = vsel %vm2043, %v2028, 0
      %v2135 = vsel %vm2043, %v2029, 0
      %v2138 = vsel %vm2043, %v2030, 0
      %vm2140 = vcmask 1043456
      %v2142 = vsel %vm2140, %v2035, 0
      %2144 = vmatprep.subr.mxu0 0.0
      %2145 = vmatpush1.msra.mxu0 %v2031
      %2146 = vmatprep.subr.mxu0 0.0
      %2147 = vmatpush1.msra.mxu0 %v2032
      %2148 = vmatprep.subr.mxu0 0.0
      %2149 = vmatpush1.msra.mxu0 %v2033
      %2150 = vmatprep.subr.mxu0 0.0
      %2151 = vmatpush1.msra.mxu0 %v2034
      %2152 = vmatprep.subr.mxu0 0.0
      %2153 = vmatpush1.msra.mxu0 %v2142
      %2154 = vmatprep.subr.mxu0 0.0
      %2155 = vmatpush1.msra.mxu0 0.0
      %2156 = vmatprep.subr.mxu0 0.0
      %2157 = vmatpush1.msra.mxu0 0.0
      %2158 = vmatprep.subr.mxu0 0.0
      %2159 = vmatpush1.msra.mxu0 0.0
      %2160 = vmatprep.subr.mxu0 0.0
      %2161 = vmatpush1.msra.mxu0 0.0
      %2162 = vmatprep.subr.mxu0 0.0
      %2163 = vmatpush1.msra.mxu0 0.0
      %2164 = vmatprep.subr.mxu0 0.0
      %2165 = vmatpush1.msra.mxu0 0.0
      %2166 = vmatprep.subr.mxu0 0.0
      %2167 = vmatpush1.msra.mxu0 0.0
      %2168 = vmatprep.subr.mxu0 0.0
      %2169 = vmatpush1.msra.mxu0 0.0
      %2170 = vmatprep.subr.mxu0 0.0
      %2171 = vmatpush1.msra.mxu0 0.0
      %2172 = vmatprep.subr.mxu0 0.0
      %2173 = vmatpush1.msra.mxu0 0.0
      %2174 = vmatprep.subr.mxu0 0.0
      %2175 = vmatpush1.msra.mxu0 0.0
      %2176 = vmatprep.subr.mxu0 0.0
      %2177 = vmatpush1.msra.mxu0 0.0
      %2178 = vmatprep.subr.mxu0 0.0
      %2179 = vmatpush1.msra.mxu0 0.0
      %2180 = vmatprep.subr.mxu0 0.0
      %2181 = vmatpush1.msra.mxu0 0.0
      %2182 = vmatprep.subr.mxu0 0.0
      %2183 = vmatpush1.msra.mxu0 0.0
      %2184 = vmatprep.subr.mxu0 0.0
      %2185 = vmatpush1.msra.mxu0 0.0
      %2186 = vmatprep.subr.mxu0 0.0
      %2187 = vmatpush1.msra.mxu0 0.0
      %2188 = vmatprep.subr.mxu0 0.0
      %2189 = vmatpush1.msra.mxu0 0.0
      %2190 = vmatprep.subr.mxu0 0.0
      %2191 = vmatpush1.msra.mxu0 0.0
      %2192 = vmatprep.subr.mxu0 0.0
      %2193 = vmatpush1.msra.mxu0 0.0
      %2194 = vmatprep.subr.mxu0 0.0
      %2195 = vmatpush1.msra.mxu0 0.0
      %2196 = vmatprep.subr.mxu0 0.0
      %2197 = vmatpush1.msra.mxu0 0.0
      %2198 = vmatprep.subr.mxu0 0.0
      %2199 = vmatpush1.msra.mxu0 0.0
      %2200 = vmatprep.subr.mxu0 0.0
      %2201 = vmatpush1.msra.mxu0 0.0
      %2202 = vmatprep.subr.mxu0 0.0
      %2203 = vmatpush1.msra.mxu0 0.0
      %2204 = vmatprep.subr.mxu0 0.0
      %2205 = vmatpush1.msra.mxu0 0.0
      %2206 = vmatprep.subr.mxu0 0.0
      %2207 = vmatpush1.msra.mxu0 0.0
      %2208 = vmatprep.mubr.f32.mxu0 0.0
      %2209 = vmatmul.mubr.f32.gmra.mrb[0].mxu0 %v2045
      %v2210 = vpop.f32.mrb[0].mxu0
      %v2211 = vadd.f32 %v2041, %v2210
      %v2212 = vpop.f32.mrb[0].mxu0
      %2213 = vmatprep.mubr.f32.mxu0 0.0
      %2214 = vmatmul.mubr.f32.gmra.mrb[0].mxu0 %v2048
      %v2215 = vpop.f32.mrb[0].mxu0
      %v2216 = vadd.f32 %v2041, %v2215
      %v2217 = vpop.f32.mrb[0].mxu0
      %2218 = vmatprep.mubr.f32.mxu0 0.0
      %2219 = vmatmul.mubr.f32.gmra.mrb[0].mxu0 %v2051
      %v2220 = vpop.f32.mrb[0].mxu0
      %v2221 = vadd.f32 %v2041, %v2220
      %v2222 = vpop.f32.mrb[0].mxu0
      %2223 = vmatprep.mubr.f32.mxu0 0.0
      %2224 = vmatmul.mubr.f32.gmra.mrb[0].mxu0 %v2054
      %v2225 = vpop.f32.mrb[0].mxu0
      %v2226 = vadd.f32 %v2041, %v2225
      %v2227 = vpop.f32.mrb[0].mxu0
      %2228 = vmatprep.mubr.f32.mxu0 0.0
      %2229 = vmatmul.mubr.f32.gmra.mrb[0].mxu0 %v2057
      %v2230 = vpop.f32.mrb[0].mxu0
      %v2231 = vadd.f32 %v2041, %v2230
      %v2232 = vpop.f32.mrb[0].mxu0
      %2233 = vmatprep.mubr.f32.mxu0 0.0
      %2234 = vmatmul.mubr.f32.gmra.mrb[0].mxu0 %v2060
      %v2235 = vpop.f32.mrb[0].mxu0
      %v2236 = vadd.f32 %v2041, %v2235
      %v2237 = vpop.f32.mrb[0].mxu0
      %2238 = vmatprep.mubr.f32.mxu0 0.0
      %2239 = vmatmul.mubr.f32.gmra.mrb[0].mxu0 %v2063
      %v2240 = vpop.f32.mrb[0].mxu0
      %v2241 = vadd.f32 %v2041, %v2240
      %v2242 = vpop.f32.mrb[0].mxu0
      %2243 = vmatprep.mubr.f32.mxu0 0.0
      %2244 = vmatmul.mubr.f32.gmra.mrb[0].mxu0 %v2066
      %v2245 = vpop.f32.mrb[0].mxu0
      %v2246 = vadd.f32 %v2041, %v2245
      %v2247 = vpop.f32.mrb[0].mxu0
      %2248 = vmatprep.mubr.f32.mxu0 0.0
      %2249 = vmatmul.mubr.f32.gmra.mrb[0].mxu0 %v2069
      %v2250 = vpop.f32.mrb[0].mxu0
      %v2251 = vadd.f32 %v2041, %v2250
      %v2252 = vpop.f32.mrb[0].mxu0
      %2253 = vmatprep.mubr.f32.mxu0 0.0
      %2254 = vmatmul.mubr.f32.gmra.mrb[0].mxu0 %v2072
      %v2255 = vpop.f32.mrb[0].mxu0
      %v2256 = vadd.f32 %v2041, %v2255
      %v2257 = vpop.f32.mrb[0].mxu0
      %2258 = vmatprep.mubr.f32.mxu0 0.0
      %2259 = vmatmul.mubr.f32.gmra.mrb[0].mxu0 %v2075
      %v2260 = vpop.f32.mrb[0].mxu0
      %v2261 = vadd.f32 %v2041, %v2260
      %v2262 = vpop.f32.mrb[0].mxu0
      %2263 = vmatprep.mubr.f32.mxu0 0.0
      %2264 = vmatmul.mubr.f32.gmra.mrb[0].mxu0 %v2078
      %v2265 = vpop.f32.mrb[0].mxu0
      %v2266 = vadd.f32 %v2041, %v2265
      %v2267 = vpop.f32.mrb[0].mxu0
      %2268 = vmatprep.mubr.f32.mxu0 0.0
      %2269 = vmatmul.mubr.f32.gmra.mrb[0].mxu0 %v2081
      %v2270 = vpop.f32.mrb[0].mxu0
      %v2271 = vadd.f32 %v2041, %v2270
      %v2272 = vpop.f32.mrb[0].mxu0
      %2273 = vmatprep.mubr.f32.mxu0 0.0
      %2274 = vmatmul.mubr.f32.gmra.mrb[0].mxu0 %v2084
      %v2275 = vpop.f32.mrb[0].mxu0
      %v2276 = vadd.f32 %v2041, %v2275
      %v2277 = vpop.f32.mrb[0].mxu0
      %2278 = vmatprep.mubr.f32.mxu0 0.0
      %2279 = vmatmul.mubr.f32.gmra.mrb[0].mxu0 %v2087
      %v2280 = vpop.f32.mrb[0].mxu0
      %v2281 = vadd.f32 %v2041, %v2280
      %v2282 = vpop.f32.mrb[0].mxu0
      %2283 = vmatprep.mubr.f32.mxu0 0.0
      %2284 = vmatmul.mubr.f32.gmra.mrb[0].mxu0 %v2090
      %v2285 = vpop.f32.mrb[0].mxu0
      %v2286 = vadd.f32 %v2041, %v2285
      %v2287 = vpop.f32.mrb[0].mxu0
      %2288 = vmatprep.mubr.f32.mxu0 0.0
      %2289 = vmatmul.mubr.f32.gmra.mrb[0].mxu0 %v2093
      %v2290 = vpop.f32.mrb[0].mxu0
      %v2291 = vadd.f32 %v2041, %v2290
      %v2292 = vpop.f32.mrb[0].mxu0
      %2293 = vmatprep.mubr.f32.mxu0 0.0
      %2294 = vmatmul.mubr.f32.gmra.mrb[0].mxu0 %v2096
      %v2295 = vpop.f32.mrb[0].mxu0
      %v2296 = vadd.f32 %v2041, %v2295
      %v2297 = vpop.f32.mrb[0].mxu0
      %2298 = vmatprep.mubr.f32.mxu0 0.0
      %2299 = vmatmul.mubr.f32.gmra.mrb[0].mxu0 %v2099
      %v2300 = vpop.f32.mrb[0].mxu0
      %v2301 = vadd.f32 %v2041, %v2300
      %v2302 = vpop.f32.mrb[0].mxu0
      %2303 = vmatprep.mubr.f32.mxu0 0.0
      %2304 = vmatmul.mubr.f32.gmra.mrb[0].mxu0 %v2102
      %v2305 = vpop.f32.mrb[0].mxu0
      %v2306 = vadd.f32 %v2041, %v2305
      %v2307 = vpop.f32.mrb[0].mxu0
      %2308 = vmatprep.mubr.f32.mxu0 0.0
      %2309 = vmatmul.mubr.f32.gmra.mrb[0].mxu0 %v2105
      %v2310 = vpop.f32.mrb[0].mxu0
      %v2311 = vadd.f32 %v2041, %v2310
      %v2312 = vpop.f32.mrb[0].mxu0
      %2313 = vmatprep.mubr.f32.mxu0 0.0
      %2314 = vmatmul.mubr.f32.gmra.mrb[0].mxu0 %v2108
      %v2315 = vpop.f32.mrb[0].mxu0
      %v2316 = vadd.f32 %v2041, %v2315
      %v2317 = vpop.f32.mrb[0].mxu0
      %2318 = vmatprep.mubr.f32.mxu0 0.0
      %2319 = vmatmul.mubr.f32.gmra.mrb[0].mxu0 %v2111
      %v2320 = vpop.f32.mrb[0].mxu0
      %v2321 = vadd.f32 %v2041, %v2320
      %v2322 = vpop.f32.mrb[0].mxu0
      %2323 = vmatprep.mubr.f32.mxu0 0.0
      %2324 = vmatmul.mubr.f32.gmra.mrb[0].mxu0 %v2114
      %v2325 = vpop.f32.mrb[0].mxu0
      %v2326 = vadd.f32 %v2041, %v2325
      %v2327 = vpop.f32.mrb[0].mxu0
      %2328 = vmatprep.mubr.f32.mxu0 0.0
      %2329 = vmatmul.mubr.f32.gmra.mrb[0].mxu0 %v2117
      %v2330 = vpop.f32.mrb[0].mxu0
      %v2331 = vadd.f32 %v2041, %v2330
      %v2332 = vpop.f32.mrb[0].mxu0
      %2333 = vmatprep.mubr.f32.mxu0 0.0
      %2334 = vmatmul.mubr.f32.gmra.mrb[0].mxu0 %v2120
      %v2335 = vpop.f32.mrb[0].mxu0
      %v2336 = vadd.f32 %v2041, %v2335
      %v2337 = vpop.f32.mrb[0].mxu0
      %2338 = vmatprep.mubr.f32.mxu0 0.0
      %2339 = vmatmul.mubr.f32.gmra.mrb[0].mxu0 %v2123
      %v2340 = vpop.f32.mrb[0].mxu0
      %v2341 = vadd.f32 %v2041, %v2340
      %v2342 = vpop.f32.mrb[0].mxu0
      %2343 = vmatprep.mubr.f32.mxu0 0.0
      %2344 = vmatmul.mubr.f32.gmra.mrb[0].mxu0 %v2126
      %v2345 = vpop.f32.mrb[0].mxu0
      %v2346 = vadd.f32 %v2041, %v2345
      %v2347 = vpop.f32.mrb[0].mxu0
      %2348 = vmatprep.mubr.f32.mxu0 0.0
      %2349 = vmatmul.mubr.f32.gmra.mrb[0].mxu0 %v2129
      %v2350 = vpop.f32.mrb[0].mxu0
      %v2351 = vadd.f32 %v2041, %v2350
      %v2352 = vpop.f32.mrb[0].mxu0
      %2353 = vmatprep.mubr.f32.mxu0 0.0
      %2354 = vmatmul.mubr.f32.gmra.mrb[0].mxu0 %v2132
      %v2355 = vpop.f32.mrb[0].mxu0
      %v2356 = vadd.f32 %v2041, %v2355
      %v2357 = vpop.f32.mrb[0].mxu0
      %2358 = vmatprep.mubr.f32.mxu0 0.0
      %2359 = vmatmul.mubr.f32.gmra.mrb[0].mxu0 %v2135
      %v2360 = vpop.f32.mrb[0].mxu0
      %v2361 = vadd.f32 %v2041, %v2360
      %v2362 = vpop.f32.mrb[0].mxu0
      %2363 = vmatprep.mubr.f32.mxu0 0.0
      %2364 = vmatmul.mubr.f32.gmra.mrb[0].mxu0 %v2138
      %v2365 = vpop.f32.mrb[0].mxu0
      %v2366 = vadd.f32 %v2041, %v2365
      %v2367 = vpop.f32.mrb[0].mxu0
      %2368 = vdwg.mxu0
      %v2369 = vmax.f32 %v2211, 0.0
      %v2370 = vmax.f32 %v2216, 0.0
      %v2371 = vmax.f32 %v2221, 0.0
      %v2372 = vmax.f32 %v2226, 0.0
      %v2373 = vmax.f32 %v2231, 0.0
      %v2374 = vmax.f32 %v2236, 0.0
      %v2375 = vmax.f32 %v2241, 0.0
      %v2376 = vmax.f32 %v2246, 0.0
      %v2377 = vmax.f32 %v2251, 0.0
      %v2378 = vmax.f32 %v2256, 0.0
      %v2379 = vmax.f32 %v2261, 0.0
      %v2380 = vmax.f32 %v2266, 0.0
      %v2381 = vmax.f32 %v2271, 0.0
      %v2382 = vmax.f32 %v2276, 0.0
      %v2383 = vmax.f32 %v2281, 0.0
      %v2384 = vmax.f32 %v2286, 0.0
      %v2385 = vmax.f32 %v2291, 0.0
      %v2386 = vmax.f32 %v2296, 0.0
      %v2387 = vmax.f32 %v2301, 0.0
      %v2388 = vmax.f32 %v2306, 0.0
      %v2389 = vmax.f32 %v2311, 0.0
      %v2390 = vmax.f32 %v2316, 0.0
      %v2391 = vmax.f32 %v2321, 0.0
      %v2392 = vmax.f32 %v2326, 0.0
      %v2393 = vmax.f32 %v2331, 0.0
      %v2394 = vmax.f32 %v2336, 0.0
      %v2395 = vmax.f32 %v2341, 0.0
      %v2396 = vmax.f32 %v2346, 0.0
      %v2397 = vmax.f32 %v2351, 0.0
      %v2398 = vmax.f32 %v2356, 0.0
      %v2399 = vmax.f32 %v2361, 0.0
      %v2400 = vmax.f32 %v2366, 0.0
      %s2401 = scalar_lea.vmem [#allocation3], 24
      %2402 = vst.msk [vmem:[%s2401 + $0x1] sm:$0xff] %vm335, %v2369
      %2403 = vst.msk [vmem:[%s2401 + $0x9] sm:$0xff] %vm335, %v2370
      %2404 = vst.msk [vmem:[%s2401 + $0x19] sm:$0xff] %vm335, %v2371
      %2405 = vst.msk [vmem:[%s2401 + $0x21] sm:$0xff] %vm335, %v2372
      %2406 = vst.msk [vmem:[%s2401 + $0x31] sm:$0xff] %vm335, %v2373
      %2407 = vst.msk [vmem:[%s2401 + $0x39] sm:$0xff] %vm335, %v2374
      %2408 = vst.msk [vmem:[%s2401 + $0x49] sm:$0xff] %vm335, %v2375
      %2409 = vst.msk [vmem:[%s2401 + $0x51] sm:$0xff] %vm335, %v2376
      %2410 = vst.msk [vmem:[%s2401 + $0x61] sm:$0xff] %vm335, %v2377
      %2411 = vst.msk [vmem:[%s2401 + $0x69] sm:$0xff] %vm335, %v2378
      %2412 = vst.msk [vmem:[%s2401 + $0x79] sm:$0xff] %vm335, %v2379
      %2413 = vst.msk [vmem:[%s2401 + $0x81] sm:$0xff] %vm335, %v2380
      %2414 = vst.msk [vmem:[%s2401 + $0x91] sm:$0xff] %vm335, %v2381
      %2415 = vst.msk [vmem:[%s2401 + $0x99] sm:$0xff] %vm335, %v2382
      %2416 = vst.msk [vmem:[%s2401 + $0xa9] sm:$0xff] %vm335, %v2383
      %2417 = vst.msk [vmem:[%s2401 + $0xb1] sm:$0xff] %vm335, %v2384
      %2418 = vst.msk [vmem:[%s2401 + $0xc1] sm:$0xff] %vm335, %v2385
      %2419 = vst.msk [vmem:[%s2401 + $0xc9] sm:$0xff] %vm335, %v2386
      %2420 = vst.msk [vmem:[%s2401 + $0xd9] sm:$0xff] %vm335, %v2387
      %2421 = vst.msk [vmem:[%s2401 + $0xe1] sm:$0xff] %vm335, %v2388
      %2422 = vst.msk [vmem:[%s2401 + $0xf1] sm:$0xff] %vm335, %v2389
      %2423 = vst.msk [vmem:[%s2401 + $0xf9] sm:$0xff] %vm335, %v2390
      %2424 = vst.msk [vmem:[%s2401 + $0x109] sm:$0xff] %vm335, %v2391
      %2425 = vst.msk [vmem:[%s2401 + $0x111] sm:$0xff] %vm335, %v2392
      %2426 = vst.msk [vmem:[%s2401 + $0x121] sm:$0xff] %vm335, %v2393
      %2427 = vst.msk [vmem:[%s2401 + $0x129] sm:$0xff] %vm335, %v2394
      %2428 = vst.msk [vmem:[%s2401 + $0x139] sm:$0xff] %vm335, %v2395
      %2429 = vst.msk [vmem:[%s2401 + $0x141] sm:$0xff] %vm335, %v2396
      %2430 = vst.msk [vmem:[%s2401 + $0x151] sm:$0xff] %vm335, %v2397
      %2431 = vst.msk [vmem:[%s2401 + $0x159] sm:$0xff] %vm335, %v2398
      %2432 = vst.msk [vmem:[%s2401 + $0x169] sm:$0xff] %vm335, %v2399
      %2433 = vst.msk [vmem:[%s2401 + $0x171] sm:$0xff] %vm335, %v2400
      %v2434 = vld [vmem:[#allocation3] sm:$0xff]
      %v2435 = vld [vmem:[#allocation3 + $0x8] sm:$0xff]
      %v2436 = vld [vmem:[#allocation3 + $0x18] sm:$0xff]
      %v2437 = vld [vmem:[#allocation3 + $0x20] sm:$0xff]
      %v2438 = vld [vmem:[#allocation3 + $0x30] sm:$0xff]
      %v2439 = vld [vmem:[#allocation3 + $0x38] sm:$0xff]
      %v2440 = vld [vmem:[#allocation3 + $0x48] sm:$0xff]
      %v2441 = vld [vmem:[#allocation3 + $0x50] sm:$0xff]
      %v2442 = vld [vmem:[#allocation3 + $0x60] sm:$0xff]
      %v2443 = vld [vmem:[#allocation3 + $0x68] sm:$0xff]
      %v2444 = vld [vmem:[#allocation3 + $0x78] sm:$0xff]
      %v2445 = vld [vmem:[#allocation3 + $0x80] sm:$0xff]
      %v2446 = vld [vmem:[#allocation3 + $0x90] sm:$0xff]
      %v2447 = vld [vmem:[#allocation3 + $0x98] sm:$0xff]
      %v2448 = vld [vmem:[#allocation3 + $0xa8] sm:$0xff]
      %v2449 = vld [vmem:[#allocation3 + $0xb0] sm:$0xff]
      %v2450 = vld [vmem:[#allocation3 + $0xc0] sm:$0xff]
      %v2451 = vld [vmem:[#allocation3 + $0xc8] sm:$0xff]
      %v2452 = vld [vmem:[#allocation3 + $0xd8] sm:$0xff]
      %v2453 = vld [vmem:[#allocation3 + $0xe0] sm:$0xff]
      %v2454 = vld [vmem:[#allocation3 + $0xf0] sm:$0xff]
      %v2455 = vld [vmem:[#allocation3 + $0xf8] sm:$0xff]
      %v2456 = vld [vmem:[#allocation3 + $0x108] sm:$0xff]
      %v2457 = vld [vmem:[#allocation3 + $0x110] sm:$0xff]
      %v2458 = vld [vmem:[#allocation3 + $0x120] sm:$0xff]
      %v2459 = vld [vmem:[#allocation3 + $0x128] sm:$0xff]
      %v2460 = vld [vmem:[#allocation3 + $0x138] sm:$0xff]
      %v2461 = vld [vmem:[#allocation3 + $0x140] sm:$0xff]
      %v2462 = vld [vmem:[#allocation3 + $0x150] sm:$0xff]
      %v2463 = vld [vmem:[#allocation3 + $0x158] sm:$0xff]
      %v2464 = vld [vmem:[#allocation3 + $0x168] sm:$0xff]
      %v2465 = vld [vmem:[#allocation3 + $0x170] sm:$0xff]
      %v2466 = vld [vmem:[#allocation3 + $0x1] sm:$0xff]
      %v2467 = vld [vmem:[#allocation3 + $0x9] sm:$0xff]
      %v2468 = vld [vmem:[#allocation3 + $0x19] sm:$0xff]
      %v2469 = vld [vmem:[#allocation3 + $0x21] sm:$0xff]
      %v2470 = vld [vmem:[#allocation3 + $0x31] sm:$0xff]
      %v2471 = vld [vmem:[#allocation3 + $0x39] sm:$0xff]
      %v2472 = vld [vmem:[#allocation3 + $0x49] sm:$0xff]
      %v2473 = vld [vmem:[#allocation3 + $0x51] sm:$0xff]
      %v2474 = vld [vmem:[#allocation3 + $0x61] sm:$0xff]
      %v2475 = vld [vmem:[#allocation3 + $0x69] sm:$0xff]
      %v2476 = vld [vmem:[#allocation3 + $0x79] sm:$0xff]
      %v2477 = vld [vmem:[#allocation3 + $0x81] sm:$0xff]
      %v2478 = vld [vmem:[#allocation3 + $0x91] sm:$0xff]
      %v2479 = vld [vmem:[#allocation3 + $0x99] sm:$0xff]
      %v2480 = vld [vmem:[#allocation3 + $0xa9] sm:$0xff]
      %v2481 = vld [vmem:[#allocation3 + $0xb1] sm:$0xff]
      %v2482 = vld [vmem:[#allocation3 + $0xc1] sm:$0xff]
      %v2483 = vld [vmem:[#allocation3 + $0xc9] sm:$0xff]
      %v2484 = vld [vmem:[#allocation3 + $0xd9] sm:$0xff]
      %v2485 = vld [vmem:[#allocation3 + $0xe1] sm:$0xff]
      %v2486 = vld [vmem:[#allocation3 + $0xf1] sm:$0xff]
      %v2487 = vld [vmem:[#allocation3 + $0xf9] sm:$0xff]
      %v2488 = vld [vmem:[#allocation3 + $0x109] sm:$0xff]
      %v2489 = vld [vmem:[#allocation3 + $0x111] sm:$0xff]
      %v2490 = vld [vmem:[#allocation3 + $0x121] sm:$0xff]
      %v2491 = vld [vmem:[#allocation3 + $0x129] sm:$0xff]
      %v2492 = vld [vmem:[#allocation3 + $0x139] sm:$0xff]
      %v2493 = vld [vmem:[#allocation3 + $0x141] sm:$0xff]
      %v2494 = vld [vmem:[#allocation3 + $0x151] sm:$0xff]
      %v2495 = vld [vmem:[#allocation3 + $0x159] sm:$0xff]
      %v2496 = vld [vmem:[#allocation3 + $0x169] sm:$0xff]
      %v2497 = vld [vmem:[#allocation3 + $0x171] sm:$0xff]
      %v2498 = vld [vmem:[#allocation3 + $0x2] sm:$0xff]
      %v2499 = vld [vmem:[#allocation3 + $0xa] sm:$0xff]
      %v2500 = vld [vmem:[#allocation3 + $0x1a] sm:$0xff]
      %v2501 = vld [vmem:[#allocation3 + $0x22] sm:$0xff]
      %v2502 = vld [vmem:[#allocation3 + $0x32] sm:$0xff]
      %v2503 = vld [vmem:[#allocation3 + $0x3a] sm:$0xff]
      %v2504 = vld [vmem:[#allocation3 + $0x4a] sm:$0xff]
      %v2505 = vld [vmem:[#allocation3 + $0x52] sm:$0xff]
      %v2506 = vld [vmem:[#allocation3 + $0x62] sm:$0xff]
      %v2507 = vld [vmem:[#allocation3 + $0x6a] sm:$0xff]
      %v2508 = vld [vmem:[#allocation3 + $0x7a] sm:$0xff]
      %v2509 = vld [vmem:[#allocation3 + $0x82] sm:$0xff]
      %v2510 = vld [vmem:[#allocation3 + $0x92] sm:$0xff]
      %v2511 = vld [vmem:[#allocation3 + $0x9a] sm:$0xff]
      %v2512 = vld [vmem:[#allocation3 + $0xaa] sm:$0xff]
      %v2513 = vld [vmem:[#allocation3 + $0xb2] sm:$0xff]
      %v2514 = vld [vmem:[#allocation3 + $0xc2] sm:$0xff]
      %v2515 = vld [vmem:[#allocation3 + $0xca] sm:$0xff]
      %v2516 = vld [vmem:[#allocation3 + $0xda] sm:$0xff]
      %v2517 = vld [vmem:[#allocation3 + $0xe2] sm:$0xff]
      %v2518 = vld [vmem:[#allocation3 + $0xf2] sm:$0xff]
      %v2519 = vld [vmem:[#allocation3 + $0xfa] sm:$0xff]
      %v2520 = vld [vmem:[#allocation3 + $0x10a] sm:$0xff]
      %v2521 = vld [vmem:[#allocation3 + $0x112] sm:$0xff]
      %v2522 = vld [vmem:[#allocation3 + $0x122] sm:$0xff]
      %v2523 = vld [vmem:[#allocation3 + $0x12a] sm:$0xff]
      %v2524 = vld [vmem:[#allocation3 + $0x13a] sm:$0xff]
      %v2525 = vld [vmem:[#allocation3 + $0x142] sm:$0xff]
      %v2526 = vld [vmem:[#allocation3 + $0x152] sm:$0xff]
      %v2527 = vld [vmem:[#allocation3 + $0x15a] sm:$0xff]
      %v2528 = vld [vmem:[#allocation3 + $0x16a] sm:$0xff]
      %v2529 = vld [vmem:[#allocation3 + $0x172] sm:$0xff]
      %v2530 = vld [vmem:[%s2401] sm:$0xff]
      %v2531 = vld [vmem:[%s2401 + $0x8] sm:$0xff]
      %v2532 = vld [vmem:[%s2401 + $0x18] sm:$0xff]
      %v2533 = vld [vmem:[%s2401 + $0x20] sm:$0xff]
      %v2534 = vld [vmem:[%s2401 + $0x30] sm:$0xff]
      %v2535 = vld [vmem:[%s2401 + $0x38] sm:$0xff]
      %v2536 = vld [vmem:[%s2401 + $0x48] sm:$0xff]
      %v2537 = vld [vmem:[%s2401 + $0x50] sm:$0xff]
      %v2538 = vld [vmem:[%s2401 + $0x60] sm:$0xff]
      %v2539 = vld [vmem:[%s2401 + $0x68] sm:$0xff]
      %v2540 = vld [vmem:[%s2401 + $0x78] sm:$0xff]
      %v2541 = vld [vmem:[%s2401 + $0x80] sm:$0xff]
      %v2542 = vld [vmem:[%s2401 + $0x90] sm:$0xff]
      %v2543 = vld [vmem:[%s2401 + $0x98] sm:$0xff]
      %v2544 = vld [vmem:[%s2401 + $0xa8] sm:$0xff]
      %v2545 = vld [vmem:[%s2401 + $0xb0] sm:$0xff]
      %v2546 = vld [vmem:[%s2401 + $0xc0] sm:$0xff]
      %v2547 = vld [vmem:[%s2401 + $0xc8] sm:$0xff]
      %v2548 = vld [vmem:[%s2401 + $0xd8] sm:$0xff]
      %v2549 = vld [vmem:[%s2401 + $0xe0] sm:$0xff]
      %v2550 = vld [vmem:[%s2401 + $0xf0] sm:$0xff]
      %v2551 = vld [vmem:[%s2401 + $0xf8] sm:$0xff]
      %v2552 = vld [vmem:[%s2401 + $0x108] sm:$0xff]
      %v2553 = vld [vmem:[%s2401 + $0x110] sm:$0xff]
      %v2554 = vld [vmem:[%s2401 + $0x120] sm:$0xff]
      %v2555 = vld [vmem:[%s2401 + $0x128] sm:$0xff]
      %v2556 = vld [vmem:[%s2401 + $0x138] sm:$0xff]
      %v2557 = vld [vmem:[%s2401 + $0x140] sm:$0xff]
      %v2558 = vld [vmem:[%s2401 + $0x150] sm:$0xff]
      %v2559 = vld [vmem:[%s2401 + $0x158] sm:$0xff]
      %v2560 = vld [vmem:[%s2401 + $0x168] sm:$0xff]
      %v2561 = vld [vmem:[%s2401 + $0x170] sm:$0xff]
      %v2562 = vld [vmem:[%s2401 + $0x1] sm:$0xff]
      %v2563 = vld [vmem:[%s2401 + $0x9] sm:$0xff]
      %v2564 = vld [vmem:[%s2401 + $0x19] sm:$0xff]
      %v2565 = vld [vmem:[%s2401 + $0x21] sm:$0xff]
      %v2566 = vld [vmem:[%s2401 + $0x31] sm:$0xff]
      %v2567 = vld [vmem:[%s2401 + $0x39] sm:$0xff]
      %v2568 = vld [vmem:[%s2401 + $0x49] sm:$0xff]
      %v2569 = vld [vmem:[%s2401 + $0x51] sm:$0xff]
      %v2570 = vld [vmem:[%s2401 + $0x61] sm:$0xff]
      %v2571 = vld [vmem:[%s2401 + $0x69] sm:$0xff]
      %v2572 = vld [vmem:[%s2401 + $0x79] sm:$0xff]
      %v2573 = vld [vmem:[%s2401 + $0x81] sm:$0xff]
      %v2574 = vld [vmem:[%s2401 + $0x91] sm:$0xff]
      %v2575 = vld [vmem:[%s2401 + $0x99] sm:$0xff]
      %v2576 = vld [vmem:[%s2401 + $0xa9] sm:$0xff]
      %v2577 = vld [vmem:[%s2401 + $0xb1] sm:$0xff]
      %v2578 = vld [vmem:[%s2401 + $0xc1] sm:$0xff]
      %v2579 = vld [vmem:[%s2401 + $0xc9] sm:$0xff]
      %v2580 = vld [vmem:[%s2401 + $0xd9] sm:$0xff]
      %v2581 = vld [vmem:[%s2401 + $0xe1] sm:$0xff]
      %v2582 = vld [vmem:[%s2401 + $0xf1] sm:$0xff]
      %v2583 = vld [vmem:[%s2401 + $0xf9] sm:$0xff]
      %v2584 = vld [vmem:[%s2401 + $0x109] sm:$0xff]
      %v2585 = vld [vmem:[%s2401 + $0x111] sm:$0xff]
      %v2586 = vld [vmem:[%s2401 + $0x121] sm:$0xff]
      %v2587 = vld [vmem:[%s2401 + $0x129] sm:$0xff]
      %v2588 = vld [vmem:[%s2401 + $0x139] sm:$0xff]
      %v2589 = vld [vmem:[%s2401 + $0x141] sm:$0xff]
      %v2590 = vld [vmem:[%s2401 + $0x151] sm:$0xff]
      %v2591 = vld [vmem:[%s2401 + $0x159] sm:$0xff]
      %v2592 = vld [vmem:[%s2401 + $0x169] sm:$0xff]
      %v2593 = vld [vmem:[%s2401 + $0x171] sm:$0xff]
      %v2594 = vld [vmem:[%s2401 + $0x2] sm:$0xff]
      %v2595 = vld [vmem:[%s2401 + $0xa] sm:$0xff]
      %v2596 = vld [vmem:[%s2401 + $0x1a] sm:$0xff]
      %v2597 = vld [vmem:[%s2401 + $0x22] sm:$0xff]
      %v2598 = vld [vmem:[%s2401 + $0x32] sm:$0xff]
      %v2599 = vld [vmem:[%s2401 + $0x3a] sm:$0xff]
      %v2600 = vld [vmem:[%s2401 + $0x4a] sm:$0xff]
      %v2601 = vld [vmem:[%s2401 + $0x52] sm:$0xff]
      %v2602 = vld [vmem:[%s2401 + $0x62] sm:$0xff]
      %v2603 = vld [vmem:[%s2401 + $0x6a] sm:$0xff]
      %v2604 = vld [vmem:[%s2401 + $0x7a] sm:$0xff]
      %v2605 = vld [vmem:[%s2401 + $0x82] sm:$0xff]
      %v2606 = vld [vmem:[%s2401 + $0x92] sm:$0xff]
      %v2607 = vld [vmem:[%s2401 + $0x9a] sm:$0xff]
      %v2608 = vld [vmem:[%s2401 + $0xaa] sm:$0xff]
      %v2609 = vld [vmem:[%s2401 + $0xb2] sm:$0xff]
      %v2610 = vld [vmem:[%s2401 + $0xc2] sm:$0xff]
      %v2611 = vld [vmem:[%s2401 + $0xca] sm:$0xff]
      %v2612 = vld [vmem:[%s2401 + $0xda] sm:$0xff]
      %v2613 = vld [vmem:[%s2401 + $0xe2] sm:$0xff]
      %v2614 = vld [vmem:[%s2401 + $0xf2] sm:$0xff]
      %v2615 = vld [vmem:[%s2401 + $0xfa] sm:$0xff]
      %v2616 = vld [vmem:[%s2401 + $0x10a] sm:$0xff]
      %v2617 = vld [vmem:[%s2401 + $0x112] sm:$0xff]
      %v2618 = vld [vmem:[%s2401 + $0x122] sm:$0xff]
      %v2619 = vld [vmem:[%s2401 + $0x12a] sm:$0xff]
      %v2620 = vld [vmem:[%s2401 + $0x13a] sm:$0xff]
      %v2621 = vld [vmem:[%s2401 + $0x142] sm:$0xff]
      %v2622 = vld [vmem:[%s2401 + $0x152] sm:$0xff]
      %v2623 = vld [vmem:[%s2401 + $0x15a] sm:$0xff]
      %v2624 = vld [vmem:[%s2401 + $0x16a] sm:$0xff]
      %v2625 = vld [vmem:[%s2401 + $0x172] sm:$0xff]
      %s2626 = scalar_lea.vmem [#allocation3], 48
      %v2627 = vld [vmem:[%s2626] sm:$0xff]
      %v2628 = vld [vmem:[%s2626 + $0x8] sm:$0xff]
      %v2629 = vld [vmem:[%s2626 + $0x18] sm:$0xff]
      %v2630 = vld [vmem:[%s2626 + $0x20] sm:$0xff]
      %v2631 = vld [vmem:[%s2626 + $0x30] sm:$0xff]
      %v2632 = vld [vmem:[%s2626 + $0x38] sm:$0xff]
      %v2633 = vld [vmem:[%s2626 + $0x48] sm:$0xff]
      %v2634 = vld [vmem:[%s2626 + $0x50] sm:$0xff]
      %v2635 = vld [vmem:[%s2626 + $0x60] sm:$0xff]
      %v2636 = vld [vmem:[%s2626 + $0x68] sm:$0xff]
      %v2637 = vld [vmem:[%s2626 + $0x78] sm:$0xff]
      %v2638 = vld [vmem:[%s2626 + $0x80] sm:$0xff]
      %v2639 = vld [vmem:[%s2626 + $0x90] sm:$0xff]
      %v2640 = vld [vmem:[%s2626 + $0x98] sm:$0xff]
      %v2641 = vld [vmem:[%s2626 + $0xa8] sm:$0xff]
      %v2642 = vld [vmem:[%s2626 + $0xb0] sm:$0xff]
      %v2643 = vld [vmem:[%s2626 + $0xc0] sm:$0xff]
      %v2644 = vld [vmem:[%s2626 + $0xc8] sm:$0xff]
      %v2645 = vld [vmem:[%s2626 + $0xd8] sm:$0xff]
      %v2646 = vld [vmem:[%s2626 + $0xe0] sm:$0xff]
      %v2647 = vld [vmem:[%s2626 + $0xf0] sm:$0xff]
      %v2648 = vld [vmem:[%s2626 + $0xf8] sm:$0xff]
      %v2649 = vld [vmem:[%s2626 + $0x108] sm:$0xff]
      %v2650 = vld [vmem:[%s2626 + $0x110] sm:$0xff]
      %v2651 = vld [vmem:[%s2626 + $0x120] sm:$0xff]
      %v2652 = vld [vmem:[%s2626 + $0x128] sm:$0xff]
      %v2653 = vld [vmem:[%s2626 + $0x138] sm:$0xff]
      %v2654 = vld [vmem:[%s2626 + $0x140] sm:$0xff]
      %v2655 = vld [vmem:[%s2626 + $0x150] sm:$0xff]
      %v2656 = vld [vmem:[%s2626 + $0x158] sm:$0xff]
      %v2657 = vld [vmem:[%s2626 + $0x168] sm:$0xff]
      %v2658 = vld [vmem:[%s2626 + $0x170] sm:$0xff]
      %v2659 = vld [vmem:[%s2626 + $0x1] sm:$0xff]
      %v2660 = vld [vmem:[%s2626 + $0x9] sm:$0xff]
      %v2661 = vld [vmem:[%s2626 + $0x19] sm:$0xff]
      %v2662 = vld [vmem:[%s2626 + $0x21] sm:$0xff]
      %v2663 = vld [vmem:[%s2626 + $0x31] sm:$0xff]
      %v2664 = vld [vmem:[%s2626 + $0x39] sm:$0xff]
      %v2665 = vld [vmem:[%s2626 + $0x49] sm:$0xff]
      %v2666 = vld [vmem:[%s2626 + $0x51] sm:$0xff]
      %v2667 = vld [vmem:[%s2626 + $0x61] sm:$0xff]
      %v2668 = vld [vmem:[%s2626 + $0x69] sm:$0xff]
      %v2669 = vld [vmem:[%s2626 + $0x79] sm:$0xff]
      %v2670 = vld [vmem:[%s2626 + $0x81] sm:$0xff]
      %v2671 = vld [vmem:[%s2626 + $0x91] sm:$0xff]
      %v2672 = vld [vmem:[%s2626 + $0x99] sm:$0xff]
      %v2673 = vld [vmem:[%s2626 + $0xa9] sm:$0xff]
      %v2674 = vld [vmem:[%s2626 + $0xb1] sm:$0xff]
      %v2675 = vld [vmem:[%s2626 + $0xc1] sm:$0xff]
      %v2676 = vld [vmem:[%s2626 + $0xc9] sm:$0xff]
      %v2677 = vld [vmem:[%s2626 + $0xd9] sm:$0xff]
      %v2678 = vld [vmem:[%s2626 + $0xe1] sm:$0xff]
      %v2679 = vld [vmem:[%s2626 + $0xf1] sm:$0xff]
      %v2680 = vld [vmem:[%s2626 + $0xf9] sm:$0xff]
      %v2681 = vld [vmem:[%s2626 + $0x109] sm:$0xff]
      %v2682 = vld [vmem:[%s2626 + $0x111] sm:$0xff]
      %v2683 = vld [vmem:[%s2626 + $0x121] sm:$0xff]
      %v2684 = vld [vmem:[%s2626 + $0x129] sm:$0xff]
      %v2685 = vld [vmem:[%s2626 + $0x139] sm:$0xff]
      %v2686 = vld [vmem:[%s2626 + $0x141] sm:$0xff]
      %v2687 = vld [vmem:[%s2626 + $0x151] sm:$0xff]
      %v2688 = vld [vmem:[%s2626 + $0x159] sm:$0xff]
      %v2689 = vld [vmem:[%s2626 + $0x169] sm:$0xff]
      %v2690 = vld [vmem:[%s2626 + $0x171] sm:$0xff]
      %v2691 = vld [vmem:[%s2626 + $0x2] sm:$0xff]
      %v2692 = vld [vmem:[%s2626 + $0xa] sm:$0xff]
      %v2693 = vld [vmem:[%s2626 + $0x1a] sm:$0xff]
      %v2694 = vld [vmem:[%s2626 + $0x22] sm:$0xff]
      %v2695 = vld [vmem:[%s2626 + $0x32] sm:$0xff]
      %v2696 = vld [vmem:[%s2626 + $0x3a] sm:$0xff]
      %v2697 = vld [vmem:[%s2626 + $0x4a] sm:$0xff]
      %v2698 = vld [vmem:[%s2626 + $0x52] sm:$0xff]
      %v2699 = vld [vmem:[%s2626 + $0x62] sm:$0xff]
      %v2700 = vld [vmem:[%s2626 + $0x6a] sm:$0xff]
      %v2701 = vld [vmem:[%s2626 + $0x7a] sm:$0xff]
      %v2702 = vld [vmem:[%s2626 + $0x82] sm:$0xff]
      %v2703 = vld [vmem:[%s2626 + $0x92] sm:$0xff]
      %v2704 = vld [vmem:[%s2626 + $0x9a] sm:$0xff]
      %v2705 = vld [vmem:[%s2626 + $0xaa] sm:$0xff]
      %v2706 = vld [vmem:[%s2626 + $0xb2] sm:$0xff]
      %v2707 = vld [vmem:[%s2626 + $0xc2] sm:$0xff]
      %v2708 = vld [vmem:[%s2626 + $0xca] sm:$0xff]
      %v2709 = vld [vmem:[%s2626 + $0xda] sm:$0xff]
      %v2710 = vld [vmem:[%s2626 + $0xe2] sm:$0xff]
      %v2711 = vld [vmem:[%s2626 + $0xf2] sm:$0xff]
      %v2712 = vld [vmem:[%s2626 + $0xfa] sm:$0xff]
      %v2713 = vld [vmem:[%s2626 + $0x10a] sm:$0xff]
      %v2714 = vld [vmem:[%s2626 + $0x112] sm:$0xff]
      %v2715 = vld [vmem:[%s2626 + $0x122] sm:$0xff]
      %v2716 = vld [vmem:[%s2626 + $0x12a] sm:$0xff]
      %v2717 = vld [vmem:[%s2626 + $0x13a] sm:$0xff]
      %v2718 = vld [vmem:[%s2626 + $0x142] sm:$0xff]
      %v2719 = vld [vmem:[%s2626 + $0x152] sm:$0xff]
      %v2720 = vld [vmem:[%s2626 + $0x15a] sm:$0xff]
      %v2721 = vld [vmem:[%s2626 + $0x16a] sm:$0xff]
      %v2722 = vld [vmem:[%s2626 + $0x172] sm:$0xff]
      %2755 = vrot.lane.b32.xlu0 %v2466, 32
      %v2756 = vpop.permute.xlu0 %2755
      %2757 = vrot.lane.b32.xlu0 %v2467, 32
      %v2758 = vpop.permute.xlu0 %2757
      %2759 = vrot.lane.b32.xlu0 %v2468, 32
      %v2760 = vpop.permute.xlu0 %2759
      %2761 = vrot.lane.b32.xlu0 %v2469, 32
      %v2762 = vpop.permute.xlu0 %2761
      %2763 = vrot.lane.b32.xlu0 %v2470, 32
      %v2764 = vpop.permute.xlu0 %2763
      %2765 = vrot.lane.b32.xlu0 %v2471, 32
      %v2766 = vpop.permute.xlu0 %2765
      %2767 = vrot.lane.b32.xlu0 %v2472, 32
      %v2768 = vpop.permute.xlu0 %2767
      %2769 = vrot.lane.b32.xlu0 %v2473, 32
      %v2770 = vpop.permute.xlu0 %2769
      %2771 = vrot.lane.b32.xlu0 %v2474, 32
      %v2772 = vpop.permute.xlu0 %2771
      %2773 = vrot.lane.b32.xlu0 %v2475, 32
      %v2774 = vpop.permute.xlu0 %2773
      %2775 = vrot.lane.b32.xlu0 %v2476, 32
      %v2776 = vpop.permute.xlu0 %2775
      %2777 = vrot.lane.b32.xlu0 %v2477, 32
      %v2778 = vpop.permute.xlu0 %2777
      %2779 = vrot.lane.b32.xlu0 %v2478, 32
      %v2780 = vpop.permute.xlu0 %2779
      %2781 = vrot.lane.b32.xlu0 %v2479, 32
      %v2782 = vpop.permute.xlu0 %2781
      %2783 = vrot.lane.b32.xlu0 %v2480, 32
      %v2784 = vpop.permute.xlu0 %2783
      %2785 = vrot.lane.b32.xlu0 %v2481, 32
      %v2786 = vpop.permute.xlu0 %2785
      %2787 = vrot.lane.b32.xlu0 %v2482, 32
      %v2788 = vpop.permute.xlu0 %2787
      %2789 = vrot.lane.b32.xlu0 %v2483, 32
      %v2790 = vpop.permute.xlu0 %2789
      %2791 = vrot.lane.b32.xlu0 %v2484, 32
      %v2792 = vpop.permute.xlu0 %2791
      %2793 = vrot.lane.b32.xlu0 %v2485, 32
      %v2794 = vpop.permute.xlu0 %2793
      %2795 = vrot.lane.b32.xlu0 %v2486, 32
      %v2796 = vpop.permute.xlu0 %2795
      %2797 = vrot.lane.b32.xlu0 %v2487, 32
      %v2798 = vpop.permute.xlu0 %2797
      %2799 = vrot.lane.b32.xlu0 %v2488, 32
      %v2800 = vpop.permute.xlu0 %2799
      %2801 = vrot.lane.b32.xlu0 %v2489, 32
      %v2802 = vpop.permute.xlu0 %2801
      %2803 = vrot.lane.b32.xlu0 %v2490, 32
      %v2804 = vpop.permute.xlu0 %2803
      %2805 = vrot.lane.b32.xlu0 %v2491, 32
      %v2806 = vpop.permute.xlu0 %2805
      %2807 = vrot.lane.b32.xlu0 %v2492, 32
      %v2808 = vpop.permute.xlu0 %2807
      %2809 = vrot.lane.b32.xlu0 %v2493, 32
      %v2810 = vpop.permute.xlu0 %2809
      %2811 = vrot.lane.b32.xlu0 %v2494, 32
      %v2812 = vpop.permute.xlu0 %2811
      %2813 = vrot.lane.b32.xlu0 %v2495, 32
      %v2814 = vpop.permute.xlu0 %2813
      %2815 = vrot.lane.b32.xlu0 %v2496, 32
      %v2816 = vpop.permute.xlu0 %2815
      %2817 = vrot.lane.b32.xlu0 %v2497, 32
      %v2818 = vpop.permute.xlu0 %2817
      %2883 = vrot.lane.b32.xlu0 %v2498, 64
      %v2884 = vpop.permute.xlu0 %2883
      %2885 = vrot.lane.b32.xlu0 %v2499, 64
      %v2886 = vpop.permute.xlu0 %2885
      %2887 = vrot.lane.b32.xlu0 %v2500, 64
      %v2888 = vpop.permute.xlu0 %2887
      %2889 = vrot.lane.b32.xlu0 %v2501, 64
      %v2890 = vpop.permute.xlu0 %2889
      %2891 = vrot.lane.b32.xlu0 %v2502, 64
      %v2892 = vpop.permute.xlu0 %2891
      %2893 = vrot.lane.b32.xlu0 %v2503, 64
      %v2894 = vpop.permute.xlu0 %2893
      %2895 = vrot.lane.b32.xlu0 %v2504, 64
      %v2896 = vpop.permute.xlu0 %2895
      %2897 = vrot.lane.b32.xlu0 %v2505, 64
      %v2898 = vpop.permute.xlu0 %2897
      %2899 = vrot.lane.b32.xlu0 %v2506, 64
      %v2900 = vpop.permute.xlu0 %2899
      %2901 = vrot.lane.b32.xlu0 %v2507, 64
      %v2902 = vpop.permute.xlu0 %2901
      %2903 = vrot.lane.b32.xlu0 %v2508, 64
      %v2904 = vpop.permute.xlu0 %2903
      %2905 = vrot.lane.b32.xlu0 %v2509, 64
      %v2906 = vpop.permute.xlu0 %2905
      %2907 = vrot.lane.b32.xlu0 %v2510, 64
      %v2908 = vpop.permute.xlu0 %2907
      %2909 = vrot.lane.b32.xlu0 %v2511, 64
      %v2910 = vpop.permute.xlu0 %2909
      %2911 = vrot.lane.b32.xlu0 %v2512, 64
      %v2912 = vpop.permute.xlu0 %2911
      %2913 = vrot.lane.b32.xlu0 %v2513, 64
      %v2914 = vpop.permute.xlu0 %2913
      %2915 = vrot.lane.b32.xlu0 %v2514, 64
      %v2916 = vpop.permute.xlu0 %2915
      %2917 = vrot.lane.b32.xlu0 %v2515, 64
      %v2918 = vpop.permute.xlu0 %2917
      %2919 = vrot.lane.b32.xlu0 %v2516, 64
      %v2920 = vpop.permute.xlu0 %2919
      %2921 = vrot.lane.b32.xlu0 %v2517, 64
      %v2922 = vpop.permute.xlu0 %2921
      %2923 = vrot.lane.b32.xlu0 %v2518, 64
      %v2924 = vpop.permute.xlu0 %2923
      %2925 = vrot.lane.b32.xlu0 %v2519, 64
      %v2926 = vpop.permute.xlu0 %2925
      %2927 = vrot.lane.b32.xlu0 %v2520, 64
      %v2928 = vpop.permute.xlu0 %2927
      %2929 = vrot.lane.b32.xlu0 %v2521, 64
      %v2930 = vpop.permute.xlu0 %2929
      %2931 = vrot.lane.b32.xlu0 %v2522, 64
      %v2932 = vpop.permute.xlu0 %2931
      %2933 = vrot.lane.b32.xlu0 %v2523, 64
      %v2934 = vpop.permute.xlu0 %2933
      %2935 = vrot.lane.b32.xlu0 %v2524, 64
      %v2936 = vpop.permute.xlu0 %2935
      %2937 = vrot.lane.b32.xlu0 %v2525, 64
      %v2938 = vpop.permute.xlu0 %2937
      %2939 = vrot.lane.b32.xlu0 %v2526, 64
      %v2940 = vpop.permute.xlu0 %2939
      %2941 = vrot.lane.b32.xlu0 %v2527, 64
      %v2942 = vpop.permute.xlu0 %2941
      %2943 = vrot.lane.b32.xlu0 %v2528, 64
      %v2944 = vpop.permute.xlu0 %2943
      %2945 = vrot.lane.b32.xlu0 %v2529, 64
      %v2946 = vpop.permute.xlu0 %2945
      %3011 = vrot.lane.b32.xlu0 %v2530, 96
      %v3012 = vpop.permute.xlu0 %3011
      %3013 = vrot.lane.b32.xlu0 %v2531, 96
      %v3014 = vpop.permute.xlu0 %3013
      %3015 = vrot.lane.b32.xlu0 %v2532, 96
      %v3016 = vpop.permute.xlu0 %3015
      %3017 = vrot.lane.b32.xlu0 %v2533, 96
      %v3018 = vpop.permute.xlu0 %3017
      %3019 = vrot.lane.b32.xlu0 %v2534, 96
      %v3020 = vpop.permute.xlu0 %3019
      %3021 = vrot.lane.b32.xlu0 %v2535, 96
      %v3022 = vpop.permute.xlu0 %3021
      %3023 = vrot.lane.b32.xlu0 %v2536, 96
      %v3024 = vpop.permute.xlu0 %3023
      %3025 = vrot.lane.b32.xlu0 %v2537, 96
      %v3026 = vpop.permute.xlu0 %3025
      %3027 = vrot.lane.b32.xlu0 %v2538, 96
      %v3028 = vpop.permute.xlu0 %3027
      %3029 = vrot.lane.b32.xlu0 %v2539, 96
      %v3030 = vpop.permute.xlu0 %3029
      %3031 = vrot.lane.b32.xlu0 %v2540, 96
      %v3032 = vpop.permute.xlu0 %3031
      %3033 = vrot.lane.b32.xlu0 %v2541, 96
      %v3034 = vpop.permute.xlu0 %3033
      %3035 = vrot.lane.b32.xlu0 %v2542, 96
      %v3036 = vpop.permute.xlu0 %3035
      %3037 = vrot.lane.b32.xlu0 %v2543, 96
      %v3038 = vpop.permute.xlu0 %3037
      %3039 = vrot.lane.b32.xlu0 %v2544, 96
      %v3040 = vpop.permute.xlu0 %3039
      %3041 = vrot.lane.b32.xlu0 %v2545, 96
      %v3042 = vpop.permute.xlu0 %3041
      %3043 = vrot.lane.b32.xlu0 %v2546, 96
      %v3044 = vpop.permute.xlu0 %3043
      %3045 = vrot.lane.b32.xlu0 %v2547, 96
      %v3046 = vpop.permute.xlu0 %3045
      %3047 = vrot.lane.b32.xlu0 %v2548, 96
      %v3048 = vpop.permute.xlu0 %3047
      %3049 = vrot.lane.b32.xlu0 %v2549, 96
      %v3050 = vpop.permute.xlu0 %3049
      %3051 = vrot.lane.b32.xlu0 %v2550, 96
      %v3052 = vpop.permute.xlu0 %3051
      %3053 = vrot.lane.b32.xlu0 %v2551, 96
      %v3054 = vpop.permute.xlu0 %3053
      %3055 = vrot.lane.b32.xlu0 %v2552, 96
      %v3056 = vpop.permute.xlu0 %3055
      %3057 = vrot.lane.b32.xlu0 %v2553, 96
      %v3058 = vpop.permute.xlu0 %3057
      %3059 = vrot.lane.b32.xlu0 %v2554, 96
      %v3060 = vpop.permute.xlu0 %3059
      %3061 = vrot.lane.b32.xlu0 %v2555, 96
      %v3062 = vpop.permute.xlu0 %3061
      %3063 = vrot.lane.b32.xlu0 %v2556, 96
      %v3064 = vpop.permute.xlu0 %3063
      %3065 = vrot.lane.b32.xlu0 %v2557, 96
      %v3066 = vpop.permute.xlu0 %3065
      %3067 = vrot.lane.b32.xlu0 %v2558, 96
      %v3068 = vpop.permute.xlu0 %3067
      %3069 = vrot.lane.b32.xlu0 %v2559, 96
      %v3070 = vpop.permute.xlu0 %3069
      %3071 = vrot.lane.b32.xlu0 %v2560, 96
      %v3072 = vpop.permute.xlu0 %3071
      %3073 = vrot.lane.b32.xlu0 %v2561, 96
      %v3074 = vpop.permute.xlu0 %3073
      %3139 = vrot.lane.b32.xlu0 %v2594, 32
      %v3140 = vpop.permute.xlu0 %3139
      %3141 = vrot.lane.b32.xlu0 %v2595, 32
      %v3142 = vpop.permute.xlu0 %3141
      %3143 = vrot.lane.b32.xlu0 %v2596, 32
      %v3144 = vpop.permute.xlu0 %3143
      %3145 = vrot.lane.b32.xlu0 %v2597, 32
      %v3146 = vpop.permute.xlu0 %3145
      %3147 = vrot.lane.b32.xlu0 %v2598, 32
      %v3148 = vpop.permute.xlu0 %3147
      %3149 = vrot.lane.b32.xlu0 %v2599, 32
      %v3150 = vpop.permute.xlu0 %3149
      %3151 = vrot.lane.b32.xlu0 %v2600, 32
      %v3152 = vpop.permute.xlu0 %3151
      %3153 = vrot.lane.b32.xlu0 %v2601, 32
      %v3154 = vpop.permute.xlu0 %3153
      %3155 = vrot.lane.b32.xlu0 %v2602, 32
      %v3156 = vpop.permute.xlu0 %3155
      %3157 = vrot.lane.b32.xlu0 %v2603, 32
      %v3158 = vpop.permute.xlu0 %3157
      %3159 = vrot.lane.b32.xlu0 %v2604, 32
      %v3160 = vpop.permute.xlu0 %3159
      %3161 = vrot.lane.b32.xlu0 %v2605, 32
      %v3162 = vpop.permute.xlu0 %3161
      %3163 = vrot.lane.b32.xlu0 %v2606, 32
      %v3164 = vpop.permute.xlu0 %3163
      %3165 = vrot.lane.b32.xlu0 %v2607, 32
      %v3166 = vpop.permute.xlu0 %3165
      %3167 = vrot.lane.b32.xlu0 %v2608, 32
      %v3168 = vpop.permute.xlu0 %3167
      %3169 = vrot.lane.b32.xlu0 %v2609, 32
      %v3170 = vpop.permute.xlu0 %3169
      %3171 = vrot.lane.b32.xlu0 %v2610, 32
      %v3172 = vpop.permute.xlu0 %3171
      %3173 = vrot.lane.b32.xlu0 %v2611, 32
      %v3174 = vpop.permute.xlu0 %3173
      %3175 = vrot.lane.b32.xlu0 %v2612, 32
      %v3176 = vpop.permute.xlu0 %3175
      %3177 = vrot.lane.b32.xlu0 %v2613, 32
      %v3178 = vpop.permute.xlu0 %3177
      %3179 = vrot.lane.b32.xlu0 %v2614, 32
      %v3180 = vpop.permute.xlu0 %3179
      %3181 = vrot.lane.b32.xlu0 %v2615, 32
      %v3182 = vpop.permute.xlu0 %3181
      %3183 = vrot.lane.b32.xlu0 %v2616, 32
      %v3184 = vpop.permute.xlu0 %3183
      %3185 = vrot.lane.b32.xlu0 %v2617, 32
      %v3186 = vpop.permute.xlu0 %3185
      %3187 = vrot.lane.b32.xlu0 %v2618, 32
      %v3188 = vpop.permute.xlu0 %3187
      %3189 = vrot.lane.b32.xlu0 %v2619, 32
      %v3190 = vpop.permute.xlu0 %3189
      %3191 = vrot.lane.b32.xlu0 %v2620, 32
      %v3192 = vpop.permute.xlu0 %3191
      %3193 = vrot.lane.b32.xlu0 %v2621, 32
      %v3194 = vpop.permute.xlu0 %3193
      %3195 = vrot.lane.b32.xlu0 %v2622, 32
      %v3196 = vpop.permute.xlu0 %3195
      %3197 = vrot.lane.b32.xlu0 %v2623, 32
      %v3198 = vpop.permute.xlu0 %3197
      %3199 = vrot.lane.b32.xlu0 %v2624, 32
      %v3200 = vpop.permute.xlu0 %3199
      %3201 = vrot.lane.b32.xlu0 %v2625, 32
      %v3202 = vpop.permute.xlu0 %3201
      %3267 = vrot.lane.b32.xlu0 %v2627, 64
      %v3268 = vpop.permute.xlu0 %3267
      %3269 = vrot.lane.b32.xlu0 %v2628, 64
      %v3270 = vpop.permute.xlu0 %3269
      %3271 = vrot.lane.b32.xlu0 %v2629, 64
      %v3272 = vpop.permute.xlu0 %3271
      %3273 = vrot.lane.b32.xlu0 %v2630, 64
      %v3274 = vpop.permute.xlu0 %3273
      %3275 = vrot.lane.b32.xlu0 %v2631, 64
      %v3276 = vpop.permute.xlu0 %3275
      %3277 = vrot.lane.b32.xlu0 %v2632, 64
      %v3278 = vpop.permute.xlu0 %3277
      %3279 = vrot.lane.b32.xlu0 %v2633, 64
      %v3280 = vpop.permute.xlu0 %3279
      %3281 = vrot.lane.b32.xlu0 %v2634, 64
      %v3282 = vpop.permute.xlu0 %3281
      %3283 = vrot.lane.b32.xlu0 %v2635, 64
      %v3284 = vpop.permute.xlu0 %3283
      %3285 = vrot.lane.b32.xlu0 %v2636, 64
      %v3286 = vpop.permute.xlu0 %3285
      %3287 = vrot.lane.b32.xlu0 %v2637, 64
      %v3288 = vpop.permute.xlu0 %3287
      %3289 = vrot.lane.b32.xlu0 %v2638, 64
      %v3290 = vpop.permute.xlu0 %3289
      %3291 = vrot.lane.b32.xlu0 %v2639, 64
      %v3292 = vpop.permute.xlu0 %3291
      %3293 = vrot.lane.b32.xlu0 %v2640, 64
      %v3294 = vpop.permute.xlu0 %3293
      %3295 = vrot.lane.b32.xlu0 %v2641, 64
      %v3296 = vpop.permute.xlu0 %3295
      %3297 = vrot.lane.b32.xlu0 %v2642, 64
      %v3298 = vpop.permute.xlu0 %3297
      %3299 = vrot.lane.b32.xlu0 %v2643, 64
      %v3300 = vpop.permute.xlu0 %3299
      %3301 = vrot.lane.b32.xlu0 %v2644, 64
      %v3302 = vpop.permute.xlu0 %3301
      %3303 = vrot.lane.b32.xlu0 %v2645, 64
      %v3304 = vpop.permute.xlu0 %3303
      %3305 = vrot.lane.b32.xlu0 %v2646, 64
      %v3306 = vpop.permute.xlu0 %3305
      %3307 = vrot.lane.b32.xlu0 %v2647, 64
      %v3308 = vpop.permute.xlu0 %3307
      %3309 = vrot.lane.b32.xlu0 %v2648, 64
      %v3310 = vpop.permute.xlu0 %3309
      %3311 = vrot.lane.b32.xlu0 %v2649, 64
      %v3312 = vpop.permute.xlu0 %3311
      %3313 = vrot.lane.b32.xlu0 %v2650, 64
      %v3314 = vpop.permute.xlu0 %3313
      %3315 = vrot.lane.b32.xlu0 %v2651, 64
      %v3316 = vpop.permute.xlu0 %3315
      %3317 = vrot.lane.b32.xlu0 %v2652, 64
      %v3318 = vpop.permute.xlu0 %3317
      %3319 = vrot.lane.b32.xlu0 %v2653, 64
      %v3320 = vpop.permute.xlu0 %3319
      %3321 = vrot.lane.b32.xlu0 %v2654, 64
      %v3322 = vpop.permute.xlu0 %3321
      %3323 = vrot.lane.b32.xlu0 %v2655, 64
      %v3324 = vpop.permute.xlu0 %3323
      %3325 = vrot.lane.b32.xlu0 %v2656, 64
      %v3326 = vpop.permute.xlu0 %3325
      %3327 = vrot.lane.b32.xlu0 %v2657, 64
      %v3328 = vpop.permute.xlu0 %3327
      %3329 = vrot.lane.b32.xlu0 %v2658, 64
      %v3330 = vpop.permute.xlu0 %3329
      %3395 = vrot.lane.b32.xlu0 %v2659, 96
      %v3396 = vpop.permute.xlu0 %3395
      %3397 = vrot.lane.b32.xlu0 %v2660, 96
      %v3398 = vpop.permute.xlu0 %3397
      %3399 = vrot.lane.b32.xlu0 %v2661, 96
      %v3400 = vpop.permute.xlu0 %3399
      %3401 = vrot.lane.b32.xlu0 %v2662, 96
      %v3402 = vpop.permute.xlu0 %3401
      %3403 = vrot.lane.b32.xlu0 %v2663, 96
      %v3404 = vpop.permute.xlu0 %3403
      %3405 = vrot.lane.b32.xlu0 %v2664, 96
      %v3406 = vpop.permute.xlu0 %3405
      %3407 = vrot.lane.b32.xlu0 %v2665, 96
      %v3408 = vpop.permute.xlu0 %3407
      %3409 = vrot.lane.b32.xlu0 %v2666, 96
      %v3410 = vpop.permute.xlu0 %3409
      %3411 = vrot.lane.b32.xlu0 %v2667, 96
      %v3412 = vpop.permute.xlu0 %3411
      %3413 = vrot.lane.b32.xlu0 %v2668, 96
      %v3414 = vpop.permute.xlu0 %3413
      %3415 = vrot.lane.b32.xlu0 %v2669, 96
      %v3416 = vpop.permute.xlu0 %3415
      %3417 = vrot.lane.b32.xlu0 %v2670, 96
      %v3418 = vpop.permute.xlu0 %3417
      %3419 = vrot.lane.b32.xlu0 %v2671, 96
      %v3420 = vpop.permute.xlu0 %3419
      %3421 = vrot.lane.b32.xlu0 %v2672, 96
      %v3422 = vpop.permute.xlu0 %3421
      %3423 = vrot.lane.b32.xlu0 %v2673, 96
      %v3424 = vpop.permute.xlu0 %3423
      %3425 = vrot.lane.b32.xlu0 %v2674, 96
      %v3426 = vpop.permute.xlu0 %3425
      %3427 = vrot.lane.b32.xlu0 %v2675, 96
      %v3428 = vpop.permute.xlu0 %3427
      %3429 = vrot.lane.b32.xlu0 %v2676, 96
      %v3430 = vpop.permute.xlu0 %3429
      %3431 = vrot.lane.b32.xlu0 %v2677, 96
      %v3432 = vpop.permute.xlu0 %3431
      %3433 = vrot.lane.b32.xlu0 %v2678, 96
      %v3434 = vpop.permute.xlu0 %3433
      %3435 = vrot.lane.b32.xlu0 %v2679, 96
      %v3436 = vpop.permute.xlu0 %3435
      %3437 = vrot.lane.b32.xlu0 %v2680, 96
      %v3438 = vpop.permute.xlu0 %3437
      %3439 = vrot.lane.b32.xlu0 %v2681, 96
      %v3440 = vpop.permute.xlu0 %3439
      %3441 = vrot.lane.b32.xlu0 %v2682, 96
      %v3442 = vpop.permute.xlu0 %3441
      %3443 = vrot.lane.b32.xlu0 %v2683, 96
      %v3444 = vpop.permute.xlu0 %3443
      %3445 = vrot.lane.b32.xlu0 %v2684, 96
      %v3446 = vpop.permute.xlu0 %3445
      %3447 = vrot.lane.b32.xlu0 %v2685, 96
      %v3448 = vpop.permute.xlu0 %3447
      %3449 = vrot.lane.b32.xlu0 %v2686, 96
      %v3450 = vpop.permute.xlu0 %3449
      %3451 = vrot.lane.b32.xlu0 %v2687, 96
      %v3452 = vpop.permute.xlu0 %3451
      %3453 = vrot.lane.b32.xlu0 %v2688, 96
      %v3454 = vpop.permute.xlu0 %3453
      %3455 = vrot.lane.b32.xlu0 %v2689, 96
      %v3456 = vpop.permute.xlu0 %3455
      %3457 = vrot.lane.b32.xlu0 %v2690, 96
      %v3458 = vpop.permute.xlu0 %3457
      %v3491 = vsel %vm335, %v2434, %v2756
      %v3492 = vsel %vm335, %v2435, %v2758
      %v3493 = vsel %vm335, %v2436, %v2760
      %v3494 = vsel %vm335, %v2437, %v2762
      %v3495 = vsel %vm335, %v2438, %v2764
      %v3496 = vsel %vm335, %v2439, %v2766
      %v3497 = vsel %vm335, %v2440, %v2768
      %v3498 = vsel %vm335, %v2441, %v2770
      %v3499 = vsel %vm335, %v2442, %v2772
      %v3500 = vsel %vm335, %v2443, %v2774
      %v3501 = vsel %vm335, %v2444, %v2776
      %v3502 = vsel %vm335, %v2445, %v2778
      %v3503 = vsel %vm335, %v2446, %v2780
      %v3504 = vsel %vm335, %v2447, %v2782
      %v3505 = vsel %vm335, %v2448, %v2784
      %v3506 = vsel %vm335, %v2449, %v2786
      %v3507 = vsel %vm335, %v2450, %v2788
      %v3508 = vsel %vm335, %v2451, %v2790
      %v3509 = vsel %vm335, %v2452, %v2792
      %v3510 = vsel %vm335, %v2453, %v2794
      %v3511 = vsel %vm335, %v2454, %v2796
      %v3512 = vsel %vm335, %v2455, %v2798
      %v3513 = vsel %vm335, %v2456, %v2800
      %v3514 = vsel %vm335, %v2457, %v2802
      %v3515 = vsel %vm335, %v2458, %v2804
      %v3516 = vsel %vm335, %v2459, %v2806
      %v3517 = vsel %vm335, %v2460, %v2808
      %v3518 = vsel %vm335, %v2461, %v2810
      %v3519 = vsel %vm335, %v2462, %v2812
      %v3520 = vsel %vm335, %v2463, %v2814
      %v3521 = vsel %vm335, %v2464, %v2816
      %v3522 = vsel %vm335, %v2465, %v2818
      %vm3523 = vcmask 523264
      %v3524 = vsel %vm3523, %v3491, %v2884
      %v3525 = vsel %vm3523, %v3492, %v2886
      %v3526 = vsel %vm3523, %v3493, %v2888
      %v3527 = vsel %vm3523, %v3494, %v2890
      %v3528 = vsel %vm3523, %v3495, %v2892
      %v3529 = vsel %vm3523, %v3496, %v2894
      %v3530 = vsel %vm3523, %v3497, %v2896
      %v3531 = vsel %vm3523, %v3498, %v2898
      %v3532 = vsel %vm3523, %v3499, %v2900
      %v3533 = vsel %vm3523, %v3500, %v2902
      %v3534 = vsel %vm3523, %v3501, %v2904
      %v3535 = vsel %vm3523, %v3502, %v2906
      %v3536 = vsel %vm3523, %v3503, %v2908
      %v3537 = vsel %vm3523, %v3504, %v2910
      %v3538 = vsel %vm3523, %v3505, %v2912
      %v3539 = vsel %vm3523, %v3506, %v2914
      %v3540 = vsel %vm3523, %v3507, %v2916
      %v3541 = vsel %vm3523, %v3508, %v2918
      %v3542 = vsel %vm3523, %v3509, %v2920
      %v3543 = vsel %vm3523, %v3510, %v2922
      %v3544 = vsel %vm3523, %v3511, %v2924
      %v3545 = vsel %vm3523, %v3512, %v2926
      %v3546 = vsel %vm3523, %v3513, %v2928
      %v3547 = vsel %vm3523, %v3514, %v2930
      %v3548 = vsel %vm3523, %v3515, %v2932
      %v3549 = vsel %vm3523, %v3516, %v2934
      %v3550 = vsel %vm3523, %v3517, %v2936
      %v3551 = vsel %vm3523, %v3518, %v2938
      %v3552 = vsel %vm3523, %v3519, %v2940
      %v3553 = vsel %vm3523, %v3520, %v2942
      %v3554 = vsel %vm3523, %v3521, %v2944
      %v3555 = vsel %vm3523, %v3522, %v2946
      %vm3556 = vcmask 785408
      %v3557 = vsel %vm3556, %v3524, %v3012
      %v3558 = vsel %vm3556, %v3525, %v3014
      %v3559 = vsel %vm3556, %v3526, %v3016
      %v3560 = vsel %vm3556, %v3527, %v3018
      %v3561 = vsel %vm3556, %v3528, %v3020
      %v3562 = vsel %vm3556, %v3529, %v3022
      %v3563 = vsel %vm3556, %v3530, %v3024
      %v3564 = vsel %vm3556, %v3531, %v3026
      %v3565 = vsel %vm3556, %v3532, %v3028
      %v3566 = vsel %vm3556, %v3533, %v3030
      %v3567 = vsel %vm3556, %v3534, %v3032
      %v3568 = vsel %vm3556, %v3535, %v3034
      %v3569 = vsel %vm3556, %v3536, %v3036
      %v3570 = vsel %vm3556, %v3537, %v3038
      %v3571 = vsel %vm3556, %v3538, %v3040
      %v3572 = vsel %vm3556, %v3539, %v3042
      %v3573 = vsel %vm3556, %v3540, %v3044
      %v3574 = vsel %vm3556, %v3541, %v3046
      %v3575 = vsel %vm3556, %v3542, %v3048
      %v3576 = vsel %vm3556, %v3543, %v3050
      %v3577 = vsel %vm3556, %v3544, %v3052
      %v3578 = vsel %vm3556, %v3545, %v3054
      %v3579 = vsel %vm3556, %v3546, %v3056
      %v3580 = vsel %vm3556, %v3547, %v3058
      %v3581 = vsel %vm3556, %v3548, %v3060
      %v3582 = vsel %vm3556, %v3549, %v3062
      %v3583 = vsel %vm3556, %v3550, %v3064
      %v3584 = vsel %vm3556, %v3551, %v3066
      %v3585 = vsel %vm3556, %v3552, %v3068
      %v3586 = vsel %vm3556, %v3553, %v3070
      %v3587 = vsel %vm3556, %v3554, %v3072
      %v3588 = vsel %vm3556, %v3555, %v3074
      %v3589 = vsel %vm335, %v2562, %v3140
      %v3590 = vsel %vm335, %v2563, %v3142
      %v3591 = vsel %vm335, %v2564, %v3144
      %v3592 = vsel %vm335, %v2565, %v3146
      %v3593 = vsel %vm335, %v2566, %v3148
      %v3594 = vsel %vm335, %v2567, %v3150
      %v3595 = vsel %vm335, %v2568, %v3152
      %v3596 = vsel %vm335, %v2569, %v3154
      %v3597 = vsel %vm335, %v2570, %v3156
      %v3598 = vsel %vm335, %v2571, %v3158
      %v3599 = vsel %vm335, %v2572, %v3160
      %v3600 = vsel %vm335, %v2573, %v3162
      %v3601 = vsel %vm335, %v2574, %v3164
      %v3602 = vsel %vm335, %v2575, %v3166
      %v3603 = vsel %vm335, %v2576, %v3168
      %v3604 = vsel %vm335, %v2577, %v3170
      %v3605 = vsel %vm335, %v2578, %v3172
      %v3606 = vsel %vm335, %v2579, %v3174
      %v3607 = vsel %vm335, %v2580, %v3176
      %v3608 = vsel %vm335, %v2581, %v3178
      %v3609 = vsel %vm335, %v2582, %v3180
      %v3610 = vsel %vm335, %v2583, %v3182
      %v3611 = vsel %vm335, %v2584, %v3184
      %v3612 = vsel %vm335, %v2585, %v3186
      %v3613 = vsel %vm335, %v2586, %v3188
      %v3614 = vsel %vm335, %v2587, %v3190
      %v3615 = vsel %vm335, %v2588, %v3192
      %v3616 = vsel %vm335, %v2589, %v3194
      %v3617 = vsel %vm335, %v2590, %v3196
      %v3618 = vsel %vm335, %v2591, %v3198
      %v3619 = vsel %vm335, %v2592, %v3200
      %v3620 = vsel %vm335, %v2593, %v3202
      %v3621 = vsel %vm3523, %v3589, %v3268
      %v3622 = vsel %vm3523, %v3590, %v3270
      %v3623 = vsel %vm3523, %v3591, %v3272
      %v3624 = vsel %vm3523, %v3592, %v3274
      %v3625 = vsel %vm3523, %v3593, %v3276
      %v3626 = vsel %vm3523, %v3594, %v3278
      %v3627 = vsel %vm3523, %v3595, %v3280
      %v3628 = vsel %vm3523, %v3596, %v3282
      %v3629 = vsel %vm3523, %v3597, %v3284
      %v3630 = vsel %vm3523, %v3598, %v3286
      %v3631 = vsel %vm3523, %v3599, %v3288
      %v3632 = vsel %vm3523, %v3600, %v3290
      %v3633 = vsel %vm3523, %v3601, %v3292
      %v3634 = vsel %vm3523, %v3602, %v3294
      %v3635 = vsel %vm3523, %v3603, %v3296
      %v3636 = vsel %vm3523, %v3604, %v3298
      %v3637 = vsel %vm3523, %v3605, %v3300
      %v3638 = vsel %vm3523, %v3606, %v3302
      %v3639 = vsel %vm3523, %v3607, %v3304
      %v3640 = vsel %vm3523, %v3608, %v3306
      %v3641 = vsel %vm3523, %v3609, %v3308
      %v3642 = vsel %vm3523, %v3610, %v3310
      %v3643 = vsel %vm3523, %v3611, %v3312
      %v3644 = vsel %vm3523, %v3612, %v3314
      %v3645 = vsel %vm3523, %v3613, %v3316
      %v3646 = vsel %vm3523, %v3614, %v3318
      %v3647 = vsel %vm3523, %v3615, %v3320
      %v3648 = vsel %vm3523, %v3616, %v3322
      %v3649 = vsel %vm3523, %v3617, %v3324
      %v3650 = vsel %vm3523, %v3618, %v3326
      %v3651 = vsel %vm3523, %v3619, %v3328
      %v3652 = vsel %vm3523, %v3620, %v3330
      %v3653 = vsel %vm3556, %v3621, %v3396
      %v3654 = vsel %vm3556, %v3622, %v3398
      %v3655 = vsel %vm3556, %v3623, %v3400
      %v3656 = vsel %vm3556, %v3624, %v3402
      %v3657 = vsel %vm3556, %v3625, %v3404
      %v3658 = vsel %vm3556, %v3626, %v3406
      %v3659 = vsel %vm3556, %v3627, %v3408
      %v3660 = vsel %vm3556, %v3628, %v3410
      %v3661 = vsel %vm3556, %v3629, %v3412
      %v3662 = vsel %vm3556, %v3630, %v3414
      %v3663 = vsel %vm3556, %v3631, %v3416
      %v3664 = vsel %vm3556, %v3632, %v3418
      %v3665 = vsel %vm3556, %v3633, %v3420
      %v3666 = vsel %vm3556, %v3634, %v3422
      %v3667 = vsel %vm3556, %v3635, %v3424
      %v3668 = vsel %vm3556, %v3636, %v3426
      %v3669 = vsel %vm3556, %v3637, %v3428
      %v3670 = vsel %vm3556, %v3638, %v3430
      %v3671 = vsel %vm3556, %v3639, %v3432
      %v3672 = vsel %vm3556, %v3640, %v3434
      %v3673 = vsel %vm3556, %v3641, %v3436
      %v3674 = vsel %vm3556, %v3642, %v3438
      %v3675 = vsel %vm3556, %v3643, %v3440
      %v3676 = vsel %vm3556, %v3644, %v3442
      %v3677 = vsel %vm3556, %v3645, %v3444
      %v3678 = vsel %vm3556, %v3646, %v3446
      %v3679 = vsel %vm3556, %v3647, %v3448
      %v3680 = vsel %vm3556, %v3648, %v3450
      %v3681 = vsel %vm3556, %v3649, %v3452
      %v3682 = vsel %vm3556, %v3650, %v3454
      %v3683 = vsel %vm3556, %v3651, %v3456
      %v3684 = vsel %vm3556, %v3652, %v3458
      %v3685 = vld [vmem:[%s3] sm:$0xff]
      %v3686 = vld [vmem:[%s3 + $0x8] sm:$0xff]
      %v3687 = vld [vmem:[%s3 + $0x10] sm:$0xff]
      %v3688 = vld [vmem:[%s3 + $0x18] sm:$0xff]
      %v3689 = vld [vmem:[%s3 + $0x20] sm:$0xff]
      %v3690 = vld [vmem:[%s3 + $0x28] sm:$0xff]
      %v3691 = vld [vmem:[%s3 + $0x30] sm:$0xff]
      %v3692 = vld [vmem:[%s3 + $0x38] sm:$0xff]
      %v3693 = vld [vmem:[%s3 + $0x40] sm:$0xff]
      %v3694 = vld [vmem:[%s3 + $0x48] sm:$0xff]
      %v3695 = vld [vmem:[%s3 + $0x50] sm:$0xff]
      %v3696 = vld [vmem:[%s3 + $0x58] sm:$0xff]
      %v3697 = vld [vmem:[%s3 + $0x60] sm:$0xff]
      %v3698 = vld [vmem:[%s3 + $0x68] sm:$0xff]
      %v3699 = vld [vmem:[%s3 + $0x70] sm:$0xff]
      %v3700 = vld [vmem:[%s3 + $0x78] sm:$0xff]
      %v3701 = vld [vmem:[%s3 + $0x80] sm:$0xff]
      %v3702 = vld [vmem:[%s3 + $0x88] sm:$0xff]
      %v3703 = vld [vmem:[%s3 + $0x90] sm:$0xff]
      %v3704 = vld [vmem:[%s3 + $0x98] sm:$0xff]
      %v3705 = vld [vmem:[%s3 + $0xa0] sm:$0xff]
      %v3706 = vld [vmem:[%s3 + $0xa8] sm:$0xff]
      %v3707 = vld [vmem:[%s3 + $0xb0] sm:$0xff]
      %v3708 = vld [vmem:[%s3 + $0xb8] sm:$0xff]
      %v3709 = vld [vmem:[%s3 + $0xc0] sm:$0xff]
      %v3710 = vld [vmem:[%s3 + $0xc8] sm:$0xff]
      %v3711 = vld [vmem:[%s3 + $0xd0] sm:$0xff]
      %v3712 = vld [vmem:[%s3 + $0xd8] sm:$0xff]
      %v3713 = vld [vmem:[%s3 + $0xe0] sm:$0xff]
      %v3714 = vld [vmem:[%s3 + $0xe8] sm:$0xff]
      %v3715 = vld [vmem:[%s3 + $0xf0] sm:$0xff]
      %v3716 = vld [vmem:[%s3 + $0xf8] sm:$0xff]
      %v3717 = vld [vmem:[%s3 + $0x100] sm:$0xff]
      %v3718 = vld [vmem:[%s3 + $0x108] sm:$0xff]
      %v3719 = vld [vmem:[%s3 + $0x110] sm:$0xff]
      %v3720 = vld [vmem:[%s3 + $0x118] sm:$0xff]
      %v3721 = vld [vmem:[%s4] sm:$0x1]
      %v3723 = vlaneseq
      %v3724 = vshrl.u32 %v3723, 7
      %v3725 = vsub.s32 0, %v3724
      %v3726 = vrot.slane %v3721, %v3725
      %v3729 = vsel %vm335, %v2691, 0
      %v3732 = vsel %vm335, %v2692, 0
      %v3735 = vsel %vm335, %v2693, 0
      %v3738 = vsel %vm335, %v2694, 0
      %v3741 = vsel %vm335, %v2695, 0
      %v3744 = vsel %vm335, %v2696, 0
      %v3747 = vsel %vm335, %v2697, 0
      %v3750 = vsel %vm335, %v2698, 0
      %v3753 = vsel %vm335, %v2699, 0
      %v3756 = vsel %vm335, %v2700, 0
      %v3759 = vsel %vm335, %v2701, 0
      %v3762 = vsel %vm335, %v2702, 0
      %v3765 = vsel %vm335, %v2703, 0
      %v3768 = vsel %vm335, %v2704, 0
      %v3771 = vsel %vm335, %v2705, 0
      %v3774 = vsel %vm335, %v2706, 0
      %v3777 = vsel %vm335, %v2707, 0
      %v3780 = vsel %vm335, %v2708, 0
      %v3783 = vsel %vm335, %v2709, 0
      %v3786 = vsel %vm335, %v2710, 0
      %v3789 = vsel %vm335, %v2711, 0
      %v3792 = vsel %vm335, %v2712, 0
      %v3795 = vsel %vm335, %v2713, 0
      %v3798 = vsel %vm335, %v2714, 0
      %v3801 = vsel %vm335, %v2715, 0
      %v3804 = vsel %vm335, %v2716, 0
      %v3807 = vsel %vm335, %v2717, 0
      %v3810 = vsel %vm335, %v2718, 0
      %v3813 = vsel %vm335, %v2719, 0
      %v3816 = vsel %vm335, %v2720, 0
      %v3819 = vsel %vm335, %v2721, 0
      %v3822 = vsel %vm335, %v2722, 0
      %3824 = vmatprep.subr.mxu0 0.0
      %3825 = vmatpush1.msra.mxu0 %v3685
      %3826 = vmatprep.subr.mxu0 0.0
      %3827 = vmatpush1.msra.mxu0 %v3686
      %3828 = vmatprep.subr.mxu0 0.0
      %3829 = vmatpush1.msra.mxu0 %v3687
      %3830 = vmatprep.subr.mxu0 0.0
      %3831 = vmatpush1.msra.mxu0 %v3688
      %3832 = vmatprep.subr.mxu0 0.0
      %3833 = vmatpush1.msra.mxu0 %v3689
      %3834 = vmatprep.subr.mxu0 0.0
      %3835 = vmatpush1.msra.mxu0 %v3690
      %3836 = vmatprep.subr.mxu0 0.0
      %3837 = vmatpush1.msra.mxu0 %v3691
      %3838 = vmatprep.subr.mxu0 0.0
      %3839 = vmatpush1.msra.mxu0 %v3692
      %3840 = vmatprep.subr.mxu0 0.0
      %3841 = vmatpush1.msra.mxu0 %v3693
      %3842 = vmatprep.subr.mxu0 0.0
      %3843 = vmatpush1.msra.mxu0 %v3694
      %3844 = vmatprep.subr.mxu0 0.0
      %3845 = vmatpush1.msra.mxu0 %v3695
      %3846 = vmatprep.subr.mxu0 0.0
      %3847 = vmatpush1.msra.mxu0 %v3696
      %3848 = vmatprep.subr.mxu0 0.0
      %3849 = vmatpush1.msra.mxu0 %v3697
      %3850 = vmatprep.subr.mxu0 0.0
      %3851 = vmatpush1.msra.mxu0 %v3698
      %3852 = vmatprep.subr.mxu0 0.0
      %3853 = vmatpush1.msra.mxu0 %v3699
      %3854 = vmatprep.subr.mxu0 0.0
      %3855 = vmatpush1.msra.mxu0 %v3700
      %3856 = vmatprep.subr.mxu0 0.0
      %3857 = vmatpush1.msra.mxu0 %v3701
      %3858 = vmatprep.subr.mxu0 0.0
      %3859 = vmatpush1.msra.mxu0 %v3702
      %3860 = vmatprep.subr.mxu0 0.0
      %3861 = vmatpush1.msra.mxu0 %v3703
      %3862 = vmatprep.subr.mxu0 0.0
      %3863 = vmatpush1.msra.mxu0 %v3704
      %3864 = vmatprep.subr.mxu0 0.0
      %3865 = vmatpush1.msra.mxu0 %v3705
      %3866 = vmatprep.subr.mxu0 0.0
      %3867 = vmatpush1.msra.mxu0 %v3706
      %3868 = vmatprep.subr.mxu0 0.0
      %3869 = vmatpush1.msra.mxu0 %v3707
      %3870 = vmatprep.subr.mxu0 0.0
      %3871 = vmatpush1.msra.mxu0 %v3708
      %3872 = vmatprep.subr.mxu0 0.0
      %3873 = vmatpush1.msra.mxu0 %v3709
      %3874 = vmatprep.subr.mxu0 0.0
      %3875 = vmatpush1.msra.mxu0 %v3710
      %3876 = vmatprep.subr.mxu0 0.0
      %3877 = vmatpush1.msra.mxu0 %v3711
      %3878 = vmatprep.subr.mxu0 0.0
      %3879 = vmatpush1.msra.mxu0 %v3712
      %3880 = vmatprep.subr.mxu0 0.0
      %3881 = vmatpush1.msra.mxu0 %v3713
      %3882 = vmatprep.subr.mxu0 0.0
      %3883 = vmatpush1.msra.mxu0 %v3714
      %3884 = vmatprep.subr.mxu0 0.0
      %3885 = vmatpush1.msra.mxu0 %v3715
      %3886 = vmatprep.subr.mxu0 0.0
      %3887 = vmatpush1.msra.mxu0 %v3716
      %3888 = vmatprep.mubr.f32.mxu0 %v3653
      %3889 = vmatmul.mubr.f32.gmra.mrb[0].mxu0 %v3557
      %v3890 = vpop.f32.mrb[0].mxu0
      %v3891 = vadd.f32 %v3726, %v3890
      %v3892 = vpop.f32.mrb[0].mxu0
      %3893 = vmatprep.mubr.f32.mxu0 %v3654
      %3894 = vmatmul.mubr.f32.gmra.mrb[0].mxu0 %v3558
      %v3895 = vpop.f32.mrb[0].mxu0
      %v3896 = vadd.f32 %v3726, %v3895
      %v3897 = vpop.f32.mrb[0].mxu0
      %3898 = vmatprep.mubr.f32.mxu0 %v3655
      %3899 = vmatmul.mubr.f32.gmra.mrb[0].mxu0 %v3559
      %v3900 = vpop.f32.mrb[0].mxu0
      %v3901 = vadd.f32 %v3726, %v3900
      %v3902 = vpop.f32.mrb[0].mxu0
      %3903 = vmatprep.mubr.f32.mxu0 %v3656
      %3904 = vmatmul.mubr.f32.gmra.mrb[0].mxu0 %v3560
      %v3905 = vpop.f32.mrb[0].mxu0
      %v3906 = vadd.f32 %v3726, %v3905
      %v3907 = vpop.f32.mrb[0].mxu0
      %3908 = vmatprep.mubr.f32.mxu0 %v3657
      %3909 = vmatmul.mubr.f32.gmra.mrb[0].mxu0 %v3561
      %v3910 = vpop.f32.mrb[0].mxu0
      %v3911 = vadd.f32 %v3726, %v3910
      %v3912 = vpop.f32.mrb[0].mxu0
      %3913 = vmatprep.mubr.f32.mxu0 %v3658
      %3914 = vmatmul.mubr.f32.gmra.mrb[0].mxu0 %v3562
      %v3915 = vpop.f32.mrb[0].mxu0
      %v3916 = vadd.f32 %v3726, %v3915
      %v3917 = vpop.f32.mrb[0].mxu0
      %3918 = vmatprep.mubr.f32.mxu0 %v3659
      %3919 = vmatmul.mubr.f32.gmra.mrb[0].mxu0 %v3563
      %v3920 = vpop.f32.mrb[0].mxu0
      %v3921 = vadd.f32 %v3726, %v3920
      %v3922 = vpop.f32.mrb[0].mxu0
      %3923 = vmatprep.mubr.f32.mxu0 %v3660
      %3924 = vmatmul.mubr.f32.gmra.mrb[0].mxu0 %v3564
      %v3925 = vpop.f32.mrb[0].mxu0
      %v3926 = vadd.f32 %v3726, %v3925
      %v3927 = vpop.f32.mrb[0].mxu0
      %3928 = vmatprep.mubr.f32.mxu0 %v3661
      %3929 = vmatmul.mubr.f32.gmra.mrb[0].mxu0 %v3565
      %v3930 = vpop.f32.mrb[0].mxu0
      %v3931 = vadd.f32 %v3726, %v3930
      %v3932 = vpop.f32.mrb[0].mxu0
      %3933 = vmatprep.mubr.f32.mxu0 %v3662
      %3934 = vmatmul.mubr.f32.gmra.mrb[0].mxu0 %v3566
      %v3935 = vpop.f32.mrb[0].mxu0
      %v3936 = vadd.f32 %v3726, %v3935
      %v3937 = vpop.f32.mrb[0].mxu0
      %3938 = vmatprep.mubr.f32.mxu0 %v3663
      %3939 = vmatmul.mubr.f32.gmra.mrb[0].mxu0 %v3567
      %v3940 = vpop.f32.mrb[0].mxu0
      %v3941 = vadd.f32 %v3726, %v3940
      %v3942 = vpop.f32.mrb[0].mxu0
      %3943 = vmatprep.mubr.f32.mxu0 %v3664
      %3944 = vmatmul.mubr.f32.gmra.mrb[0].mxu0 %v3568
      %v3945 = vpop.f32.mrb[0].mxu0
      %v3946 = vadd.f32 %v3726, %v3945
      %v3947 = vpop.f32.mrb[0].mxu0
      %3948 = vmatprep.mubr.f32.mxu0 %v3665
      %3949 = vmatmul.mubr.f32.gmra.mrb[0].mxu0 %v3569
      %v3950 = vpop.f32.mrb[0].mxu0
      %v3951 = vadd.f32 %v3726, %v3950
      %v3952 = vpop.f32.mrb[0].mxu0
      %3953 = vmatprep.mubr.f32.mxu0 %v3666
      %3954 = vmatmul.mubr.f32.gmra.mrb[0].mxu0 %v3570
      %v3955 = vpop.f32.mrb[0].mxu0
      %v3956 = vadd.f32 %v3726, %v3955
      %v3957 = vpop.f32.mrb[0].mxu0
      %3958 = vmatprep.mubr.f32.mxu0 %v3667
      %3959 = vmatmul.mubr.f32.gmra.mrb[0].mxu0 %v3571
      %v3960 = vpop.f32.mrb[0].mxu0
      %v3961 = vadd.f32 %v3726, %v3960
      %v3962 = vpop.f32.mrb[0].mxu0
      %3963 = vmatprep.mubr.f32.mxu0 %v3668
      %3964 = vmatmul.mubr.f32.gmra.mrb[0].mxu0 %v3572
      %v3965 = vpop.f32.mrb[0].mxu0
      %v3966 = vadd.f32 %v3726, %v3965
      %v3967 = vpop.f32.mrb[0].mxu0
      %3968 = vmatprep.mubr.f32.mxu0 %v3669
      %3969 = vmatmul.mubr.f32.gmra.mrb[0].mxu0 %v3573
      %v3970 = vpop.f32.mrb[0].mxu0
      %v3971 = vadd.f32 %v3726, %v3970
      %v3972 = vpop.f32.mrb[0].mxu0
      %3973 = vmatprep.mubr.f32.mxu0 %v3670
      %3974 = vmatmul.mubr.f32.gmra.mrb[0].mxu0 %v3574
      %v3975 = vpop.f32.mrb[0].mxu0
      %v3976 = vadd.f32 %v3726, %v3975
      %v3977 = vpop.f32.mrb[0].mxu0
      %3978 = vmatprep.mubr.f32.mxu0 %v3671
      %3979 = vmatmul.mubr.f32.gmra.mrb[0].mxu0 %v3575
      %v3980 = vpop.f32.mrb[0].mxu0
      %v3981 = vadd.f32 %v3726, %v3980
      %v3982 = vpop.f32.mrb[0].mxu0
      %3983 = vmatprep.mubr.f32.mxu0 %v3672
      %3984 = vmatmul.mubr.f32.gmra.mrb[0].mxu0 %v3576
      %v3985 = vpop.f32.mrb[0].mxu0
      %v3986 = vadd.f32 %v3726, %v3985
      %v3987 = vpop.f32.mrb[0].mxu0
      %3988 = vmatprep.mubr.f32.mxu0 %v3673
      %3989 = vmatmul.mubr.f32.gmra.mrb[0].mxu0 %v3577
      %v3990 = vpop.f32.mrb[0].mxu0
      %v3991 = vadd.f32 %v3726, %v3990
      %v3992 = vpop.f32.mrb[0].mxu0
      %3993 = vmatprep.mubr.f32.mxu0 %v3674
      %3994 = vmatmul.mubr.f32.gmra.mrb[0].mxu0 %v3578
      %v3995 = vpop.f32.mrb[0].mxu0
      %v3996 = vadd.f32 %v3726, %v3995
      %v3997 = vpop.f32.mrb[0].mxu0
      %3998 = vmatprep.mubr.f32.mxu0 %v3675
      %3999 = vmatmul.mubr.f32.gmra.mrb[0].mxu0 %v3579
      %v4000 = vpop.f32.mrb[0].mxu0
      %v4001 = vadd.f32 %v3726, %v4000
      %v4002 = vpop.f32.mrb[0].mxu0
      %4003 = vmatprep.mubr.f32.mxu0 %v3676
      %4004 = vmatmul.mubr.f32.gmra.mrb[0].mxu0 %v3580
      %v4005 = vpop.f32.mrb[0].mxu0
      %v4006 = vadd.f32 %v3726, %v4005
      %v4007 = vpop.f32.mrb[0].mxu0
      %4008 = vmatprep.mubr.f32.mxu0 %v3677
      %4009 = vmatmul.mubr.f32.gmra.mrb[0].mxu0 %v3581
      %v4010 = vpop.f32.mrb[0].mxu0
      %v4011 = vadd.f32 %v3726, %v4010
      %v4012 = vpop.f32.mrb[0].mxu0
      %4013 = vmatprep.mubr.f32.mxu0 %v3678
      %4014 = vmatmul.mubr.f32.gmra.mrb[0].mxu0 %v3582
      %v4015 = vpop.f32.mrb[0].mxu0
      %v4016 = vadd.f32 %v3726, %v4015
      %v4017 = vpop.f32.mrb[0].mxu0
      %4018 = vmatprep.mubr.f32.mxu0 %v3679
      %4019 = vmatmul.mubr.f32.gmra.mrb[0].mxu0 %v3583
      %v4020 = vpop.f32.mrb[0].mxu0
      %v4021 = vadd.f32 %v3726, %v4020
      %v4022 = vpop.f32.mrb[0].mxu0
      %4023 = vmatprep.mubr.f32.mxu0 %v3680
      %4024 = vmatmul.mubr.f32.gmra.mrb[0].mxu0 %v3584
      %v4025 = vpop.f32.mrb[0].mxu0
      %v4026 = vadd.f32 %v3726, %v4025
      %v4027 = vpop.f32.mrb[0].mxu0
      %4028 = vmatprep.mubr.f32.mxu0 %v3681
      %4029 = vmatmul.mubr.f32.gmra.mrb[0].mxu0 %v3585
      %v4030 = vpop.f32.mrb[0].mxu0
      %v4031 = vadd.f32 %v3726, %v4030
      %v4032 = vpop.f32.mrb[0].mxu0
      %4033 = vmatprep.mubr.f32.mxu0 %v3682
      %4034 = vmatmul.mubr.f32.gmra.mrb[0].mxu0 %v3586
      %v4035 = vpop.f32.mrb[0].mxu0
      %v4036 = vadd.f32 %v3726, %v4035
      %v4037 = vpop.f32.mrb[0].mxu0
      %4038 = vmatprep.mubr.f32.mxu0 %v3683
      %4039 = vmatmul.mubr.f32.gmra.mrb[0].mxu0 %v3587
      %v4040 = vpop.f32.mrb[0].mxu0
      %v4041 = vadd.f32 %v3726, %v4040
      %v4042 = vpop.f32.mrb[0].mxu0
      %4043 = vmatprep.mubr.f32.mxu0 %v3684
      %4044 = vmatmul.mubr.f32.gmra.mrb[0].mxu0 %v3588
      %v4045 = vpop.f32.mrb[0].mxu0
      %v4046 = vadd.f32 %v3726, %v4045
      %v4047 = vpop.f32.mrb[0].mxu0
      %4048 = vdwg.mxu0
      %4049 = vmatprep.subr.mxu0 0.0
      %4050 = vmatpush1.msra.mxu0 %v3717
      %4051 = vmatprep.subr.mxu0 0.0
      %4052 = vmatpush1.msra.mxu0 %v3718
      %4053 = vmatprep.subr.mxu0 0.0
      %4054 = vmatpush1.msra.mxu0 %v3719
      %4055 = vmatprep.subr.mxu0 0.0
      %4056 = vmatpush1.msra.mxu0 %v3720
      %4057 = vmatprep.subr.mxu0 0.0
      %4058 = vmatpush1.msra.mxu0 0.0
      %4059 = vmatprep.subr.mxu0 0.0
      %4060 = vmatpush1.msra.mxu0 0.0
      %4061 = vmatprep.subr.mxu0 0.0
      %4062 = vmatpush1.msra.mxu0 0.0
      %4063 = vmatprep.subr.mxu0 0.0
      %4064 = vmatpush1.msra.mxu0 0.0
      %4065 = vmatprep.subr.mxu0 0.0
      %4066 = vmatpush1.msra.mxu0 0.0
      %4067 = vmatprep.subr.mxu0 0.0
      %4068 = vmatpush1.msra.mxu0 0.0
      %4069 = vmatprep.subr.mxu0 0.0
      %4070 = vmatpush1.msra.mxu0 0.0
      %4071 = vmatprep.subr.mxu0 0.0
      %4072 = vmatpush1.msra.mxu0 0.0
      %4073 = vmatprep.subr.mxu0 0.0
      %4074 = vmatpush1.msra.mxu0 0.0
      %4075 = vmatprep.subr.mxu0 0.0
      %4076 = vmatpush1.msra.mxu0 0.0
      %4077 = vmatprep.subr.mxu0 0.0
      %4078 = vmatpush1.msra.mxu0 0.0
      %4079 = vmatprep.subr.mxu0 0.0
      %4080 = vmatpush1.msra.mxu0 0.0
      %4081 = vmatprep.subr.mxu0 0.0
      %4082 = vmatpush1.msra.mxu0 0.0
      %4083 = vmatprep.subr.mxu0 0.0
      %4084 = vmatpush1.msra.mxu0 0.0
      %4085 = vmatprep.subr.mxu0 0.0
      %4086 = vmatpush1.msra.mxu0 0.0
      %4087 = vmatprep.subr.mxu0 0.0
      %4088 = vmatpush1.msra.mxu0 0.0
      %4089 = vmatprep.subr.mxu0 0.0
      %4090 = vmatpush1.msra.mxu0 0.0
      %4091 = vmatprep.subr.mxu0 0.0
      %4092 = vmatpush1.msra.mxu0 0.0
      %4093 = vmatprep.subr.mxu0 0.0
      %4094 = vmatpush1.msra.mxu0 0.0
      %4095 = vmatprep.subr.mxu0 0.0
      %4096 = vmatpush1.msra.mxu0 0.0
      %4097 = vmatprep.subr.mxu0 0.0
      %4098 = vmatpush1.msra.mxu0 0.0
      %4099 = vmatprep.subr.mxu0 0.0
      %4100 = vmatpush1.msra.mxu0 0.0
      %4101 = vmatprep.subr.mxu0 0.0
      %4102 = vmatpush1.msra.mxu0 0.0
      %4103 = vmatprep.subr.mxu0 0.0
      %4104 = vmatpush1.msra.mxu0 0.0
      %4105 = vmatprep.subr.mxu0 0.0
      %4106 = vmatpush1.msra.mxu0 0.0
      %4107 = vmatprep.subr.mxu0 0.0
      %4108 = vmatpush1.msra.mxu0 0.0
      %4109 = vmatprep.subr.mxu0 0.0
      %4110 = vmatpush1.msra.mxu0 0.0
      %4111 = vmatprep.subr.mxu0 0.0
      %4112 = vmatpush1.msra.mxu0 0.0
      %4113 = vmatprep.mubr.f32.mxu0 0.0
      %4114 = vmatmul.mubr.f32.gmra.mrb[0].mxu0 %v3729
      %v4115 = vpop.f32.mrb[0].mxu0
      %v4116 = vadd.f32 %v3891, %v4115
      %v4117 = vpop.f32.mrb[0].mxu0
      %4118 = vmatprep.mubr.f32.mxu0 0.0
      %4119 = vmatmul.mubr.f32.gmra.mrb[0].mxu0 %v3732
      %v4120 = vpop.f32.mrb[0].mxu0
      %v4121 = vadd.f32 %v3896, %v4120
      %v4122 = vpop.f32.mrb[0].mxu0
      %4123 = vmatprep.mubr.f32.mxu0 0.0
      %4124 = vmatmul.mubr.f32.gmra.mrb[0].mxu0 %v3735
      %v4125 = vpop.f32.mrb[0].mxu0
      %v4126 = vadd.f32 %v3901, %v4125
      %v4127 = vpop.f32.mrb[0].mxu0
      %4128 = vmatprep.mubr.f32.mxu0 0.0
      %4129 = vmatmul.mubr.f32.gmra.mrb[0].mxu0 %v3738
      %v4130 = vpop.f32.mrb[0].mxu0
      %v4131 = vadd.f32 %v3906, %v4130
      %v4132 = vpop.f32.mrb[0].mxu0
      %4133 = vmatprep.mubr.f32.mxu0 0.0
      %4134 = vmatmul.mubr.f32.gmra.mrb[0].mxu0 %v3741
      %v4135 = vpop.f32.mrb[0].mxu0
      %v4136 = vadd.f32 %v3911, %v4135
      %v4137 = vpop.f32.mrb[0].mxu0
      %4138 = vmatprep.mubr.f32.mxu0 0.0
      %4139 = vmatmul.mubr.f32.gmra.mrb[0].mxu0 %v3744
      %v4140 = vpop.f32.mrb[0].mxu0
      %v4141 = vadd.f32 %v3916, %v4140
      %v4142 = vpop.f32.mrb[0].mxu0
      %4143 = vmatprep.mubr.f32.mxu0 0.0
      %4144 = vmatmul.mubr.f32.gmra.mrb[0].mxu0 %v3747
      %v4145 = vpop.f32.mrb[0].mxu0
      %v4146 = vadd.f32 %v3921, %v4145
      %v4147 = vpop.f32.mrb[0].mxu0
      %4148 = vmatprep.mubr.f32.mxu0 0.0
      %4149 = vmatmul.mubr.f32.gmra.mrb[0].mxu0 %v3750
      %v4150 = vpop.f32.mrb[0].mxu0
      %v4151 = vadd.f32 %v3926, %v4150
      %v4152 = vpop.f32.mrb[0].mxu0
      %4153 = vmatprep.mubr.f32.mxu0 0.0
      %4154 = vmatmul.mubr.f32.gmra.mrb[0].mxu0 %v3753
      %v4155 = vpop.f32.mrb[0].mxu0
      %v4156 = vadd.f32 %v3931, %v4155
      %v4157 = vpop.f32.mrb[0].mxu0
      %4158 = vmatprep.mubr.f32.mxu0 0.0
      %4159 = vmatmul.mubr.f32.gmra.mrb[0].mxu0 %v3756
      %v4160 = vpop.f32.mrb[0].mxu0
      %v4161 = vadd.f32 %v3936, %v4160
      %v4162 = vpop.f32.mrb[0].mxu0
      %4163 = vmatprep.mubr.f32.mxu0 0.0
      %4164 = vmatmul.mubr.f32.gmra.mrb[0].mxu0 %v3759
      %v4165 = vpop.f32.mrb[0].mxu0
      %v4166 = vadd.f32 %v3941, %v4165
      %v4167 = vpop.f32.mrb[0].mxu0
      %4168 = vmatprep.mubr.f32.mxu0 0.0
      %4169 = vmatmul.mubr.f32.gmra.mrb[0].mxu0 %v3762
      %v4170 = vpop.f32.mrb[0].mxu0
      %v4171 = vadd.f32 %v3946, %v4170
      %v4172 = vpop.f32.mrb[0].mxu0
      %4173 = vmatprep.mubr.f32.mxu0 0.0
      %4174 = vmatmul.mubr.f32.gmra.mrb[0].mxu0 %v3765
      %v4175 = vpop.f32.mrb[0].mxu0
      %v4176 = vadd.f32 %v3951, %v4175
      %v4177 = vpop.f32.mrb[0].mxu0
      %4178 = vmatprep.mubr.f32.mxu0 0.0
      %4179 = vmatmul.mubr.f32.gmra.mrb[0].mxu0 %v3768
      %v4180 = vpop.f32.mrb[0].mxu0
      %v4181 = vadd.f32 %v3956, %v4180
      %v4182 = vpop.f32.mrb[0].mxu0
      %4183 = vmatprep.mubr.f32.mxu0 0.0
      %4184 = vmatmul.mubr.f32.gmra.mrb[0].mxu0 %v3771
      %v4185 = vpop.f32.mrb[0].mxu0
      %v4186 = vadd.f32 %v3961, %v4185
      %v4187 = vpop.f32.mrb[0].mxu0
      %4188 = vmatprep.mubr.f32.mxu0 0.0
      %4189 = vmatmul.mubr.f32.gmra.mrb[0].mxu0 %v3774
      %v4190 = vpop.f32.mrb[0].mxu0
      %v4191 = vadd.f32 %v3966, %v4190
      %v4192 = vpop.f32.mrb[0].mxu0
      %4193 = vmatprep.mubr.f32.mxu0 0.0
      %4194 = vmatmul.mubr.f32.gmra.mrb[0].mxu0 %v3777
      %v4195 = vpop.f32.mrb[0].mxu0
      %v4196 = vadd.f32 %v3971, %v4195
      %v4197 = vpop.f32.mrb[0].mxu0
      %4198 = vmatprep.mubr.f32.mxu0 0.0
      %4199 = vmatmul.mubr.f32.gmra.mrb[0].mxu0 %v3780
      %v4200 = vpop.f32.mrb[0].mxu0
      %v4201 = vadd.f32 %v3976, %v4200
      %v4202 = vpop.f32.mrb[0].mxu0
      %4203 = vmatprep.mubr.f32.mxu0 0.0
      %4204 = vmatmul.mubr.f32.gmra.mrb[0].mxu0 %v3783
      %v4205 = vpop.f32.mrb[0].mxu0
      %v4206 = vadd.f32 %v3981, %v4205
      %v4207 = vpop.f32.mrb[0].mxu0
      %4208 = vmatprep.mubr.f32.mxu0 0.0
      %4209 = vmatmul.mubr.f32.gmra.mrb[0].mxu0 %v3786
      %v4210 = vpop.f32.mrb[0].mxu0
      %v4211 = vadd.f32 %v3986, %v4210
      %v4212 = vpop.f32.mrb[0].mxu0
      %4213 = vmatprep.mubr.f32.mxu0 0.0
      %4214 = vmatmul.mubr.f32.gmra.mrb[0].mxu0 %v3789
      %v4215 = vpop.f32.mrb[0].mxu0
      %v4216 = vadd.f32 %v3991, %v4215
      %v4217 = vpop.f32.mrb[0].mxu0
      %4218 = vmatprep.mubr.f32.mxu0 0.0
      %4219 = vmatmul.mubr.f32.gmra.mrb[0].mxu0 %v3792
      %v4220 = vpop.f32.mrb[0].mxu0
      %v4221 = vadd.f32 %v3996, %v4220
      %v4222 = vpop.f32.mrb[0].mxu0
      %4223 = vmatprep.mubr.f32.mxu0 0.0
      %4224 = vmatmul.mubr.f32.gmra.mrb[0].mxu0 %v3795
      %v4225 = vpop.f32.mrb[0].mxu0
      %v4226 = vadd.f32 %v4001, %v4225
      %v4227 = vpop.f32.mrb[0].mxu0
      %4228 = vmatprep.mubr.f32.mxu0 0.0
      %4229 = vmatmul.mubr.f32.gmra.mrb[0].mxu0 %v3798
      %v4230 = vpop.f32.mrb[0].mxu0
      %v4231 = vadd.f32 %v4006, %v4230
      %v4232 = vpop.f32.mrb[0].mxu0
      %4233 = vmatprep.mubr.f32.mxu0 0.0
      %4234 = vmatmul.mubr.f32.gmra.mrb[0].mxu0 %v3801
      %v4235 = vpop.f32.mrb[0].mxu0
      %v4236 = vadd.f32 %v4011, %v4235
      %v4237 = vpop.f32.mrb[0].mxu0
      %4238 = vmatprep.mubr.f32.mxu0 0.0
      %4239 = vmatmul.mubr.f32.gmra.mrb[0].mxu0 %v3804
      %v4240 = vpop.f32.mrb[0].mxu0
      %v4241 = vadd.f32 %v4016, %v4240
      %v4242 = vpop.f32.mrb[0].mxu0
      %4243 = vmatprep.mubr.f32.mxu0 0.0
      %4244 = vmatmul.mubr.f32.gmra.mrb[0].mxu0 %v3807
      %v4245 = vpop.f32.mrb[0].mxu0
      %v4246 = vadd.f32 %v4021, %v4245
      %v4247 = vpop.f32.mrb[0].mxu0
      %4248 = vmatprep.mubr.f32.mxu0 0.0
      %4249 = vmatmul.mubr.f32.gmra.mrb[0].mxu0 %v3810
      %v4250 = vpop.f32.mrb[0].mxu0
      %v4251 = vadd.f32 %v4026, %v4250
      %v4252 = vpop.f32.mrb[0].mxu0
      %4253 = vmatprep.mubr.f32.mxu0 0.0
      %4254 = vmatmul.mubr.f32.gmra.mrb[0].mxu0 %v3813
      %v4255 = vpop.f32.mrb[0].mxu0
      %v4256 = vadd.f32 %v4031, %v4255
      %v4257 = vpop.f32.mrb[0].mxu0
      %4258 = vmatprep.mubr.f32.mxu0 0.0
      %4259 = vmatmul.mubr.f32.gmra.mrb[0].mxu0 %v3816
      %v4260 = vpop.f32.mrb[0].mxu0
      %v4261 = vadd.f32 %v4036, %v4260
      %v4262 = vpop.f32.mrb[0].mxu0
      %4263 = vmatprep.mubr.f32.mxu0 0.0
      %4264 = vmatmul.mubr.f32.gmra.mrb[0].mxu0 %v3819
      %v4265 = vpop.f32.mrb[0].mxu0
      %v4266 = vadd.f32 %v4041, %v4265
      %v4267 = vpop.f32.mrb[0].mxu0
      %4268 = vmatprep.mubr.f32.mxu0 0.0
      %4269 = vmatmul.mubr.f32.gmra.mrb[0].mxu0 %v3822
      %v4270 = vpop.f32.mrb[0].mxu0
      %v4271 = vadd.f32 %v4046, %v4270
      %v4272 = vpop.f32.mrb[0].mxu0
      %4273 = vdwg.mxu0
      %v4274 = vmax.f32 %v4116, 0.0
      %v4275 = vmax.f32 %v4121, 0.0
      %v4276 = vmax.f32 %v4126, 0.0
      %v4277 = vmax.f32 %v4131, 0.0
      %v4278 = vmax.f32 %v4136, 0.0
      %v4279 = vmax.f32 %v4141, 0.0
      %v4280 = vmax.f32 %v4146, 0.0
      %v4281 = vmax.f32 %v4151, 0.0
      %v4282 = vmax.f32 %v4156, 0.0
      %v4283 = vmax.f32 %v4161, 0.0
      %v4284 = vmax.f32 %v4166, 0.0
      %v4285 = vmax.f32 %v4171, 0.0
      %v4286 = vmax.f32 %v4176, 0.0
      %v4287 = vmax.f32 %v4181, 0.0
      %v4288 = vmax.f32 %v4186, 0.0
      %v4289 = vmax.f32 %v4191, 0.0
      %v4290 = vmax.f32 %v4196, 0.0
      %v4291 = vmax.f32 %v4201, 0.0
      %v4292 = vmax.f32 %v4206, 0.0
      %v4293 = vmax.f32 %v4211, 0.0
      %v4294 = vmax.f32 %v4216, 0.0
      %v4295 = vmax.f32 %v4221, 0.0
      %v4296 = vmax.f32 %v4226, 0.0
      %v4297 = vmax.f32 %v4231, 0.0
      %v4298 = vmax.f32 %v4236, 0.0
      %v4299 = vmax.f32 %v4241, 0.0
      %v4300 = vmax.f32 %v4246, 0.0
      %v4301 = vmax.f32 %v4251, 0.0
      %v4302 = vmax.f32 %v4256, 0.0
      %v4303 = vmax.f32 %v4261, 0.0
      %v4304 = vmax.f32 %v4266, 0.0
      %v4305 = vmax.f32 %v4271, 0.0
      %4306 = vst.msk [vmem:[%s2401 + $0x1] sm:$0xff] %vm335, %v4274
      %4307 = vst.msk [vmem:[%s2401 + $0x9] sm:$0xff] %vm335, %v4275
      %4308 = vst.msk [vmem:[%s2401 + $0x19] sm:$0xff] %vm335, %v4276
      %4309 = vst.msk [vmem:[%s2401 + $0x21] sm:$0xff] %vm335, %v4277
      %4310 = vst.msk [vmem:[%s2401 + $0x31] sm:$0xff] %vm335, %v4278
      %4311 = vst.msk [vmem:[%s2401 + $0x39] sm:$0xff] %vm335, %v4279
      %4312 = vst.msk [vmem:[%s2401 + $0x49] sm:$0xff] %vm335, %v4280
      %4313 = vst.msk [vmem:[%s2401 + $0x51] sm:$0xff] %vm335, %v4281
      %4314 = vst.msk [vmem:[%s2401 + $0x61] sm:$0xff] %vm335, %v4282
      %4315 = vst.msk [vmem:[%s2401 + $0x69] sm:$0xff] %vm335, %v4283
      %4316 = vst.msk [vmem:[%s2401 + $0x79] sm:$0xff] %vm335, %v4284
      %4317 = vst.msk [vmem:[%s2401 + $0x81] sm:$0xff] %vm335, %v4285
      %4318 = vst.msk [vmem:[%s2401 + $0x91] sm:$0xff] %vm335, %v4286
      %4319 = vst.msk [vmem:[%s2401 + $0x99] sm:$0xff] %vm335, %v4287
      %4320 = vst.msk [vmem:[%s2401 + $0xa9] sm:$0xff] %vm335, %v4288
      %4321 = vst.msk [vmem:[%s2401 + $0xb1] sm:$0xff] %vm335, %v4289
      %4322 = vst.msk [vmem:[%s2401 + $0xc1] sm:$0xff] %vm335, %v4290
      %4323 = vst.msk [vmem:[%s2401 + $0xc9] sm:$0xff] %vm335, %v4291
      %4324 = vst.msk [vmem:[%s2401 + $0xd9] sm:$0xff] %vm335, %v4292
      %4325 = vst.msk [vmem:[%s2401 + $0xe1] sm:$0xff] %vm335, %v4293
      %4326 = vst.msk [vmem:[%s2401 + $0xf1] sm:$0xff] %vm335, %v4294
      %4327 = vst.msk [vmem:[%s2401 + $0xf9] sm:$0xff] %vm335, %v4295
      %4328 = vst.msk [vmem:[%s2401 + $0x109] sm:$0xff] %vm335, %v4296
      %4329 = vst.msk [vmem:[%s2401 + $0x111] sm:$0xff] %vm335, %v4297
      %4330 = vst.msk [vmem:[%s2401 + $0x121] sm:$0xff] %vm335, %v4298
      %4331 = vst.msk [vmem:[%s2401 + $0x129] sm:$0xff] %vm335, %v4299
      %4332 = vst.msk [vmem:[%s2401 + $0x139] sm:$0xff] %vm335, %v4300
      %4333 = vst.msk [vmem:[%s2401 + $0x141] sm:$0xff] %vm335, %v4301
      %4334 = vst.msk [vmem:[%s2401 + $0x151] sm:$0xff] %vm335, %v4302
      %4335 = vst.msk [vmem:[%s2401 + $0x159] sm:$0xff] %vm335, %v4303
      %4336 = vst.msk [vmem:[%s2401 + $0x169] sm:$0xff] %vm335, %v4304
      %4337 = vst.msk [vmem:[%s2401 + $0x171] sm:$0xff] %vm335, %v4305
      %v4338 = vld [vmem:[#allocation3] sm:$0xff]
      %v4339 = vld [vmem:[#allocation3 + $0x8] sm:$0xff]
      %v4340 = vld [vmem:[#allocation3 + $0x18] sm:$0xff]
      %v4341 = vld [vmem:[#allocation3 + $0x20] sm:$0xff]
      %v4342 = vld [vmem:[#allocation3 + $0x30] sm:$0xff]
      %v4343 = vld [vmem:[#allocation3 + $0x38] sm:$0xff]
      %v4344 = vld [vmem:[#allocation3 + $0x48] sm:$0xff]
      %v4345 = vld [vmem:[#allocation3 + $0x50] sm:$0xff]
      %v4346 = vld [vmem:[#allocation3 + $0x60] sm:$0xff]
      %v4347 = vld [vmem:[#allocation3 + $0x68] sm:$0xff]
      %v4348 = vld [vmem:[#allocation3 + $0x78] sm:$0xff]
      %v4349 = vld [vmem:[#allocation3 + $0x80] sm:$0xff]
      %v4350 = vld [vmem:[#allocation3 + $0x90] sm:$0xff]
      %v4351 = vld [vmem:[#allocation3 + $0x98] sm:$0xff]
      %v4352 = vld [vmem:[#allocation3 + $0xa8] sm:$0xff]
      %v4353 = vld [vmem:[#allocation3 + $0xb0] sm:$0xff]
      %v4354 = vld [vmem:[#allocation3 + $0xc0] sm:$0xff]
      %v4355 = vld [vmem:[#allocation3 + $0xc8] sm:$0xff]
      %v4356 = vld [vmem:[#allocation3 + $0xd8] sm:$0xff]
      %v4357 = vld [vmem:[#allocation3 + $0xe0] sm:$0xff]
      %v4358 = vld [vmem:[#allocation3 + $0xf0] sm:$0xff]
      %v4359 = vld [vmem:[#allocation3 + $0xf8] sm:$0xff]
      %v4360 = vld [vmem:[#allocation3 + $0x108] sm:$0xff]
      %v4361 = vld [vmem:[#allocation3 + $0x110] sm:$0xff]
      %v4362 = vld [vmem:[#allocation3 + $0x120] sm:$0xff]
      %v4363 = vld [vmem:[#allocation3 + $0x128] sm:$0xff]
      %v4364 = vld [vmem:[#allocation3 + $0x138] sm:$0xff]
      %v4365 = vld [vmem:[#allocation3 + $0x140] sm:$0xff]
      %v4366 = vld [vmem:[#allocation3 + $0x150] sm:$0xff]
      %v4367 = vld [vmem:[#allocation3 + $0x158] sm:$0xff]
      %v4368 = vld [vmem:[#allocation3 + $0x168] sm:$0xff]
      %v4369 = vld [vmem:[#allocation3 + $0x170] sm:$0xff]
      %v4370 = vld [vmem:[#allocation3 + $0x1] sm:$0xff]
      %v4371 = vld [vmem:[#allocation3 + $0x9] sm:$0xff]
      %v4372 = vld [vmem:[#allocation3 + $0x19] sm:$0xff]
      %v4373 = vld [vmem:[#allocation3 + $0x21] sm:$0xff]
      %v4374 = vld [vmem:[#allocation3 + $0x31] sm:$0xff]
      %v4375 = vld [vmem:[#allocation3 + $0x39] sm:$0xff]
      %v4376 = vld [vmem:[#allocation3 + $0x49] sm:$0xff]
      %v4377 = vld [vmem:[#allocation3 + $0x51] sm:$0xff]
      %v4378 = vld [vmem:[#allocation3 + $0x61] sm:$0xff]
      %v4379 = vld [vmem:[#allocation3 + $0x69] sm:$0xff]
      %v4380 = vld [vmem:[#allocation3 + $0x79] sm:$0xff]
      %v4381 = vld [vmem:[#allocation3 + $0x81] sm:$0xff]
      %v4382 = vld [vmem:[#allocation3 + $0x91] sm:$0xff]
      %v4383 = vld [vmem:[#allocation3 + $0x99] sm:$0xff]
      %v4384 = vld [vmem:[#allocation3 + $0xa9] sm:$0xff]
      %v4385 = vld [vmem:[#allocation3 + $0xb1] sm:$0xff]
      %v4386 = vld [vmem:[#allocation3 + $0xc1] sm:$0xff]
      %v4387 = vld [vmem:[#allocation3 + $0xc9] sm:$0xff]
      %v4388 = vld [vmem:[#allocation3 + $0xd9] sm:$0xff]
      %v4389 = vld [vmem:[#allocation3 + $0xe1] sm:$0xff]
      %v4390 = vld [vmem:[#allocation3 + $0xf1] sm:$0xff]
      %v4391 = vld [vmem:[#allocation3 + $0xf9] sm:$0xff]
      %v4392 = vld [vmem:[#allocation3 + $0x109] sm:$0xff]
      %v4393 = vld [vmem:[#allocation3 + $0x111] sm:$0xff]
      %v4394 = vld [vmem:[#allocation3 + $0x121] sm:$0xff]
      %v4395 = vld [vmem:[#allocation3 + $0x129] sm:$0xff]
      %v4396 = vld [vmem:[#allocation3 + $0x139] sm:$0xff]
      %v4397 = vld [vmem:[#allocation3 + $0x141] sm:$0xff]
      %v4398 = vld [vmem:[#allocation3 + $0x151] sm:$0xff]
      %v4399 = vld [vmem:[#allocation3 + $0x159] sm:$0xff]
      %v4400 = vld [vmem:[#allocation3 + $0x169] sm:$0xff]
      %v4401 = vld [vmem:[#allocation3 + $0x171] sm:$0xff]
      %v4402 = vld [vmem:[#allocation3 + $0x2] sm:$0xff]
      %v4403 = vld [vmem:[#allocation3 + $0xa] sm:$0xff]
      %v4404 = vld [vmem:[#allocation3 + $0x1a] sm:$0xff]
      %v4405 = vld [vmem:[#allocation3 + $0x22] sm:$0xff]
      %v4406 = vld [vmem:[#allocation3 + $0x32] sm:$0xff]
      %v4407 = vld [vmem:[#allocation3 + $0x3a] sm:$0xff]
      %v4408 = vld [vmem:[#allocation3 + $0x4a] sm:$0xff]
      %v4409 = vld [vmem:[#allocation3 + $0x52] sm:$0xff]
      %v4410 = vld [vmem:[#allocation3 + $0x62] sm:$0xff]
      %v4411 = vld [vmem:[#allocation3 + $0x6a] sm:$0xff]
      %v4412 = vld [vmem:[#allocation3 + $0x7a] sm:$0xff]
      %v4413 = vld [vmem:[#allocation3 + $0x82] sm:$0xff]
      %v4414 = vld [vmem:[#allocation3 + $0x92] sm:$0xff]
      %v4415 = vld [vmem:[#allocation3 + $0x9a] sm:$0xff]
      %v4416 = vld [vmem:[#allocation3 + $0xaa] sm:$0xff]
      %v4417 = vld [vmem:[#allocation3 + $0xb2] sm:$0xff]
      %v4418 = vld [vmem:[#allocation3 + $0xc2] sm:$0xff]
      %v4419 = vld [vmem:[#allocation3 + $0xca] sm:$0xff]
      %v4420 = vld [vmem:[#allocation3 + $0xda] sm:$0xff]
      %v4421 = vld [vmem:[#allocation3 + $0xe2] sm:$0xff]
      %v4422 = vld [vmem:[#allocation3 + $0xf2] sm:$0xff]
      %v4423 = vld [vmem:[#allocation3 + $0xfa] sm:$0xff]
      %v4424 = vld [vmem:[#allocation3 + $0x10a] sm:$0xff]
      %v4425 = vld [vmem:[#allocation3 + $0x112] sm:$0xff]
      %v4426 = vld [vmem:[#allocation3 + $0x122] sm:$0xff]
      %v4427 = vld [vmem:[#allocation3 + $0x12a] sm:$0xff]
      %v4428 = vld [vmem:[#allocation3 + $0x13a] sm:$0xff]
      %v4429 = vld [vmem:[#allocation3 + $0x142] sm:$0xff]
      %v4430 = vld [vmem:[#allocation3 + $0x152] sm:$0xff]
      %v4431 = vld [vmem:[#allocation3 + $0x15a] sm:$0xff]
      %v4432 = vld [vmem:[#allocation3 + $0x16a] sm:$0xff]
      %v4433 = vld [vmem:[#allocation3 + $0x172] sm:$0xff]
      %v4434 = vld [vmem:[%s2401] sm:$0xff]
      %v4435 = vld [vmem:[%s2401 + $0x8] sm:$0xff]
      %v4436 = vld [vmem:[%s2401 + $0x18] sm:$0xff]
      %v4437 = vld [vmem:[%s2401 + $0x20] sm:$0xff]
      %v4438 = vld [vmem:[%s2401 + $0x30] sm:$0xff]
      %v4439 = vld [vmem:[%s2401 + $0x38] sm:$0xff]
      %v4440 = vld [vmem:[%s2401 + $0x48] sm:$0xff]
      %v4441 = vld [vmem:[%s2401 + $0x50] sm:$0xff]
      %v4442 = vld [vmem:[%s2401 + $0x60] sm:$0xff]
      %v4443 = vld [vmem:[%s2401 + $0x68] sm:$0xff]
      %v4444 = vld [vmem:[%s2401 + $0x78] sm:$0xff]
      %v4445 = vld [vmem:[%s2401 + $0x80] sm:$0xff]
      %v4446 = vld [vmem:[%s2401 + $0x90] sm:$0xff]
      %v4447 = vld [vmem:[%s2401 + $0x98] sm:$0xff]
      %v4448 = vld [vmem:[%s2401 + $0xa8] sm:$0xff]
      %v4449 = vld [vmem:[%s2401 + $0xb0] sm:$0xff]
      %v4450 = vld [vmem:[%s2401 + $0xc0] sm:$0xff]
      %v4451 = vld [vmem:[%s2401 + $0xc8] sm:$0xff]
      %v4452 = vld [vmem:[%s2401 + $0xd8] sm:$0xff]
      %v4453 = vld [vmem:[%s2401 + $0xe0] sm:$0xff]
      %v4454 = vld [vmem:[%s2401 + $0xf0] sm:$0xff]
      %v4455 = vld [vmem:[%s2401 + $0xf8] sm:$0xff]
      %v4456 = vld [vmem:[%s2401 + $0x108] sm:$0xff]
      %v4457 = vld [vmem:[%s2401 + $0x110] sm:$0xff]
      %v4458 = vld [vmem:[%s2401 + $0x120] sm:$0xff]
      %v4459 = vld [vmem:[%s2401 + $0x128] sm:$0xff]
      %v4460 = vld [vmem:[%s2401 + $0x138] sm:$0xff]
      %v4461 = vld [vmem:[%s2401 + $0x140] sm:$0xff]
      %v4462 = vld [vmem:[%s2401 + $0x150] sm:$0xff]
      %v4463 = vld [vmem:[%s2401 + $0x158] sm:$0xff]
      %v4464 = vld [vmem:[%s2401 + $0x168] sm:$0xff]
      %v4465 = vld [vmem:[%s2401 + $0x170] sm:$0xff]
      %v4466 = vld [vmem:[%s2401 + $0x1] sm:$0xff]
      %v4467 = vld [vmem:[%s2401 + $0x9] sm:$0xff]
      %v4468 = vld [vmem:[%s2401 + $0x19] sm:$0xff]
      %v4469 = vld [vmem:[%s2401 + $0x21] sm:$0xff]
      %v4470 = vld [vmem:[%s2401 + $0x31] sm:$0xff]
      %v4471 = vld [vmem:[%s2401 + $0x39] sm:$0xff]
      %v4472 = vld [vmem:[%s2401 + $0x49] sm:$0xff]
      %v4473 = vld [vmem:[%s2401 + $0x51] sm:$0xff]
      %v4474 = vld [vmem:[%s2401 + $0x61] sm:$0xff]
      %v4475 = vld [vmem:[%s2401 + $0x69] sm:$0xff]
      %v4476 = vld [vmem:[%s2401 + $0x79] sm:$0xff]
      %v4477 = vld [vmem:[%s2401 + $0x81] sm:$0xff]
      %v4478 = vld [vmem:[%s2401 + $0x91] sm:$0xff]
      %v4479 = vld [vmem:[%s2401 + $0x99] sm:$0xff]
      %v4480 = vld [vmem:[%s2401 + $0xa9] sm:$0xff]
      %v4481 = vld [vmem:[%s2401 + $0xb1] sm:$0xff]
      %v4482 = vld [vmem:[%s2401 + $0xc1] sm:$0xff]
      %v4483 = vld [vmem:[%s2401 + $0xc9] sm:$0xff]
      %v4484 = vld [vmem:[%s2401 + $0xd9] sm:$0xff]
      %v4485 = vld [vmem:[%s2401 + $0xe1] sm:$0xff]
      %v4486 = vld [vmem:[%s2401 + $0xf1] sm:$0xff]
      %v4487 = vld [vmem:[%s2401 + $0xf9] sm:$0xff]
      %v4488 = vld [vmem:[%s2401 + $0x109] sm:$0xff]
      %v4489 = vld [vmem:[%s2401 + $0x111] sm:$0xff]
      %v4490 = vld [vmem:[%s2401 + $0x121] sm:$0xff]
      %v4491 = vld [vmem:[%s2401 + $0x129] sm:$0xff]
      %v4492 = vld [vmem:[%s2401 + $0x139] sm:$0xff]
      %v4493 = vld [vmem:[%s2401 + $0x141] sm:$0xff]
      %v4494 = vld [vmem:[%s2401 + $0x151] sm:$0xff]
      %v4495 = vld [vmem:[%s2401 + $0x159] sm:$0xff]
      %v4496 = vld [vmem:[%s2401 + $0x169] sm:$0xff]
      %v4497 = vld [vmem:[%s2401 + $0x171] sm:$0xff]
      %v4498 = vld [vmem:[%s2401 + $0x2] sm:$0xff]
      %v4499 = vld [vmem:[%s2401 + $0xa] sm:$0xff]
      %v4500 = vld [vmem:[%s2401 + $0x1a] sm:$0xff]
      %v4501 = vld [vmem:[%s2401 + $0x22] sm:$0xff]
      %v4502 = vld [vmem:[%s2401 + $0x32] sm:$0xff]
      %v4503 = vld [vmem:[%s2401 + $0x3a] sm:$0xff]
      %v4504 = vld [vmem:[%s2401 + $0x4a] sm:$0xff]
      %v4505 = vld [vmem:[%s2401 + $0x52] sm:$0xff]
      %v4506 = vld [vmem:[%s2401 + $0x62] sm:$0xff]
      %v4507 = vld [vmem:[%s2401 + $0x6a] sm:$0xff]
      %v4508 = vld [vmem:[%s2401 + $0x7a] sm:$0xff]
      %v4509 = vld [vmem:[%s2401 + $0x82] sm:$0xff]
      %v4510 = vld [vmem:[%s2401 + $0x92] sm:$0xff]
      %v4511 = vld [vmem:[%s2401 + $0x9a] sm:$0xff]
      %v4512 = vld [vmem:[%s2401 + $0xaa] sm:$0xff]
      %v4513 = vld [vmem:[%s2401 + $0xb2] sm:$0xff]
      %v4514 = vld [vmem:[%s2401 + $0xc2] sm:$0xff]
      %v4515 = vld [vmem:[%s2401 + $0xca] sm:$0xff]
      %v4516 = vld [vmem:[%s2401 + $0xda] sm:$0xff]
      %v4517 = vld [vmem:[%s2401 + $0xe2] sm:$0xff]
      %v4518 = vld [vmem:[%s2401 + $0xf2] sm:$0xff]
      %v4519 = vld [vmem:[%s2401 + $0xfa] sm:$0xff]
      %v4520 = vld [vmem:[%s2401 + $0x10a] sm:$0xff]
      %v4521 = vld [vmem:[%s2401 + $0x112] sm:$0xff]
      %v4522 = vld [vmem:[%s2401 + $0x122] sm:$0xff]
      %v4523 = vld [vmem:[%s2401 + $0x12a] sm:$0xff]
      %v4524 = vld [vmem:[%s2401 + $0x13a] sm:$0xff]
      %v4525 = vld [vmem:[%s2401 + $0x142] sm:$0xff]
      %v4526 = vld [vmem:[%s2401 + $0x152] sm:$0xff]
      %v4527 = vld [vmem:[%s2401 + $0x15a] sm:$0xff]
      %v4528 = vld [vmem:[%s2401 + $0x16a] sm:$0xff]
      %v4529 = vld [vmem:[%s2401 + $0x172] sm:$0xff]
      %v4530 = vld [vmem:[%s2626] sm:$0xff]
      %v4531 = vld [vmem:[%s2626 + $0x8] sm:$0xff]
      %v4532 = vld [vmem:[%s2626 + $0x18] sm:$0xff]
      %v4533 = vld [vmem:[%s2626 + $0x20] sm:$0xff]
      %v4534 = vld [vmem:[%s2626 + $0x30] sm:$0xff]
      %v4535 = vld [vmem:[%s2626 + $0x38] sm:$0xff]
      %v4536 = vld [vmem:[%s2626 + $0x48] sm:$0xff]
      %v4537 = vld [vmem:[%s2626 + $0x50] sm:$0xff]
      %v4538 = vld [vmem:[%s2626 + $0x60] sm:$0xff]
      %v4539 = vld [vmem:[%s2626 + $0x68] sm:$0xff]
      %v4540 = vld [vmem:[%s2626 + $0x78] sm:$0xff]
      %v4541 = vld [vmem:[%s2626 + $0x80] sm:$0xff]
      %v4542 = vld [vmem:[%s2626 + $0x90] sm:$0xff]
      %v4543 = vld [vmem:[%s2626 + $0x98] sm:$0xff]
      %v4544 = vld [vmem:[%s2626 + $0xa8] sm:$0xff]
      %v4545 = vld [vmem:[%s2626 + $0xb0] sm:$0xff]
      %v4546 = vld [vmem:[%s2626 + $0xc0] sm:$0xff]
      %v4547 = vld [vmem:[%s2626 + $0xc8] sm:$0xff]
      %v4548 = vld [vmem:[%s2626 + $0xd8] sm:$0xff]
      %v4549 = vld [vmem:[%s2626 + $0xe0] sm:$0xff]
      %v4550 = vld [vmem:[%s2626 + $0xf0] sm:$0xff]
      %v4551 = vld [vmem:[%s2626 + $0xf8] sm:$0xff]
      %v4552 = vld [vmem:[%s2626 + $0x108] sm:$0xff]
      %v4553 = vld [vmem:[%s2626 + $0x110] sm:$0xff]
      %v4554 = vld [vmem:[%s2626 + $0x120] sm:$0xff]
      %v4555 = vld [vmem:[%s2626 + $0x128] sm:$0xff]
      %v4556 = vld [vmem:[%s2626 + $0x138] sm:$0xff]
      %v4557 = vld [vmem:[%s2626 + $0x140] sm:$0xff]
      %v4558 = vld [vmem:[%s2626 + $0x150] sm:$0xff]
      %v4559 = vld [vmem:[%s2626 + $0x158] sm:$0xff]
      %v4560 = vld [vmem:[%s2626 + $0x168] sm:$0xff]
      %v4561 = vld [vmem:[%s2626 + $0x170] sm:$0xff]
      %v4562 = vld [vmem:[%s2626 + $0x1] sm:$0xff]
      %v4563 = vld [vmem:[%s2626 + $0x9] sm:$0xff]
      %v4564 = vld [vmem:[%s2626 + $0x19] sm:$0xff]
      %v4565 = vld [vmem:[%s2626 + $0x21] sm:$0xff]
      %v4566 = vld [vmem:[%s2626 + $0x31] sm:$0xff]
      %v4567 = vld [vmem:[%s2626 + $0x39] sm:$0xff]
      %v4568 = vld [vmem:[%s2626 + $0x49] sm:$0xff]
      %v4569 = vld [vmem:[%s2626 + $0x51] sm:$0xff]
      %v4570 = vld [vmem:[%s2626 + $0x61] sm:$0xff]
      %v4571 = vld [vmem:[%s2626 + $0x69] sm:$0xff]
      %v4572 = vld [vmem:[%s2626 + $0x79] sm:$0xff]
      %v4573 = vld [vmem:[%s2626 + $0x81] sm:$0xff]
      %v4574 = vld [vmem:[%s2626 + $0x91] sm:$0xff]
      %v4575 = vld [vmem:[%s2626 + $0x99] sm:$0xff]
      %v4576 = vld [vmem:[%s2626 + $0xa9] sm:$0xff]
      %v4577 = vld [vmem:[%s2626 + $0xb1] sm:$0xff]
      %v4578 = vld [vmem:[%s2626 + $0xc1] sm:$0xff]
      %v4579 = vld [vmem:[%s2626 + $0xc9] sm:$0xff]
      %v4580 = vld [vmem:[%s2626 + $0xd9] sm:$0xff]
      %v4581 = vld [vmem:[%s2626 + $0xe1] sm:$0xff]
      %v4582 = vld [vmem:[%s2626 + $0xf1] sm:$0xff]
      %v4583 = vld [vmem:[%s2626 + $0xf9] sm:$0xff]
      %v4584 = vld [vmem:[%s2626 + $0x109] sm:$0xff]
      %v4585 = vld [vmem:[%s2626 + $0x111] sm:$0xff]
      %v4586 = vld [vmem:[%s2626 + $0x121] sm:$0xff]
      %v4587 = vld [vmem:[%s2626 + $0x129] sm:$0xff]
      %v4588 = vld [vmem:[%s2626 + $0x139] sm:$0xff]
      %v4589 = vld [vmem:[%s2626 + $0x141] sm:$0xff]
      %v4590 = vld [vmem:[%s2626 + $0x151] sm:$0xff]
      %v4591 = vld [vmem:[%s2626 + $0x159] sm:$0xff]
      %v4592 = vld [vmem:[%s2626 + $0x169] sm:$0xff]
      %v4593 = vld [vmem:[%s2626 + $0x171] sm:$0xff]
      %v4594 = vld [vmem:[%s2626 + $0x2] sm:$0xff]
      %v4595 = vld [vmem:[%s2626 + $0xa] sm:$0xff]
      %v4596 = vld [vmem:[%s2626 + $0x1a] sm:$0xff]
      %v4597 = vld [vmem:[%s2626 + $0x22] sm:$0xff]
      %v4598 = vld [vmem:[%s2626 + $0x32] sm:$0xff]
      %v4599 = vld [vmem:[%s2626 + $0x3a] sm:$0xff]
      %v4600 = vld [vmem:[%s2626 + $0x4a] sm:$0xff]
      %v4601 = vld [vmem:[%s2626 + $0x52] sm:$0xff]
      %v4602 = vld [vmem:[%s2626 + $0x62] sm:$0xff]
      %v4603 = vld [vmem:[%s2626 + $0x6a] sm:$0xff]
      %v4604 = vld [vmem:[%s2626 + $0x7a] sm:$0xff]
      %v4605 = vld [vmem:[%s2626 + $0x82] sm:$0xff]
      %v4606 = vld [vmem:[%s2626 + $0x92] sm:$0xff]
      %v4607 = vld [vmem:[%s2626 + $0x9a] sm:$0xff]
      %v4608 = vld [vmem:[%s2626 + $0xaa] sm:$0xff]
      %v4609 = vld [vmem:[%s2626 + $0xb2] sm:$0xff]
      %v4610 = vld [vmem:[%s2626 + $0xc2] sm:$0xff]
      %v4611 = vld [vmem:[%s2626 + $0xca] sm:$0xff]
      %v4612 = vld [vmem:[%s2626 + $0xda] sm:$0xff]
      %v4613 = vld [vmem:[%s2626 + $0xe2] sm:$0xff]
      %v4614 = vld [vmem:[%s2626 + $0xf2] sm:$0xff]
      %v4615 = vld [vmem:[%s2626 + $0xfa] sm:$0xff]
      %v4616 = vld [vmem:[%s2626 + $0x10a] sm:$0xff]
      %v4617 = vld [vmem:[%s2626 + $0x112] sm:$0xff]
      %v4618 = vld [vmem:[%s2626 + $0x122] sm:$0xff]
      %v4619 = vld [vmem:[%s2626 + $0x12a] sm:$0xff]
      %v4620 = vld [vmem:[%s2626 + $0x13a] sm:$0xff]
      %v4621 = vld [vmem:[%s2626 + $0x142] sm:$0xff]
      %v4622 = vld [vmem:[%s2626 + $0x152] sm:$0xff]
      %v4623 = vld [vmem:[%s2626 + $0x15a] sm:$0xff]
      %v4624 = vld [vmem:[%s2626 + $0x16a] sm:$0xff]
      %v4625 = vld [vmem:[%s2626 + $0x172] sm:$0xff]
      %4658 = vrot.lane.b32.xlu0 %v4370, 32
      %v4659 = vpop.permute.xlu0 %4658
      %4660 = vrot.lane.b32.xlu0 %v4371, 32
      %v4661 = vpop.permute.xlu0 %4660
      %4662 = vrot.lane.b32.xlu0 %v4372, 32
      %v4663 = vpop.permute.xlu0 %4662
      %4664 = vrot.lane.b32.xlu0 %v4373, 32
      %v4665 = vpop.permute.xlu0 %4664
      %4666 = vrot.lane.b32.xlu0 %v4374, 32
      %v4667 = vpop.permute.xlu0 %4666
      %4668 = vrot.lane.b32.xlu0 %v4375, 32
      %v4669 = vpop.permute.xlu0 %4668
      %4670 = vrot.lane.b32.xlu0 %v4376, 32
      %v4671 = vpop.permute.xlu0 %4670
      %4672 = vrot.lane.b32.xlu0 %v4377, 32
      %v4673 = vpop.permute.xlu0 %4672
      %4674 = vrot.lane.b32.xlu0 %v4378, 32
      %v4675 = vpop.permute.xlu0 %4674
      %4676 = vrot.lane.b32.xlu0 %v4379, 32
      %v4677 = vpop.permute.xlu0 %4676
      %4678 = vrot.lane.b32.xlu0 %v4380, 32
      %v4679 = vpop.permute.xlu0 %4678
      %4680 = vrot.lane.b32.xlu0 %v4381, 32
      %v4681 = vpop.permute.xlu0 %4680
      %4682 = vrot.lane.b32.xlu0 %v4382, 32
      %v4683 = vpop.permute.xlu0 %4682
      %4684 = vrot.lane.b32.xlu0 %v4383, 32
      %v4685 = vpop.permute.xlu0 %4684
      %4686 = vrot.lane.b32.xlu0 %v4384, 32
      %v4687 = vpop.permute.xlu0 %4686
      %4688 = vrot.lane.b32.xlu0 %v4385, 32
      %v4689 = vpop.permute.xlu0 %4688
      %4690 = vrot.lane.b32.xlu0 %v4386, 32
      %v4691 = vpop.permute.xlu0 %4690
      %4692 = vrot.lane.b32.xlu0 %v4387, 32
      %v4693 = vpop.permute.xlu0 %4692
      %4694 = vrot.lane.b32.xlu0 %v4388, 32
      %v4695 = vpop.permute.xlu0 %4694
      %4696 = vrot.lane.b32.xlu0 %v4389, 32
      %v4697 = vpop.permute.xlu0 %4696
      %4698 = vrot.lane.b32.xlu0 %v4390, 32
      %v4699 = vpop.permute.xlu0 %4698
      %4700 = vrot.lane.b32.xlu0 %v4391, 32
      %v4701 = vpop.permute.xlu0 %4700
      %4702 = vrot.lane.b32.xlu0 %v4392, 32
      %v4703 = vpop.permute.xlu0 %4702
      %4704 = vrot.lane.b32.xlu0 %v4393, 32
      %v4705 = vpop.permute.xlu0 %4704
      %4706 = vrot.lane.b32.xlu0 %v4394, 32
      %v4707 = vpop.permute.xlu0 %4706
      %4708 = vrot.lane.b32.xlu0 %v4395, 32
      %v4709 = vpop.permute.xlu0 %4708
      %4710 = vrot.lane.b32.xlu0 %v4396, 32
      %v4711 = vpop.permute.xlu0 %4710
      %4712 = vrot.lane.b32.xlu0 %v4397, 32
      %v4713 = vpop.permute.xlu0 %4712
      %4714 = vrot.lane.b32.xlu0 %v4398, 32
      %v4715 = vpop.permute.xlu0 %4714
      %4716 = vrot.lane.b32.xlu0 %v4399, 32
      %v4717 = vpop.permute.xlu0 %4716
      %4718 = vrot.lane.b32.xlu0 %v4400, 32
      %v4719 = vpop.permute.xlu0 %4718
      %4720 = vrot.lane.b32.xlu0 %v4401, 32
      %v4721 = vpop.permute.xlu0 %4720
      %4786 = vrot.lane.b32.xlu0 %v4402, 64
      %v4787 = vpop.permute.xlu0 %4786
      %4788 = vrot.lane.b32.xlu0 %v4403, 64
      %v4789 = vpop.permute.xlu0 %4788
      %4790 = vrot.lane.b32.xlu0 %v4404, 64
      %v4791 = vpop.permute.xlu0 %4790
      %4792 = vrot.lane.b32.xlu0 %v4405, 64
      %v4793 = vpop.permute.xlu0 %4792
      %4794 = vrot.lane.b32.xlu0 %v4406, 64
      %v4795 = vpop.permute.xlu0 %4794
      %4796 = vrot.lane.b32.xlu0 %v4407, 64
      %v4797 = vpop.permute.xlu0 %4796
      %4798 = vrot.lane.b32.xlu0 %v4408, 64
      %v4799 = vpop.permute.xlu0 %4798
      %4800 = vrot.lane.b32.xlu0 %v4409, 64
      %v4801 = vpop.permute.xlu0 %4800
      %4802 = vrot.lane.b32.xlu0 %v4410, 64
      %v4803 = vpop.permute.xlu0 %4802
      %4804 = vrot.lane.b32.xlu0 %v4411, 64
      %v4805 = vpop.permute.xlu0 %4804
      %4806 = vrot.lane.b32.xlu0 %v4412, 64
      %v4807 = vpop.permute.xlu0 %4806
      %4808 = vrot.lane.b32.xlu0 %v4413, 64
      %v4809 = vpop.permute.xlu0 %4808
      %4810 = vrot.lane.b32.xlu0 %v4414, 64
      %v4811 = vpop.permute.xlu0 %4810
      %4812 = vrot.lane.b32.xlu0 %v4415, 64
      %v4813 = vpop.permute.xlu0 %4812
      %4814 = vrot.lane.b32.xlu0 %v4416, 64
      %v4815 = vpop.permute.xlu0 %4814
      %4816 = vrot.lane.b32.xlu0 %v4417, 64
      %v4817 = vpop.permute.xlu0 %4816
      %4818 = vrot.lane.b32.xlu0 %v4418, 64
      %v4819 = vpop.permute.xlu0 %4818
      %4820 = vrot.lane.b32.xlu0 %v4419, 64
      %v4821 = vpop.permute.xlu0 %4820
      %4822 = vrot.lane.b32.xlu0 %v4420, 64
      %v4823 = vpop.permute.xlu0 %4822
      %4824 = vrot.lane.b32.xlu0 %v4421, 64
      %v4825 = vpop.permute.xlu0 %4824
      %4826 = vrot.lane.b32.xlu0 %v4422, 64
      %v4827 = vpop.permute.xlu0 %4826
      %4828 = vrot.lane.b32.xlu0 %v4423, 64
      %v4829 = vpop.permute.xlu0 %4828
      %4830 = vrot.lane.b32.xlu0 %v4424, 64
      %v4831 = vpop.permute.xlu0 %4830
      %4832 = vrot.lane.b32.xlu0 %v4425, 64
      %v4833 = vpop.permute.xlu0 %4832
      %4834 = vrot.lane.b32.xlu0 %v4426, 64
      %v4835 = vpop.permute.xlu0 %4834
      %4836 = vrot.lane.b32.xlu0 %v4427, 64
      %v4837 = vpop.permute.xlu0 %4836
      %4838 = vrot.lane.b32.xlu0 %v4428, 64
      %v4839 = vpop.permute.xlu0 %4838
      %4840 = vrot.lane.b32.xlu0 %v4429, 64
      %v4841 = vpop.permute.xlu0 %4840
      %4842 = vrot.lane.b32.xlu0 %v4430, 64
      %v4843 = vpop.permute.xlu0 %4842
      %4844 = vrot.lane.b32.xlu0 %v4431, 64
      %v4845 = vpop.permute.xlu0 %4844
      %4846 = vrot.lane.b32.xlu0 %v4432, 64
      %v4847 = vpop.permute.xlu0 %4846
      %4848 = vrot.lane.b32.xlu0 %v4433, 64
      %v4849 = vpop.permute.xlu0 %4848
      %4914 = vrot.lane.b32.xlu0 %v4434, 96
      %v4915 = vpop.permute.xlu0 %4914
      %4916 = vrot.lane.b32.xlu0 %v4435, 96
      %v4917 = vpop.permute.xlu0 %4916
      %4918 = vrot.lane.b32.xlu0 %v4436, 96
      %v4919 = vpop.permute.xlu0 %4918
      %4920 = vrot.lane.b32.xlu0 %v4437, 96
      %v4921 = vpop.permute.xlu0 %4920
      %4922 = vrot.lane.b32.xlu0 %v4438, 96
      %v4923 = vpop.permute.xlu0 %4922
      %4924 = vrot.lane.b32.xlu0 %v4439, 96
      %v4925 = vpop.permute.xlu0 %4924
      %4926 = vrot.lane.b32.xlu0 %v4440, 96
      %v4927 = vpop.permute.xlu0 %4926
      %4928 = vrot.lane.b32.xlu0 %v4441, 96
      %v4929 = vpop.permute.xlu0 %4928
      %4930 = vrot.lane.b32.xlu0 %v4442, 96
      %v4931 = vpop.permute.xlu0 %4930
      %4932 = vrot.lane.b32.xlu0 %v4443, 96
      %v4933 = vpop.permute.xlu0 %4932
      %4934 = vrot.lane.b32.xlu0 %v4444, 96
      %v4935 = vpop.permute.xlu0 %4934
      %4936 = vrot.lane.b32.xlu0 %v4445, 96
      %v4937 = vpop.permute.xlu0 %4936
      %4938 = vrot.lane.b32.xlu0 %v4446, 96
      %v4939 = vpop.permute.xlu0 %4938
      %4940 = vrot.lane.b32.xlu0 %v4447, 96
      %v4941 = vpop.permute.xlu0 %4940
      %4942 = vrot.lane.b32.xlu0 %v4448, 96
      %v4943 = vpop.permute.xlu0 %4942
      %4944 = vrot.lane.b32.xlu0 %v4449, 96
      %v4945 = vpop.permute.xlu0 %4944
      %4946 = vrot.lane.b32.xlu0 %v4450, 96
      %v4947 = vpop.permute.xlu0 %4946
      %4948 = vrot.lane.b32.xlu0 %v4451, 96
      %v4949 = vpop.permute.xlu0 %4948
      %4950 = vrot.lane.b32.xlu0 %v4452, 96
      %v4951 = vpop.permute.xlu0 %4950
      %4952 = vrot.lane.b32.xlu0 %v4453, 96
      %v4953 = vpop.permute.xlu0 %4952
      %4954 = vrot.lane.b32.xlu0 %v4454, 96
      %v4955 = vpop.permute.xlu0 %4954
      %4956 = vrot.lane.b32.xlu0 %v4455, 96
      %v4957 = vpop.permute.xlu0 %4956
      %4958 = vrot.lane.b32.xlu0 %v4456, 96
      %v4959 = vpop.permute.xlu0 %4958
      %4960 = vrot.lane.b32.xlu0 %v4457, 96
      %v4961 = vpop.permute.xlu0 %4960
      %4962 = vrot.lane.b32.xlu0 %v4458, 96
      %v4963 = vpop.permute.xlu0 %4962
      %4964 = vrot.lane.b32.xlu0 %v4459, 96
      %v4965 = vpop.permute.xlu0 %4964
      %4966 = vrot.lane.b32.xlu0 %v4460, 96
      %v4967 = vpop.permute.xlu0 %4966
      %4968 = vrot.lane.b32.xlu0 %v4461, 96
      %v4969 = vpop.permute.xlu0 %4968
      %4970 = vrot.lane.b32.xlu0 %v4462, 96
      %v4971 = vpop.permute.xlu0 %4970
      %4972 = vrot.lane.b32.xlu0 %v4463, 96
      %v4973 = vpop.permute.xlu0 %4972
      %4974 = vrot.lane.b32.xlu0 %v4464, 96
      %v4975 = vpop.permute.xlu0 %4974
      %4976 = vrot.lane.b32.xlu0 %v4465, 96
      %v4977 = vpop.permute.xlu0 %4976
      %5042 = vrot.lane.b32.xlu0 %v4498, 32
      %v5043 = vpop.permute.xlu0 %5042
      %5044 = vrot.lane.b32.xlu0 %v4499, 32
      %v5045 = vpop.permute.xlu0 %5044
      %5046 = vrot.lane.b32.xlu0 %v4500, 32
      %v5047 = vpop.permute.xlu0 %5046
      %5048 = vrot.lane.b32.xlu0 %v4501, 32
      %v5049 = vpop.permute.xlu0 %5048
      %5050 = vrot.lane.b32.xlu0 %v4502, 32
      %v5051 = vpop.permute.xlu0 %5050
      %5052 = vrot.lane.b32.xlu0 %v4503, 32
      %v5053 = vpop.permute.xlu0 %5052
      %5054 = vrot.lane.b32.xlu0 %v4504, 32
      %v5055 = vpop.permute.xlu0 %5054
      %5056 = vrot.lane.b32.xlu0 %v4505, 32
      %v5057 = vpop.permute.xlu0 %5056
      %5058 = vrot.lane.b32.xlu0 %v4506, 32
      %v5059 = vpop.permute.xlu0 %5058
      %5060 = vrot.lane.b32.xlu0 %v4507, 32
      %v5061 = vpop.permute.xlu0 %5060
      %5062 = vrot.lane.b32.xlu0 %v4508, 32
      %v5063 = vpop.permute.xlu0 %5062
      %5064 = vrot.lane.b32.xlu0 %v4509, 32
      %v5065 = vpop.permute.xlu0 %5064
      %5066 = vrot.lane.b32.xlu0 %v4510, 32
      %v5067 = vpop.permute.xlu0 %5066
      %5068 = vrot.lane.b32.xlu0 %v4511, 32
      %v5069 = vpop.permute.xlu0 %5068
      %5070 = vrot.lane.b32.xlu0 %v4512, 32
      %v5071 = vpop.permute.xlu0 %5070
      %5072 = vrot.lane.b32.xlu0 %v4513, 32
      %v5073 = vpop.permute.xlu0 %5072
      %5074 = vrot.lane.b32.xlu0 %v4514, 32
      %v5075 = vpop.permute.xlu0 %5074
      %5076 = vrot.lane.b32.xlu0 %v4515, 32
      %v5077 = vpop.permute.xlu0 %5076
      %5078 = vrot.lane.b32.xlu0 %v4516, 32
      %v5079 = vpop.permute.xlu0 %5078
      %5080 = vrot.lane.b32.xlu0 %v4517, 32
      %v5081 = vpop.permute.xlu0 %5080
      %5082 = vrot.lane.b32.xlu0 %v4518, 32
      %v5083 = vpop.permute.xlu0 %5082
      %5084 = vrot.lane.b32.xlu0 %v4519, 32
      %v5085 = vpop.permute.xlu0 %5084
      %5086 = vrot.lane.b32.xlu0 %v4520, 32
      %v5087 = vpop.permute.xlu0 %5086
      %5088 = vrot.lane.b32.xlu0 %v4521, 32
      %v5089 = vpop.permute.xlu0 %5088
      %5090 = vrot.lane.b32.xlu0 %v4522, 32
      %v5091 = vpop.permute.xlu0 %5090
      %5092 = vrot.lane.b32.xlu0 %v4523, 32
      %v5093 = vpop.permute.xlu0 %5092
      %5094 = vrot.lane.b32.xlu0 %v4524, 32
      %v5095 = vpop.permute.xlu0 %5094
      %5096 = vrot.lane.b32.xlu0 %v4525, 32
      %v5097 = vpop.permute.xlu0 %5096
      %5098 = vrot.lane.b32.xlu0 %v4526, 32
      %v5099 = vpop.permute.xlu0 %5098
      %5100 = vrot.lane.b32.xlu0 %v4527, 32
      %v5101 = vpop.permute.xlu0 %5100
      %5102 = vrot.lane.b32.xlu0 %v4528, 32
      %v5103 = vpop.permute.xlu0 %5102
      %5104 = vrot.lane.b32.xlu0 %v4529, 32
      %v5105 = vpop.permute.xlu0 %5104
      %5170 = vrot.lane.b32.xlu0 %v4530, 64
      %v5171 = vpop.permute.xlu0 %5170
      %5172 = vrot.lane.b32.xlu0 %v4531, 64
      %v5173 = vpop.permute.xlu0 %5172
      %5174 = vrot.lane.b32.xlu0 %v4532, 64
      %v5175 = vpop.permute.xlu0 %5174
      %5176 = vrot.lane.b32.xlu0 %v4533, 64
      %v5177 = vpop.permute.xlu0 %5176
      %5178 = vrot.lane.b32.xlu0 %v4534, 64
      %v5179 = vpop.permute.xlu0 %5178
      %5180 = vrot.lane.b32.xlu0 %v4535, 64
      %v5181 = vpop.permute.xlu0 %5180
      %5182 = vrot.lane.b32.xlu0 %v4536, 64
      %v5183 = vpop.permute.xlu0 %5182
      %5184 = vrot.lane.b32.xlu0 %v4537, 64
      %v5185 = vpop.permute.xlu0 %5184
      %5186 = vrot.lane.b32.xlu0 %v4538, 64
      %v5187 = vpop.permute.xlu0 %5186
      %5188 = vrot.lane.b32.xlu0 %v4539, 64
      %v5189 = vpop.permute.xlu0 %5188
      %5190 = vrot.lane.b32.xlu0 %v4540, 64
      %v5191 = vpop.permute.xlu0 %5190
      %5192 = vrot.lane.b32.xlu0 %v4541, 64
      %v5193 = vpop.permute.xlu0 %5192
      %5194 = vrot.lane.b32.xlu0 %v4542, 64
      %v5195 = vpop.permute.xlu0 %5194
      %5196 = vrot.lane.b32.xlu0 %v4543, 64
      %v5197 = vpop.permute.xlu0 %5196
      %5198 = vrot.lane.b32.xlu0 %v4544, 64
      %v5199 = vpop.permute.xlu0 %5198
      %5200 = vrot.lane.b32.xlu0 %v4545, 64
      %v5201 = vpop.permute.xlu0 %5200
      %5202 = vrot.lane.b32.xlu0 %v4546, 64
      %v5203 = vpop.permute.xlu0 %5202
      %5204 = vrot.lane.b32.xlu0 %v4547, 64
      %v5205 = vpop.permute.xlu0 %5204
      %5206 = vrot.lane.b32.xlu0 %v4548, 64
      %v5207 = vpop.permute.xlu0 %5206
      %5208 = vrot.lane.b32.xlu0 %v4549, 64
      %v5209 = vpop.permute.xlu0 %5208
      %5210 = vrot.lane.b32.xlu0 %v4550, 64
      %v5211 = vpop.permute.xlu0 %5210
      %5212 = vrot.lane.b32.xlu0 %v4551, 64
      %v5213 = vpop.permute.xlu0 %5212
      %5214 = vrot.lane.b32.xlu0 %v4552, 64
      %v5215 = vpop.permute.xlu0 %5214
      %5216 = vrot.lane.b32.xlu0 %v4553, 64
      %v5217 = vpop.permute.xlu0 %5216
      %5218 = vrot.lane.b32.xlu0 %v4554, 64
      %v5219 = vpop.permute.xlu0 %5218
      %5220 = vrot.lane.b32.xlu0 %v4555, 64
      %v5221 = vpop.permute.xlu0 %5220
      %5222 = vrot.lane.b32.xlu0 %v4556, 64
      %v5223 = vpop.permute.xlu0 %5222
      %5224 = vrot.lane.b32.xlu0 %v4557, 64
      %v5225 = vpop.permute.xlu0 %5224
      %5226 = vrot.lane.b32.xlu0 %v4558, 64
      %v5227 = vpop.permute.xlu0 %5226
      %5228 = vrot.lane.b32.xlu0 %v4559, 64
      %v5229 = vpop.permute.xlu0 %5228
      %5230 = vrot.lane.b32.xlu0 %v4560, 64
      %v5231 = vpop.permute.xlu0 %5230
      %5232 = vrot.lane.b32.xlu0 %v4561, 64
      %v5233 = vpop.permute.xlu0 %5232
      %5298 = vrot.lane.b32.xlu0 %v4562, 96
      %v5299 = vpop.permute.xlu0 %5298
      %5300 = vrot.lane.b32.xlu0 %v4563, 96
      %v5301 = vpop.permute.xlu0 %5300
      %5302 = vrot.lane.b32.xlu0 %v4564, 96
      %v5303 = vpop.permute.xlu0 %5302
      %5304 = vrot.lane.b32.xlu0 %v4565, 96
      %v5305 = vpop.permute.xlu0 %5304
      %5306 = vrot.lane.b32.xlu0 %v4566, 96
      %v5307 = vpop.permute.xlu0 %5306
      %5308 = vrot.lane.b32.xlu0 %v4567, 96
      %v5309 = vpop.permute.xlu0 %5308
      %5310 = vrot.lane.b32.xlu0 %v4568, 96
      %v5311 = vpop.permute.xlu0 %5310
      %5312 = vrot.lane.b32.xlu0 %v4569, 96
      %v5313 = vpop.permute.xlu0 %5312
      %5314 = vrot.lane.b32.xlu0 %v4570, 96
      %v5315 = vpop.permute.xlu0 %5314
      %5316 = vrot.lane.b32.xlu0 %v4571, 96
      %v5317 = vpop.permute.xlu0 %5316
      %5318 = vrot.lane.b32.xlu0 %v4572, 96
      %v5319 = vpop.permute.xlu0 %5318
      %5320 = vrot.lane.b32.xlu0 %v4573, 96
      %v5321 = vpop.permute.xlu0 %5320
      %5322 = vrot.lane.b32.xlu0 %v4574, 96
      %v5323 = vpop.permute.xlu0 %5322
      %5324 = vrot.lane.b32.xlu0 %v4575, 96
      %v5325 = vpop.permute.xlu0 %5324
      %5326 = vrot.lane.b32.xlu0 %v4576, 96
      %v5327 = vpop.permute.xlu0 %5326
      %5328 = vrot.lane.b32.xlu0 %v4577, 96
      %v5329 = vpop.permute.xlu0 %5328
      %5330 = vrot.lane.b32.xlu0 %v4578, 96
      %v5331 = vpop.permute.xlu0 %5330
      %5332 = vrot.lane.b32.xlu0 %v4579, 96
      %v5333 = vpop.permute.xlu0 %5332
      %5334 = vrot.lane.b32.xlu0 %v4580, 96
      %v5335 = vpop.permute.xlu0 %5334
      %5336 = vrot.lane.b32.xlu0 %v4581, 96
      %v5337 = vpop.permute.xlu0 %5336
      %5338 = vrot.lane.b32.xlu0 %v4582, 96
      %v5339 = vpop.permute.xlu0 %5338
      %5340 = vrot.lane.b32.xlu0 %v4583, 96
      %v5341 = vpop.permute.xlu0 %5340
      %5342 = vrot.lane.b32.xlu0 %v4584, 96
      %v5343 = vpop.permute.xlu0 %5342
      %5344 = vrot.lane.b32.xlu0 %v4585, 96
      %v5345 = vpop.permute.xlu0 %5344
      %5346 = vrot.lane.b32.xlu0 %v4586, 96
      %v5347 = vpop.permute.xlu0 %5346
      %5348 = vrot.lane.b32.xlu0 %v4587, 96
      %v5349 = vpop.permute.xlu0 %5348
      %5350 = vrot.lane.b32.xlu0 %v4588, 96
      %v5351 = vpop.permute.xlu0 %5350
      %5352 = vrot.lane.b32.xlu0 %v4589, 96
      %v5353 = vpop.permute.xlu0 %5352
      %5354 = vrot.lane.b32.xlu0 %v4590, 96
      %v5355 = vpop.permute.xlu0 %5354
      %5356 = vrot.lane.b32.xlu0 %v4591, 96
      %v5357 = vpop.permute.xlu0 %5356
      %5358 = vrot.lane.b32.xlu0 %v4592, 96
      %v5359 = vpop.permute.xlu0 %5358
      %5360 = vrot.lane.b32.xlu0 %v4593, 96
      %v5361 = vpop.permute.xlu0 %5360
      %v5394 = vsel %vm335, %v4338, %v4659
      %v5395 = vsel %vm335, %v4339, %v4661
      %v5396 = vsel %vm335, %v4340, %v4663
      %v5397 = vsel %vm335, %v4341, %v4665
      %v5398 = vsel %vm335, %v4342, %v4667
      %v5399 = vsel %vm335, %v4343, %v4669
      %v5400 = vsel %vm335, %v4344, %v4671
      %v5401 = vsel %vm335, %v4345, %v4673
      %v5402 = vsel %vm335, %v4346, %v4675
      %v5403 = vsel %vm335, %v4347, %v4677
      %v5404 = vsel %vm335, %v4348, %v4679
      %v5405 = vsel %vm335, %v4349, %v4681
      %v5406 = vsel %vm335, %v4350, %v4683
      %v5407 = vsel %vm335, %v4351, %v4685
      %v5408 = vsel %vm335, %v4352, %v4687
      %v5409 = vsel %vm335, %v4353, %v4689
      %v5410 = vsel %vm335, %v4354, %v4691
      %v5411 = vsel %vm335, %v4355, %v4693
      %v5412 = vsel %vm335, %v4356, %v4695
      %v5413 = vsel %vm335, %v4357, %v4697
      %v5414 = vsel %vm335, %v4358, %v4699
      %v5415 = vsel %vm335, %v4359, %v4701
      %v5416 = vsel %vm335, %v4360, %v4703
      %v5417 = vsel %vm335, %v4361, %v4705
      %v5418 = vsel %vm335, %v4362, %v4707
      %v5419 = vsel %vm335, %v4363, %v4709
      %v5420 = vsel %vm335, %v4364, %v4711
      %v5421 = vsel %vm335, %v4365, %v4713
      %v5422 = vsel %vm335, %v4366, %v4715
      %v5423 = vsel %vm335, %v4367, %v4717
      %v5424 = vsel %vm335, %v4368, %v4719
      %v5425 = vsel %vm335, %v4369, %v4721
      %v5426 = vsel %vm3523, %v5394, %v4787
      %v5427 = vsel %vm3523, %v5395, %v4789
      %v5428 = vsel %vm3523, %v5396, %v4791
      %v5429 = vsel %vm3523, %v5397, %v4793
      %v5430 = vsel %vm3523, %v5398, %v4795
      %v5431 = vsel %vm3523, %v5399, %v4797
      %v5432 = vsel %vm3523, %v5400, %v4799
      %v5433 = vsel %vm3523, %v5401, %v4801
      %v5434 = vsel %vm3523, %v5402, %v4803
      %v5435 = vsel %vm3523, %v5403, %v4805
      %v5436 = vsel %vm3523, %v5404, %v4807
      %v5437 = vsel %vm3523, %v5405, %v4809
      %v5438 = vsel %vm3523, %v5406, %v4811
      %v5439 = vsel %vm3523, %v5407, %v4813
      %v5440 = vsel %vm3523, %v5408, %v4815
      %v5441 = vsel %vm3523, %v5409, %v4817
      %v5442 = vsel %vm3523, %v5410, %v4819
      %v5443 = vsel %vm3523, %v5411, %v4821
      %v5444 = vsel %vm3523, %v5412, %v4823
      %v5445 = vsel %vm3523, %v5413, %v4825
      %v5446 = vsel %vm3523, %v5414, %v4827
      %v5447 = vsel %vm3523, %v5415, %v4829
      %v5448 = vsel %vm3523, %v5416, %v4831
      %v5449 = vsel %vm3523, %v5417, %v4833
      %v5450 = vsel %vm3523, %v5418, %v4835
      %v5451 = vsel %vm3523, %v5419, %v4837
      %v5452 = vsel %vm3523, %v5420, %v4839
      %v5453 = vsel %vm3523, %v5421, %v4841
      %v5454 = vsel %vm3523, %v5422, %v4843
      %v5455 = vsel %vm3523, %v5423, %v4845
      %v5456 = vsel %vm3523, %v5424, %v4847
      %v5457 = vsel %vm3523, %v5425, %v4849
      %v5458 = vsel %vm3556, %v5426, %v4915
      %v5459 = vsel %vm3556, %v5427, %v4917
      %v5460 = vsel %vm3556, %v5428, %v4919
      %v5461 = vsel %vm3556, %v5429, %v4921
      %v5462 = vsel %vm3556, %v5430, %v4923
      %v5463 = vsel %vm3556, %v5431, %v4925
      %v5464 = vsel %vm3556, %v5432, %v4927
      %v5465 = vsel %vm3556, %v5433, %v4929
      %v5466 = vsel %vm3556, %v5434, %v4931
      %v5467 = vsel %vm3556, %v5435, %v4933
      %v5468 = vsel %vm3556, %v5436, %v4935
      %v5469 = vsel %vm3556, %v5437, %v4937
      %v5470 = vsel %vm3556, %v5438, %v4939
      %v5471 = vsel %vm3556, %v5439, %v4941
      %v5472 = vsel %vm3556, %v5440, %v4943
      %v5473 = vsel %vm3556, %v5441, %v4945
      %v5474 = vsel %vm3556, %v5442, %v4947
      %v5475 = vsel %vm3556, %v5443, %v4949
      %v5476 = vsel %vm3556, %v5444, %v4951
      %v5477 = vsel %vm3556, %v5445, %v4953
      %v5478 = vsel %vm3556, %v5446, %v4955
      %v5479 = vsel %vm3556, %v5447, %v4957
      %v5480 = vsel %vm3556, %v5448, %v4959
      %v5481 = vsel %vm3556, %v5449, %v4961
      %v5482 = vsel %vm3556, %v5450, %v4963
      %v5483 = vsel %vm3556, %v5451, %v4965
      %v5484 = vsel %vm3556, %v5452, %v4967
      %v5485 = vsel %vm3556, %v5453, %v4969
      %v5486 = vsel %vm3556, %v5454, %v4971
      %v5487 = vsel %vm3556, %v5455, %v4973
      %v5488 = vsel %vm3556, %v5456, %v4975
      %v5489 = vsel %vm3556, %v5457, %v4977
      %v5490 = vsel %vm335, %v4466, %v5043
      %v5491 = vsel %vm335, %v4467, %v5045
      %v5492 = vsel %vm335, %v4468, %v5047
      %v5493 = vsel %vm335, %v4469, %v5049
      %v5494 = vsel %vm335, %v4470, %v5051
      %v5495 = vsel %vm335, %v4471, %v5053
      %v5496 = vsel %vm335, %v4472, %v5055
      %v5497 = vsel %vm335, %v4473, %v5057
      %v5498 = vsel %vm335, %v4474, %v5059
      %v5499 = vsel %vm335, %v4475, %v5061
      %v5500 = vsel %vm335, %v4476, %v5063
      %v5501 = vsel %vm335, %v4477, %v5065
      %v5502 = vsel %vm335, %v4478, %v5067
      %v5503 = vsel %vm335, %v4479, %v5069
      %v5504 = vsel %vm335, %v4480, %v5071
      %v5505 = vsel %vm335, %v4481, %v5073
      %v5506 = vsel %vm335, %v4482, %v5075
      %v5507 = vsel %vm335, %v4483, %v5077
      %v5508 = vsel %vm335, %v4484, %v5079
      %v5509 = vsel %vm335, %v4485, %v5081
      %v5510 = vsel %vm335, %v4486, %v5083
      %v5511 = vsel %vm335, %v4487, %v5085
      %v5512 = vsel %vm335, %v4488, %v5087
      %v5513 = vsel %vm335, %v4489, %v5089
      %v5514 = vsel %vm335, %v4490, %v5091
      %v5515 = vsel %vm335, %v4491, %v5093
      %v5516 = vsel %vm335, %v4492, %v5095
      %v5517 = vsel %vm335, %v4493, %v5097
      %v5518 = vsel %vm335, %v4494, %v5099
      %v5519 = vsel %vm335, %v4495, %v5101
      %v5520 = vsel %vm335, %v4496, %v5103
      %v5521 = vsel %vm335, %v4497, %v5105
      %v5522 = vsel %vm3523, %v5490, %v5171
      %v5523 = vsel %vm3523, %v5491, %v5173
      %v5524 = vsel %vm3523, %v5492, %v5175
      %v5525 = vsel %vm3523, %v5493, %v5177
      %v5526 = vsel %vm3523, %v5494, %v5179
      %v5527 = vsel %vm3523, %v5495, %v5181
      %v5528 = vsel %vm3523, %v5496, %v5183
      %v5529 = vsel %vm3523, %v5497, %v5185
      %v5530 = vsel %vm3523, %v5498, %v5187
      %v5531 = vsel %vm3523, %v5499, %v5189
      %v5532 = vsel %vm3523, %v5500, %v5191
      %v5533 = vsel %vm3523, %v5501, %v5193
      %v5534 = vsel %vm3523, %v5502, %v5195
      %v5535 = vsel %vm3523, %v5503, %v5197
      %v5536 = vsel %vm3523, %v5504, %v5199
      %v5537 = vsel %vm3523, %v5505, %v5201
      %v5538 = vsel %vm3523, %v5506, %v5203
      %v5539 = vsel %vm3523, %v5507, %v5205
      %v5540 = vsel %vm3523, %v5508, %v5207
      %v5541 = vsel %vm3523, %v5509, %v5209
      %v5542 = vsel %vm3523, %v5510, %v5211
      %v5543 = vsel %vm3523, %v5511, %v5213
      %v5544 = vsel %vm3523, %v5512, %v5215
      %v5545 = vsel %vm3523, %v5513, %v5217
      %v5546 = vsel %vm3523, %v5514, %v5219
      %v5547 = vsel %vm3523, %v5515, %v5221
      %v5548 = vsel %vm3523, %v5516, %v5223
      %v5549 = vsel %vm3523, %v5517, %v5225
      %v5550 = vsel %vm3523, %v5518, %v5227
      %v5551 = vsel %vm3523, %v5519, %v5229
      %v5552 = vsel %vm3523, %v5520, %v5231
      %v5553 = vsel %vm3523, %v5521, %v5233
      %v5554 = vsel %vm3556, %v5522, %v5299
      %v5555 = vsel %vm3556, %v5523, %v5301
      %v5556 = vsel %vm3556, %v5524, %v5303
      %v5557 = vsel %vm3556, %v5525, %v5305
      %v5558 = vsel %vm3556, %v5526, %v5307
      %v5559 = vsel %vm3556, %v5527, %v5309
      %v5560 = vsel %vm3556, %v5528, %v5311
      %v5561 = vsel %vm3556, %v5529, %v5313
      %v5562 = vsel %vm3556, %v5530, %v5315
      %v5563 = vsel %vm3556, %v5531, %v5317
      %v5564 = vsel %vm3556, %v5532, %v5319
      %v5565 = vsel %vm3556, %v5533, %v5321
      %v5566 = vsel %vm3556, %v5534, %v5323
      %v5567 = vsel %vm3556, %v5535, %v5325
      %v5568 = vsel %vm3556, %v5536, %v5327
      %v5569 = vsel %vm3556, %v5537, %v5329
      %v5570 = vsel %vm3556, %v5538, %v5331
      %v5571 = vsel %vm3556, %v5539, %v5333
      %v5572 = vsel %vm3556, %v5540, %v5335
      %v5573 = vsel %vm3556, %v5541, %v5337
      %v5574 = vsel %vm3556, %v5542, %v5339
      %v5575 = vsel %vm3556, %v5543, %v5341
      %v5576 = vsel %vm3556, %v5544, %v5343
      %v5577 = vsel %vm3556, %v5545, %v5345
      %v5578 = vsel %vm3556, %v5546, %v5347
      %v5579 = vsel %vm3556, %v5547, %v5349
      %v5580 = vsel %vm3556, %v5548, %v5351
      %v5581 = vsel %vm3556, %v5549, %v5353
      %v5582 = vsel %vm3556, %v5550, %v5355
      %v5583 = vsel %vm3556, %v5551, %v5357
      %v5584 = vsel %vm3556, %v5552, %v5359
      %v5585 = vsel %vm3556, %v5553, %v5361
      %v5586 = vld [vmem:[%s5] sm:$0xff]
      %v5587 = vld [vmem:[%s5 + $0x8] sm:$0xff]
      %v5588 = vld [vmem:[%s5 + $0x10] sm:$0xff]
      %v5589 = vld [vmem:[%s5 + $0x18] sm:$0xff]
      %v5590 = vld [vmem:[%s5 + $0x20] sm:$0xff]
      %v5591 = vld [vmem:[%s5 + $0x28] sm:$0xff]
      %v5592 = vld [vmem:[%s5 + $0x30] sm:$0xff]
      %v5593 = vld [vmem:[%s5 + $0x38] sm:$0xff]
      %v5594 = vld [vmem:[%s5 + $0x40] sm:$0xff]
      %v5595 = vld [vmem:[%s5 + $0x48] sm:$0xff]
      %v5596 = vld [vmem:[%s5 + $0x50] sm:$0xff]
      %v5597 = vld [vmem:[%s5 + $0x58] sm:$0xff]
      %v5598 = vld [vmem:[%s5 + $0x60] sm:$0xff]
      %v5599 = vld [vmem:[%s5 + $0x68] sm:$0xff]
      %v5600 = vld [vmem:[%s5 + $0x70] sm:$0xff]
      %v5601 = vld [vmem:[%s5 + $0x78] sm:$0xff]
      %v5602 = vld [vmem:[%s5 + $0x80] sm:$0xff]
      %v5603 = vld [vmem:[%s5 + $0x88] sm:$0xff]
      %v5604 = vld [vmem:[%s5 + $0x90] sm:$0xff]
      %v5605 = vld [vmem:[%s5 + $0x98] sm:$0xff]
      %v5606 = vld [vmem:[%s5 + $0xa0] sm:$0xff]
      %v5607 = vld [vmem:[%s5 + $0xa8] sm:$0xff]
      %v5608 = vld [vmem:[%s5 + $0xb0] sm:$0xff]
      %v5609 = vld [vmem:[%s5 + $0xb8] sm:$0xff]
      %v5610 = vld [vmem:[%s5 + $0xc0] sm:$0xff]
      %v5611 = vld [vmem:[%s5 + $0xc8] sm:$0xff]
      %v5612 = vld [vmem:[%s5 + $0xd0] sm:$0xff]
      %v5613 = vld [vmem:[%s5 + $0xd8] sm:$0xff]
      %v5614 = vld [vmem:[%s5 + $0xe0] sm:$0xff]
      %v5615 = vld [vmem:[%s5 + $0xe8] sm:$0xff]
      %v5616 = vld [vmem:[%s5 + $0xf0] sm:$0xff]
      %v5617 = vld [vmem:[%s5 + $0xf8] sm:$0xff]
      %v5618 = vld [vmem:[%s5 + $0x100] sm:$0xff]
      %v5619 = vld [vmem:[%s5 + $0x108] sm:$0xff]
      %v5620 = vld [vmem:[%s5 + $0x110] sm:$0xff]
      %v5621 = vld [vmem:[%s5 + $0x118] sm:$0xff]
      %v5622 = vld [vmem:[%s6] sm:$0x1]
      %v5624 = vlaneseq
      %v5625 = vshrl.u32 %v5624, 7
      %v5626 = vsub.s32 0, %v5625
      %v5627 = vrot.slane %v5622, %v5626
      %v5630 = vsel %vm335, %v4594, 0
      %v5633 = vsel %vm335, %v4595, 0
      %v5636 = vsel %vm335, %v4596, 0
      %v5639 = vsel %vm335, %v4597, 0
      %v5642 = vsel %vm335, %v4598, 0
      %v5645 = vsel %vm335, %v4599, 0
      %v5648 = vsel %vm335, %v4600, 0
      %v5651 = vsel %vm335, %v4601, 0
      %v5654 = vsel %vm335, %v4602, 0
      %v5657 = vsel %vm335, %v4603, 0
      %v5660 = vsel %vm335, %v4604, 0
      %v5663 = vsel %vm335, %v4605, 0
      %v5666 = vsel %vm335, %v4606, 0
      %v5669 = vsel %vm335, %v4607, 0
      %v5672 = vsel %vm335, %v4608, 0
      %v5675 = vsel %vm335, %v4609, 0
      %v5678 = vsel %vm335, %v4610, 0
      %v5681 = vsel %vm335, %v4611, 0
      %v5684 = vsel %vm335, %v4612, 0
      %v5687 = vsel %vm335, %v4613, 0
      %v5690 = vsel %vm335, %v4614, 0
      %v5693 = vsel %vm335, %v4615, 0
      %v5696 = vsel %vm335, %v4616, 0
      %v5699 = vsel %vm335, %v4617, 0
      %v5702 = vsel %vm335, %v4618, 0
      %v5705 = vsel %vm335, %v4619, 0
      %v5708 = vsel %vm335, %v4620, 0
      %v5711 = vsel %vm335, %v4621, 0
      %v5714 = vsel %vm335, %v4622, 0
      %v5717 = vsel %vm335, %v4623, 0
      %v5720 = vsel %vm335, %v4624, 0
      %v5723 = vsel %vm335, %v4625, 0
      %5725 = vmatprep.subr.mxu0 0.0
      %5726 = vmatpush1.msra.mxu0 %v5586
      %5727 = vmatprep.subr.mxu0 0.0
      %5728 = vmatpush1.msra.mxu0 %v5587
      %5729 = vmatprep.subr.mxu0 0.0
      %5730 = vmatpush1.msra.mxu0 %v5588
      %5731 = vmatprep.subr.mxu0 0.0
      %5732 = vmatpush1.msra.mxu0 %v5589
      %5733 = vmatprep.subr.mxu0 0.0
      %5734 = vmatpush1.msra.mxu0 %v5590
      %5735 = vmatprep.subr.mxu0 0.0
      %5736 = vmatpush1.msra.mxu0 %v5591
      %5737 = vmatprep.subr.mxu0 0.0
      %5738 = vmatpush1.msra.mxu0 %v5592
      %5739 = vmatprep.subr.mxu0 0.0
      %5740 = vmatpush1.msra.mxu0 %v5593
      %5741 = vmatprep.subr.mxu0 0.0
      %5742 = vmatpush1.msra.mxu0 %v5594
      %5743 = vmatprep.subr.mxu0 0.0
      %5744 = vmatpush1.msra.mxu0 %v5595
      %5745 = vmatprep.subr.mxu0 0.0
      %5746 = vmatpush1.msra.mxu0 %v5596
      %5747 = vmatprep.subr.mxu0 0.0
      %5748 = vmatpush1.msra.mxu0 %v5597
      %5749 = vmatprep.subr.mxu0 0.0
      %5750 = vmatpush1.msra.mxu0 %v5598
      %5751 = vmatprep.subr.mxu0 0.0
      %5752 = vmatpush1.msra.mxu0 %v5599
      %5753 = vmatprep.subr.mxu0 0.0
      %5754 = vmatpush1.msra.mxu0 %v5600
      %5755 = vmatprep.subr.mxu0 0.0
      %5756 = vmatpush1.msra.mxu0 %v5601
      %5757 = vmatprep.subr.mxu0 0.0
      %5758 = vmatpush1.msra.mxu0 %v5602
      %5759 = vmatprep.subr.mxu0 0.0
      %5760 = vmatpush1.msra.mxu0 %v5603
      %5761 = vmatprep.subr.mxu0 0.0
      %5762 = vmatpush1.msra.mxu0 %v5604
      %5763 = vmatprep.subr.mxu0 0.0
      %5764 = vmatpush1.msra.mxu0 %v5605
      %5765 = vmatprep.subr.mxu0 0.0
      %5766 = vmatpush1.msra.mxu0 %v5606
      %5767 = vmatprep.subr.mxu0 0.0
      %5768 = vmatpush1.msra.mxu0 %v5607
      %5769 = vmatprep.subr.mxu0 0.0
      %5770 = vmatpush1.msra.mxu0 %v5608
      %5771 = vmatprep.subr.mxu0 0.0
      %5772 = vmatpush1.msra.mxu0 %v5609
      %5773 = vmatprep.subr.mxu0 0.0
      %5774 = vmatpush1.msra.mxu0 %v5610
      %5775 = vmatprep.subr.mxu0 0.0
      %5776 = vmatpush1.msra.mxu0 %v5611
      %5777 = vmatprep.subr.mxu0 0.0
      %5778 = vmatpush1.msra.mxu0 %v5612
      %5779 = vmatprep.subr.mxu0 0.0
      %5780 = vmatpush1.msra.mxu0 %v5613
      %5781 = vmatprep.subr.mxu0 0.0
      %5782 = vmatpush1.msra.mxu0 %v5614
      %5783 = vmatprep.subr.mxu0 0.0
      %5784 = vmatpush1.msra.mxu0 %v5615
      %5785 = vmatprep.subr.mxu0 0.0
      %5786 = vmatpush1.msra.mxu0 %v5616
      %5787 = vmatprep.subr.mxu0 0.0
      %5788 = vmatpush1.msra.mxu0 %v5617
      %5789 = vmatprep.mubr.f32.mxu0 %v5554
      %5790 = vmatmul.mubr.f32.gmra.mrb[0].mxu0 %v5458
      %v5791 = vpop.f32.mrb[0].mxu0
      %v5792 = vadd.f32 %v5627, %v5791
      %v5793 = vpop.f32.mrb[0].mxu0
      %5794 = vmatprep.mubr.f32.mxu0 %v5555
      %5795 = vmatmul.mubr.f32.gmra.mrb[0].mxu0 %v5459
      %v5796 = vpop.f32.mrb[0].mxu0
      %v5797 = vadd.f32 %v5627, %v5796
      %v5798 = vpop.f32.mrb[0].mxu0
      %5799 = vmatprep.mubr.f32.mxu0 %v5556
      %5800 = vmatmul.mubr.f32.gmra.mrb[0].mxu0 %v5460
      %v5801 = vpop.f32.mrb[0].mxu0
      %v5802 = vadd.f32 %v5627, %v5801
      %v5803 = vpop.f32.mrb[0].mxu0
      %5804 = vmatprep.mubr.f32.mxu0 %v5557
      %5805 = vmatmul.mubr.f32.gmra.mrb[0].mxu0 %v5461
      %v5806 = vpop.f32.mrb[0].mxu0
      %v5807 = vadd.f32 %v5627, %v5806
      %v5808 = vpop.f32.mrb[0].mxu0
      %5809 = vmatprep.mubr.f32.mxu0 %v5558
      %5810 = vmatmul.mubr.f32.gmra.mrb[0].mxu0 %v5462
      %v5811 = vpop.f32.mrb[0].mxu0
      %v5812 = vadd.f32 %v5627, %v5811
      %v5813 = vpop.f32.mrb[0].mxu0
      %5814 = vmatprep.mubr.f32.mxu0 %v5559
      %5815 = vmatmul.mubr.f32.gmra.mrb[0].mxu0 %v5463
      %v5816 = vpop.f32.mrb[0].mxu0
      %v5817 = vadd.f32 %v5627, %v5816
      %v5818 = vpop.f32.mrb[0].mxu0
      %5819 = vmatprep.mubr.f32.mxu0 %v5560
      %5820 = vmatmul.mubr.f32.gmra.mrb[0].mxu0 %v5464
      %v5821 = vpop.f32.mrb[0].mxu0
      %v5822 = vadd.f32 %v5627, %v5821
      %v5823 = vpop.f32.mrb[0].mxu0
      %5824 = vmatprep.mubr.f32.mxu0 %v5561
      %5825 = vmatmul.mubr.f32.gmra.mrb[0].mxu0 %v5465
      %v5826 = vpop.f32.mrb[0].mxu0
      %v5827 = vadd.f32 %v5627, %v5826
      %v5828 = vpop.f32.mrb[0].mxu0
      %5829 = vmatprep.mubr.f32.mxu0 %v5562
      %5830 = vmatmul.mubr.f32.gmra.mrb[0].mxu0 %v5466
      %v5831 = vpop.f32.mrb[0].mxu0
      %v5832 = vadd.f32 %v5627, %v5831
      %v5833 = vpop.f32.mrb[0].mxu0
      %5834 = vmatprep.mubr.f32.mxu0 %v5563
      %5835 = vmatmul.mubr.f32.gmra.mrb[0].mxu0 %v5467
      %v5836 = vpop.f32.mrb[0].mxu0
      %v5837 = vadd.f32 %v5627, %v5836
      %v5838 = vpop.f32.mrb[0].mxu0
      %5839 = vmatprep.mubr.f32.mxu0 %v5564
      %5840 = vmatmul.mubr.f32.gmra.mrb[0].mxu0 %v5468
      %v5841 = vpop.f32.mrb[0].mxu0
      %v5842 = vadd.f32 %v5627, %v5841
      %v5843 = vpop.f32.mrb[0].mxu0
      %5844 = vmatprep.mubr.f32.mxu0 %v5565
      %5845 = vmatmul.mubr.f32.gmra.mrb[0].mxu0 %v5469
      %v5846 = vpop.f32.mrb[0].mxu0
      %v5847 = vadd.f32 %v5627, %v5846
      %v5848 = vpop.f32.mrb[0].mxu0
      %5849 = vmatprep.mubr.f32.mxu0 %v5566
      %5850 = vmatmul.mubr.f32.gmra.mrb[0].mxu0 %v5470
      %v5851 = vpop.f32.mrb[0].mxu0
      %v5852 = vadd.f32 %v5627, %v5851
      %v5853 = vpop.f32.mrb[0].mxu0
      %5854 = vmatprep.mubr.f32.mxu0 %v5567
      %5855 = vmatmul.mubr.f32.gmra.mrb[0].mxu0 %v5471
      %v5856 = vpop.f32.mrb[0].mxu0
      %v5857 = vadd.f32 %v5627, %v5856
      %v5858 = vpop.f32.mrb[0].mxu0
      %5859 = vmatprep.mubr.f32.mxu0 %v5568
      %5860 = vmatmul.mubr.f32.gmra.mrb[0].mxu0 %v5472
      %v5861 = vpop.f32.mrb[0].mxu0
      %v5862 = vadd.f32 %v5627, %v5861
      %v5863 = vpop.f32.mrb[0].mxu0
      %5864 = vmatprep.mubr.f32.mxu0 %v5569
      %5865 = vmatmul.mubr.f32.gmra.mrb[0].mxu0 %v5473
      %v5866 = vpop.f32.mrb[0].mxu0
      %v5867 = vadd.f32 %v5627, %v5866
      %v5868 = vpop.f32.mrb[0].mxu0
      %5869 = vmatprep.mubr.f32.mxu0 %v5570
      %5870 = vmatmul.mubr.f32.gmra.mrb[0].mxu0 %v5474
      %v5871 = vpop.f32.mrb[0].mxu0
      %v5872 = vadd.f32 %v5627, %v5871
      %v5873 = vpop.f32.mrb[0].mxu0
      %5874 = vmatprep.mubr.f32.mxu0 %v5571
      %5875 = vmatmul.mubr.f32.gmra.mrb[0].mxu0 %v5475
      %v5876 = vpop.f32.mrb[0].mxu0
      %v5877 = vadd.f32 %v5627, %v5876
      %v5878 = vpop.f32.mrb[0].mxu0
      %5879 = vmatprep.mubr.f32.mxu0 %v5572
      %5880 = vmatmul.mubr.f32.gmra.mrb[0].mxu0 %v5476
      %v5881 = vpop.f32.mrb[0].mxu0
      %v5882 = vadd.f32 %v5627, %v5881
      %v5883 = vpop.f32.mrb[0].mxu0
      %5884 = vmatprep.mubr.f32.mxu0 %v5573
      %5885 = vmatmul.mubr.f32.gmra.mrb[0].mxu0 %v5477
      %v5886 = vpop.f32.mrb[0].mxu0
      %v5887 = vadd.f32 %v5627, %v5886
      %v5888 = vpop.f32.mrb[0].mxu0
      %5889 = vmatprep.mubr.f32.mxu0 %v5574
      %5890 = vmatmul.mubr.f32.gmra.mrb[0].mxu0 %v5478
      %v5891 = vpop.f32.mrb[0].mxu0
      %v5892 = vadd.f32 %v5627, %v5891
      %v5893 = vpop.f32.mrb[0].mxu0
      %5894 = vmatprep.mubr.f32.mxu0 %v5575
      %5895 = vmatmul.mubr.f32.gmra.mrb[0].mxu0 %v5479
      %v5896 = vpop.f32.mrb[0].mxu0
      %v5897 = vadd.f32 %v5627, %v5896
      %v5898 = vpop.f32.mrb[0].mxu0
      %5899 = vmatprep.mubr.f32.mxu0 %v5576
      %5900 = vmatmul.mubr.f32.gmra.mrb[0].mxu0 %v5480
      %v5901 = vpop.f32.mrb[0].mxu0
      %v5902 = vadd.f32 %v5627, %v5901
      %v5903 = vpop.f32.mrb[0].mxu0
      %5904 = vmatprep.mubr.f32.mxu0 %v5577
      %5905 = vmatmul.mubr.f32.gmra.mrb[0].mxu0 %v5481
      %v5906 = vpop.f32.mrb[0].mxu0
      %v5907 = vadd.f32 %v5627, %v5906
      %v5908 = vpop.f32.mrb[0].mxu0
      %5909 = vmatprep.mubr.f32.mxu0 %v5578
      %5910 = vmatmul.mubr.f32.gmra.mrb[0].mxu0 %v5482
      %v5911 = vpop.f32.mrb[0].mxu0
      %v5912 = vadd.f32 %v5627, %v5911
      %v5913 = vpop.f32.mrb[0].mxu0
      %5914 = vmatprep.mubr.f32.mxu0 %v5579
      %5915 = vmatmul.mubr.f32.gmra.mrb[0].mxu0 %v5483
      %v5916 = vpop.f32.mrb[0].mxu0
      %v5917 = vadd.f32 %v5627, %v5916
      %v5918 = vpop.f32.mrb[0].mxu0
      %5919 = vmatprep.mubr.f32.mxu0 %v5580
      %5920 = vmatmul.mubr.f32.gmra.mrb[0].mxu0 %v5484
      %v5921 = vpop.f32.mrb[0].mxu0
      %v5922 = vadd.f32 %v5627, %v5921
      %v5923 = vpop.f32.mrb[0].mxu0
      %5924 = vmatprep.mubr.f32.mxu0 %v5581
      %5925 = vmatmul.mubr.f32.gmra.mrb[0].mxu0 %v5485
      %v5926 = vpop.f32.mrb[0].mxu0
      %v5927 = vadd.f32 %v5627, %v5926
      %v5928 = vpop.f32.mrb[0].mxu0
      %5929 = vmatprep.mubr.f32.mxu0 %v5582
      %5930 = vmatmul.mubr.f32.gmra.mrb[0].mxu0 %v5486
      %v5931 = vpop.f32.mrb[0].mxu0
      %v5932 = vadd.f32 %v5627, %v5931
      %v5933 = vpop.f32.mrb[0].mxu0
      %5934 = vmatprep.mubr.f32.mxu0 %v5583
      %5935 = vmatmul.mubr.f32.gmra.mrb[0].mxu0 %v5487
      %v5936 = vpop.f32.mrb[0].mxu0
      %v5937 = vadd.f32 %v5627, %v5936
      %v5938 = vpop.f32.mrb[0].mxu0
      %5939 = vmatprep.mubr.f32.mxu0 %v5584
      %5940 = vmatmul.mubr.f32.gmra.mrb[0].mxu0 %v5488
      %v5941 = vpop.f32.mrb[0].mxu0
      %v5942 = vadd.f32 %v5627, %v5941
      %v5943 = vpop.f32.mrb[0].mxu0
      %5944 = vmatprep.mubr.f32.mxu0 %v5585
      %5945 = vmatmul.mubr.f32.gmra.mrb[0].mxu0 %v5489
      %v5946 = vpop.f32.mrb[0].mxu0
      %v5947 = vadd.f32 %v5627, %v5946
      %v5948 = vpop.f32.mrb[0].mxu0
      %5949 = vdwg.mxu0
      %5950 = vmatprep.subr.mxu0 0.0
      %5951 = vmatpush1.msra.mxu0 %v5618
      %5952 = vmatprep.subr.mxu0 0.0
      %5953 = vmatpush1.msra.mxu0 %v5619
      %5954 = vmatprep.subr.mxu0 0.0
      %5955 = vmatpush1.msra.mxu0 %v5620
      %5956 = vmatprep.subr.mxu0 0.0
      %5957 = vmatpush1.msra.mxu0 %v5621
      %5958 = vmatprep.subr.mxu0 0.0
      %5959 = vmatpush1.msra.mxu0 0.0
      %5960 = vmatprep.subr.mxu0 0.0
      %5961 = vmatpush1.msra.mxu0 0.0
      %5962 = vmatprep.subr.mxu0 0.0
      %5963 = vmatpush1.msra.mxu0 0.0
      %5964 = vmatprep.subr.mxu0 0.0
      %5965 = vmatpush1.msra.mxu0 0.0
      %5966 = vmatprep.subr.mxu0 0.0
      %5967 = vmatpush1.msra.mxu0 0.0
      %5968 = vmatprep.subr.mxu0 0.0
      %5969 = vmatpush1.msra.mxu0 0.0
      %5970 = vmatprep.subr.mxu0 0.0
      %5971 = vmatpush1.msra.mxu0 0.0
      %5972 = vmatprep.subr.mxu0 0.0
      %5973 = vmatpush1.msra.mxu0 0.0
      %5974 = vmatprep.subr.mxu0 0.0
      %5975 = vmatpush1.msra.mxu0 0.0
      %5976 = vmatprep.subr.mxu0 0.0
      %5977 = vmatpush1.msra.mxu0 0.0
      %5978 = vmatprep.subr.mxu0 0.0
      %5979 = vmatpush1.msra.mxu0 0.0
      %5980 = vmatprep.subr.mxu0 0.0
      %5981 = vmatpush1.msra.mxu0 0.0
      %5982 = vmatprep.subr.mxu0 0.0
      %5983 = vmatpush1.msra.mxu0 0.0
      %5984 = vmatprep.subr.mxu0 0.0
      %5985 = vmatpush1.msra.mxu0 0.0
      %5986 = vmatprep.subr.mxu0 0.0
      %5987 = vmatpush1.msra.mxu0 0.0
      %5988 = vmatprep.subr.mxu0 0.0
      %5989 = vmatpush1.msra.mxu0 0.0
      %5990 = vmatprep.subr.mxu0 0.0
      %5991 = vmatpush1.msra.mxu0 0.0
      %5992 = vmatprep.subr.mxu0 0.0
      %5993 = vmatpush1.msra.mxu0 0.0
      %5994 = vmatprep.subr.mxu0 0.0
      %5995 = vmatpush1.msra.mxu0 0.0
      %5996 = vmatprep.subr.mxu0 0.0
      %5997 = vmatpush1.msra.mxu0 0.0
      %5998 = vmatprep.subr.mxu0 0.0
      %5999 = vmatpush1.msra.mxu0 0.0
      %6000 = vmatprep.subr.mxu0 0.0
      %6001 = vmatpush1.msra.mxu0 0.0
      %6002 = vmatprep.subr.mxu0 0.0
      %6003 = vmatpush1.msra.mxu0 0.0
      %6004 = vmatprep.subr.mxu0 0.0
      %6005 = vmatpush1.msra.mxu0 0.0
      %6006 = vmatprep.subr.mxu0 0.0
      %6007 = vmatpush1.msra.mxu0 0.0
      %6008 = vmatprep.subr.mxu0 0.0
      %6009 = vmatpush1.msra.mxu0 0.0
      %6010 = vmatprep.subr.mxu0 0.0
      %6011 = vmatpush1.msra.mxu0 0.0
      %6012 = vmatprep.subr.mxu0 0.0
      %6013 = vmatpush1.msra.mxu0 0.0
      %6014 = vmatprep.mubr.f32.mxu0 0.0
      %6015 = vmatmul.mubr.f32.gmra.mrb[0].mxu0 %v5630
      %v6016 = vpop.f32.mrb[0].mxu0
      %v6017 = vadd.f32 %v5792, %v6016
      %v6018 = vpop.f32.mrb[0].mxu0
      %6019 = vmatprep.mubr.f32.mxu0 0.0
      %6020 = vmatmul.mubr.f32.gmra.mrb[0].mxu0 %v5633
      %v6021 = vpop.f32.mrb[0].mxu0
      %v6022 = vadd.f32 %v5797, %v6021
      %v6023 = vpop.f32.mrb[0].mxu0
      %6024 = vmatprep.mubr.f32.mxu0 0.0
      %6025 = vmatmul.mubr.f32.gmra.mrb[0].mxu0 %v5636
      %v6026 = vpop.f32.mrb[0].mxu0
      %v6027 = vadd.f32 %v5802, %v6026
      %v6028 = vpop.f32.mrb[0].mxu0
      %6029 = vmatprep.mubr.f32.mxu0 0.0
      %6030 = vmatmul.mubr.f32.gmra.mrb[0].mxu0 %v5639
      %v6031 = vpop.f32.mrb[0].mxu0
      %v6032 = vadd.f32 %v5807, %v6031
      %v6033 = vpop.f32.mrb[0].mxu0
      %6034 = vmatprep.mubr.f32.mxu0 0.0
      %6035 = vmatmul.mubr.f32.gmra.mrb[0].mxu0 %v5642
      %v6036 = vpop.f32.mrb[0].mxu0
      %v6037 = vadd.f32 %v5812, %v6036
      %v6038 = vpop.f32.mrb[0].mxu0
      %6039 = vmatprep.mubr.f32.mxu0 0.0
      %6040 = vmatmul.mubr.f32.gmra.mrb[0].mxu0 %v5645
      %v6041 = vpop.f32.mrb[0].mxu0
      %v6042 = vadd.f32 %v5817, %v6041
      %v6043 = vpop.f32.mrb[0].mxu0
      %6044 = vmatprep.mubr.f32.mxu0 0.0
      %6045 = vmatmul.mubr.f32.gmra.mrb[0].mxu0 %v5648
      %v6046 = vpop.f32.mrb[0].mxu0
      %v6047 = vadd.f32 %v5822, %v6046
      %v6048 = vpop.f32.mrb[0].mxu0
      %6049 = vmatprep.mubr.f32.mxu0 0.0
      %6050 = vmatmul.mubr.f32.gmra.mrb[0].mxu0 %v5651
      %v6051 = vpop.f32.mrb[0].mxu0
      %v6052 = vadd.f32 %v5827, %v6051
      %v6053 = vpop.f32.mrb[0].mxu0
      %6054 = vmatprep.mubr.f32.mxu0 0.0
      %6055 = vmatmul.mubr.f32.gmra.mrb[0].mxu0 %v5654
      %v6056 = vpop.f32.mrb[0].mxu0
      %v6057 = vadd.f32 %v5832, %v6056
      %v6058 = vpop.f32.mrb[0].mxu0
      %6059 = vmatprep.mubr.f32.mxu0 0.0
      %6060 = vmatmul.mubr.f32.gmra.mrb[0].mxu0 %v5657
      %v6061 = vpop.f32.mrb[0].mxu0
      %v6062 = vadd.f32 %v5837, %v6061
      %v6063 = vpop.f32.mrb[0].mxu0
      %6064 = vmatprep.mubr.f32.mxu0 0.0
      %6065 = vmatmul.mubr.f32.gmra.mrb[0].mxu0 %v5660
      %v6066 = vpop.f32.mrb[0].mxu0
      %v6067 = vadd.f32 %v5842, %v6066
      %v6068 = vpop.f32.mrb[0].mxu0
      %6069 = vmatprep.mubr.f32.mxu0 0.0
      %6070 = vmatmul.mubr.f32.gmra.mrb[0].mxu0 %v5663
      %v6071 = vpop.f32.mrb[0].mxu0
      %v6072 = vadd.f32 %v5847, %v6071
      %v6073 = vpop.f32.mrb[0].mxu0
      %6074 = vmatprep.mubr.f32.mxu0 0.0
      %6075 = vmatmul.mubr.f32.gmra.mrb[0].mxu0 %v5666
      %v6076 = vpop.f32.mrb[0].mxu0
      %v6077 = vadd.f32 %v5852, %v6076
      %v6078 = vpop.f32.mrb[0].mxu0
      %6079 = vmatprep.mubr.f32.mxu0 0.0
      %6080 = vmatmul.mubr.f32.gmra.mrb[0].mxu0 %v5669
      %v6081 = vpop.f32.mrb[0].mxu0
      %v6082 = vadd.f32 %v5857, %v6081
      %v6083 = vpop.f32.mrb[0].mxu0
      %6084 = vmatprep.mubr.f32.mxu0 0.0
      %6085 = vmatmul.mubr.f32.gmra.mrb[0].mxu0 %v5672
      %v6086 = vpop.f32.mrb[0].mxu0
      %v6087 = vadd.f32 %v5862, %v6086
      %v6088 = vpop.f32.mrb[0].mxu0
      %6089 = vmatprep.mubr.f32.mxu0 0.0
      %6090 = vmatmul.mubr.f32.gmra.mrb[0].mxu0 %v5675
      %v6091 = vpop.f32.mrb[0].mxu0
      %v6092 = vadd.f32 %v5867, %v6091
      %v6093 = vpop.f32.mrb[0].mxu0
      %6094 = vmatprep.mubr.f32.mxu0 0.0
      %6095 = vmatmul.mubr.f32.gmra.mrb[0].mxu0 %v5678
      %v6096 = vpop.f32.mrb[0].mxu0
      %v6097 = vadd.f32 %v5872, %v6096
      %v6098 = vpop.f32.mrb[0].mxu0
      %6099 = vmatprep.mubr.f32.mxu0 0.0
      %6100 = vmatmul.mubr.f32.gmra.mrb[0].mxu0 %v5681
      %v6101 = vpop.f32.mrb[0].mxu0
      %v6102 = vadd.f32 %v5877, %v6101
      %v6103 = vpop.f32.mrb[0].mxu0
      %6104 = vmatprep.mubr.f32.mxu0 0.0
      %6105 = vmatmul.mubr.f32.gmra.mrb[0].mxu0 %v5684
      %v6106 = vpop.f32.mrb[0].mxu0
      %v6107 = vadd.f32 %v5882, %v6106
      %v6108 = vpop.f32.mrb[0].mxu0
      %6109 = vmatprep.mubr.f32.mxu0 0.0
      %6110 = vmatmul.mubr.f32.gmra.mrb[0].mxu0 %v5687
      %v6111 = vpop.f32.mrb[0].mxu0
      %v6112 = vadd.f32 %v5887, %v6111
      %v6113 = vpop.f32.mrb[0].mxu0
      %6114 = vmatprep.mubr.f32.mxu0 0.0
      %6115 = vmatmul.mubr.f32.gmra.mrb[0].mxu0 %v5690
      %v6116 = vpop.f32.mrb[0].mxu0
      %v6117 = vadd.f32 %v5892, %v6116
      %v6118 = vpop.f32.mrb[0].mxu0
      %6119 = vmatprep.mubr.f32.mxu0 0.0
      %6120 = vmatmul.mubr.f32.gmra.mrb[0].mxu0 %v5693
      %v6121 = vpop.f32.mrb[0].mxu0
      %v6122 = vadd.f32 %v5897, %v6121
      %v6123 = vpop.f32.mrb[0].mxu0
      %6124 = vmatprep.mubr.f32.mxu0 0.0
      %6125 = vmatmul.mubr.f32.gmra.mrb[0].mxu0 %v5696
      %v6126 = vpop.f32.mrb[0].mxu0
      %v6127 = vadd.f32 %v5902, %v6126
      %v6128 = vpop.f32.mrb[0].mxu0
      %6129 = vmatprep.mubr.f32.mxu0 0.0
      %6130 = vmatmul.mubr.f32.gmra.mrb[0].mxu0 %v5699
      %v6131 = vpop.f32.mrb[0].mxu0
      %v6132 = vadd.f32 %v5907, %v6131
      %v6133 = vpop.f32.mrb[0].mxu0
      %6134 = vmatprep.mubr.f32.mxu0 0.0
      %6135 = vmatmul.mubr.f32.gmra.mrb[0].mxu0 %v5702
      %v6136 = vpop.f32.mrb[0].mxu0
      %v6137 = vadd.f32 %v5912, %v6136
      %v6138 = vpop.f32.mrb[0].mxu0
      %6139 = vmatprep.mubr.f32.mxu0 0.0
      %6140 = vmatmul.mubr.f32.gmra.mrb[0].mxu0 %v5705
      %v6141 = vpop.f32.mrb[0].mxu0
      %v6142 = vadd.f32 %v5917, %v6141
      %v6143 = vpop.f32.mrb[0].mxu0
      %6144 = vmatprep.mubr.f32.mxu0 0.0
      %6145 = vmatmul.mubr.f32.gmra.mrb[0].mxu0 %v5708
      %v6146 = vpop.f32.mrb[0].mxu0
      %v6147 = vadd.f32 %v5922, %v6146
      %v6148 = vpop.f32.mrb[0].mxu0
      %6149 = vmatprep.mubr.f32.mxu0 0.0
      %6150 = vmatmul.mubr.f32.gmra.mrb[0].mxu0 %v5711
      %v6151 = vpop.f32.mrb[0].mxu0
      %v6152 = vadd.f32 %v5927, %v6151
      %v6153 = vpop.f32.mrb[0].mxu0
      %6154 = vmatprep.mubr.f32.mxu0 0.0
      %6155 = vmatmul.mubr.f32.gmra.mrb[0].mxu0 %v5714
      %v6156 = vpop.f32.mrb[0].mxu0
      %v6157 = vadd.f32 %v5932, %v6156
      %v6158 = vpop.f32.mrb[0].mxu0
      %6159 = vmatprep.mubr.f32.mxu0 0.0
      %6160 = vmatmul.mubr.f32.gmra.mrb[0].mxu0 %v5717
      %v6161 = vpop.f32.mrb[0].mxu0
      %v6162 = vadd.f32 %v5937, %v6161
      %v6163 = vpop.f32.mrb[0].mxu0
      %6164 = vmatprep.mubr.f32.mxu0 0.0
      %6165 = vmatmul.mubr.f32.gmra.mrb[0].mxu0 %v5720
      %v6166 = vpop.f32.mrb[0].mxu0
      %v6167 = vadd.f32 %v5942, %v6166
      %v6168 = vpop.f32.mrb[0].mxu0
      %6169 = vmatprep.mubr.f32.mxu0 0.0
      %6170 = vmatmul.mubr.f32.gmra.mrb[0].mxu0 %v5723
      %v6171 = vpop.f32.mrb[0].mxu0
      %v6172 = vadd.f32 %v5947, %v6171
      %v6173 = vpop.f32.mrb[0].mxu0
      %6174 = vdwg.mxu0
      %v6175 = vtanh.pop %v6017
      %v6176 = vtanh.pop %v6022
      %v6177 = vtanh.pop %v6027
      %v6178 = vtanh.pop %v6032
      %v6179 = vtanh.pop %v6037
      %v6180 = vtanh.pop %v6042
      %v6181 = vtanh.pop %v6047
      %v6182 = vtanh.pop %v6052
      %v6183 = vtanh.pop %v6057
      %v6184 = vtanh.pop %v6062
      %v6185 = vtanh.pop %v6067
      %v6186 = vtanh.pop %v6072
      %v6187 = vtanh.pop %v6077
      %v6188 = vtanh.pop %v6082
      %v6189 = vtanh.pop %v6087
      %v6190 = vtanh.pop %v6092
      %v6191 = vtanh.pop %v6097
      %v6192 = vtanh.pop %v6102
      %v6193 = vtanh.pop %v6107
      %v6194 = vtanh.pop %v6112
      %v6195 = vtanh.pop %v6117
      %v6196 = vtanh.pop %v6122
      %v6197 = vtanh.pop %v6127
      %v6198 = vtanh.pop %v6132
      %v6199 = vtanh.pop %v6137
      %v6200 = vtanh.pop %v6142
      %v6201 = vtanh.pop %v6147
      %v6202 = vtanh.pop %v6152
      %v6203 = vtanh.pop %v6157
      %v6204 = vtanh.pop %v6162
      %v6205 = vtanh.pop %v6167
      %v6206 = vtanh.pop %v6172
      %v6207 = vld [vmem:[%s273] sm:$0xff]
      %v6208 = vld [vmem:[%s273 + $0x8] sm:$0xff]
      %v6209 = vld [vmem:[%s273 + $0x10] sm:$0xff]
      %v6210 = vld [vmem:[%s273 + $0x18] sm:$0xff]
      %v6211 = vld [vmem:[%s273 + $0x20] sm:$0xff]
      %v6212 = vld [vmem:[%s273 + $0x28] sm:$0xff]
      %v6213 = vld [vmem:[%s273 + $0x30] sm:$0xff]
      %v6214 = vld [vmem:[%s273 + $0x38] sm:$0xff]
      %v6215 = vld [vmem:[%s273 + $0x40] sm:$0xff]
      %v6216 = vld [vmem:[%s273 + $0x48] sm:$0xff]
      %v6217 = vld [vmem:[%s273 + $0x50] sm:$0xff]
      %v6218 = vld [vmem:[%s273 + $0x58] sm:$0xff]
      %v6219 = vld [vmem:[%s273 + $0x60] sm:$0xff]
      %v6220 = vld [vmem:[%s273 + $0x68] sm:$0xff]
      %v6221 = vld [vmem:[%s273 + $0x70] sm:$0xff]
      %v6222 = vld [vmem:[%s273 + $0x78] sm:$0xff]
      %v6223 = vld [vmem:[%s273 + $0x80] sm:$0xff]
      %v6224 = vld [vmem:[%s273 + $0x88] sm:$0xff]
      %v6225 = vld [vmem:[%s273 + $0x90] sm:$0xff]
      %v6226 = vld [vmem:[%s273 + $0x98] sm:$0xff]
      %v6227 = vld [vmem:[%s273 + $0xa0] sm:$0xff]
      %v6228 = vld [vmem:[%s273 + $0xa8] sm:$0xff]
      %v6229 = vld [vmem:[%s273 + $0xb0] sm:$0xff]
      %v6230 = vld [vmem:[%s273 + $0xb8] sm:$0xff]
      %v6231 = vld [vmem:[%s273 + $0xc0] sm:$0xff]
      %v6232 = vld [vmem:[%s273 + $0xc8] sm:$0xff]
      %v6233 = vld [vmem:[%s273 + $0xd0] sm:$0xff]
      %v6234 = vld [vmem:[%s273 + $0xd8] sm:$0xff]
      %v6235 = vld [vmem:[%s273 + $0xe0] sm:$0xff]
      %v6236 = vld [vmem:[%s273 + $0xe8] sm:$0xff]
      %v6237 = vld [vmem:[%s273 + $0xf0] sm:$0xff]
      %v6238 = vld [vmem:[%s273 + $0xf8] sm:$0xff]
      %v6239 = vadd.f32 %v6207, %v6175
      %v6240 = vadd.f32 %v6208, %v6176
      %v6241 = vadd.f32 %v6209, %v6177
      %v6242 = vadd.f32 %v6210, %v6178
      %v6243 = vadd.f32 %v6211, %v6179
      %v6244 = vadd.f32 %v6212, %v6180
      %v6245 = vadd.f32 %v6213, %v6181
      %v6246 = vadd.f32 %v6214, %v6182
      %v6247 = vadd.f32 %v6215, %v6183
      %v6248 = vadd.f32 %v6216, %v6184
      %v6249 = vadd.f32 %v6217, %v6185
      %v6250 = vadd.f32 %v6218, %v6186
      %v6251 = vadd.f32 %v6219, %v6187
      %v6252 = vadd.f32 %v6220, %v6188
      %v6253 = vadd.f32 %v6221, %v6189
      %v6254 = vadd.f32 %v6222, %v6190
      %v6255 = vadd.f32 %v6223, %v6191
      %v6256 = vadd.f32 %v6224, %v6192
      %v6257 = vadd.f32 %v6225, %v6193
      %v6258 = vadd.f32 %v6226, %v6194
      %v6259 = vadd.f32 %v6227, %v6195
      %v6260 = vadd.f32 %v6228, %v6196
      %v6261 = vadd.f32 %v6229, %v6197
      %v6262 = vadd.f32 %v6230, %v6198
      %v6263 = vadd.f32 %v6231, %v6199
      %v6264 = vadd.f32 %v6232, %v6200
      %v6265 = vadd.f32 %v6233, %v6201
      %v6266 = vadd.f32 %v6234, %v6202
      %v6267 = vadd.f32 %v6235, %v6203
      %v6268 = vadd.f32 %v6236, %v6204
      %v6269 = vadd.f32 %v6237, %v6205
      %v6270 = vadd.f32 %v6238, %v6206
      %6271 = vst.msk [vmem:[%s278] sm:$0xff] %vm279, %v6239
      %6272 = vst.msk [vmem:[%s278 + $0x8] sm:$0xff] %vm279, %v6240
      %6273 = vst.msk [vmem:[%s278 + $0x10] sm:$0xff] %vm279, %v6241
      %6274 = vst.msk [vmem:[%s278 + $0x18] sm:$0xff] %vm279, %v6242
      %6275 = vst.msk [vmem:[%s278 + $0x20] sm:$0xff] %vm279, %v6243
      %6276 = vst.msk [vmem:[%s278 + $0x28] sm:$0xff] %vm279, %v6244
      %6277 = vst.msk [vmem:[%s278 + $0x30] sm:$0xff] %vm279, %v6245
      %6278 = vst.msk [vmem:[%s278 + $0x38] sm:$0xff] %vm279, %v6246
      %6279 = vst.msk [vmem:[%s278 + $0x40] sm:$0xff] %vm279, %v6247
      %6280 = vst.msk [vmem:[%s278 + $0x48] sm:$0xff] %vm279, %v6248
      %6281 = vst.msk [vmem:[%s278 + $0x50] sm:$0xff] %vm279, %v6249
      %6282 = vst.msk [vmem:[%s278 + $0x58] sm:$0xff] %vm279, %v6250
      %6283 = vst.msk [vmem:[%s278 + $0x60] sm:$0xff] %vm279, %v6251
      %6284 = vst.msk [vmem:[%s278 + $0x68] sm:$0xff] %vm279, %v6252
      %6285 = vst.msk [vmem:[%s278 + $0x70] sm:$0xff] %vm279, %v6253
      %6286 = vst.msk [vmem:[%s278 + $0x78] sm:$0xff] %vm279, %v6254
      %6287 = vst.msk [vmem:[%s278 + $0x80] sm:$0xff] %vm279, %v6255
      %6288 = vst.msk [vmem:[%s278 + $0x88] sm:$0xff] %vm279, %v6256
      %6289 = vst.msk [vmem:[%s278 + $0x90] sm:$0xff] %vm279, %v6257
      %6290 = vst.msk [vmem:[%s278 + $0x98] sm:$0xff] %vm279, %v6258
      %6291 = vst.msk [vmem:[%s278 + $0xa0] sm:$0xff] %vm279, %v6259
      %6292 = vst.msk [vmem:[%s278 + $0xa8] sm:$0xff] %vm279, %v6260
      %6293 = vst.msk [vmem:[%s278 + $0xb0] sm:$0xff] %vm279, %v6261
      %6294 = vst.msk [vmem:[%s278 + $0xb8] sm:$0xff] %vm279, %v6262
      %6295 = vst.msk [vmem:[%s278 + $0xc0] sm:$0xff] %vm279, %v6263
      %6296 = vst.msk [vmem:[%s278 + $0xc8] sm:$0xff] %vm279, %v6264
      %6297 = vst.msk [vmem:[%s278 + $0xd0] sm:$0xff] %vm279, %v6265
      %6298 = vst.msk [vmem:[%s278 + $0xd8] sm:$0xff] %vm279, %v6266
      %6299 = vst.msk [vmem:[%s278 + $0xe0] sm:$0xff] %vm279, %v6267
      %6300 = vst.msk [vmem:[%s278 + $0xe8] sm:$0xff] %vm279, %v6268
      %6301 = vst.msk [vmem:[%s278 + $0xf0] sm:$0xff] %vm279, %v6269
      %6302 = vst.msk [vmem:[%s278 + $0xf8] sm:$0xff] %vm279, %v6270
      %p6303 = scmp.lt.s32.totalorder %s18, 1
      %s6304 = scalar_select %p6303, %s18, 1
      %s6305 = smul.addr %s6304, 32
      %s6306 = smul.addr %s6305, 8
      %s6307 = scalar_lea.vmem %s7, %s6306
      // Predicated region
      $region49: #{vagan_forward.1} parent=47 // pred_check
        %p6308 = pneg %p188
      $region50: #{vagan_forward.1} parent=47 // pred_check_branch
        %6310 = sbr.rel (%p6308) target = $region52
      $region51: #{vagan_forward.1} parent=47 // pred_region
        _
      $region52: #{vagan_forward.1} parent=47 // pred_fallthru
        _
    $region48: #{vagan_forward.1} parent=5 // pred_fallthru
      _
    %p6311 = scmp.le.s32.totalorder 2, %s13
    // Predicated region
    $region53: #{vagan_forward.1} parent=5 // pred_check
      %p6312 = pneg %p6311
    $region54: #{vagan_forward.1} parent=5 // pred_check_branch
      %6314 = sbr.rel (%p6312) target = $region56
    $region55: #{vagan_forward.1} parent=5 // pred_region
      %s6315 = ssub.s32 %s13, 2
      // Predicated region
      $region57: #{vagan_forward.1} parent=55 // pred_check
        %p6316 = pneg %p194
      $region58: #{vagan_forward.1} parent=55 // pred_check_branch
        %6318 = sbr.rel (%p6316) target = $region60
      $region59: #{vagan_forward.1} parent=55 // pred_region
        %p6319 = scmp.lt.s32.totalorder %s19, 1
        %s6320 = scalar_select %p6319, %s19, 1
        %s6321 = smul.addr %s6320, 32
        %s6322 = smul.addr %s6321, 8
        %s6323 = scalar_lea.vmem %s7, %s6322
      $region60: #{vagan_forward.1} parent=55 // pred_fallthru
        _
    $region56: #{vagan_forward.1} parent=5 // pred_fallthru
      _
  $region6: #{vagan_forward.1} parent=0 // loop_footer
    %s17 = sadd.s32 1, %s13
  $region7: #{vagan_forward.1} parent=0 // loop_footer_branch
    %12 = sbr.rel target = $region3
  $region8: #{vagan_forward.1} parent=0 // loop_exit
    _

</llo_original>
